<compile_context>
chip_gen: v6e
topology: v6e:2x2x1
jax: 0.10.0
libtpu: 0.0.40
codegen_flags: <defaults>
</compile_context>

<pallas_src>
import math

import jax
import jax.numpy as jnp
from jax import lax
from jax.experimental import pallas as pl
from jax.experimental.pallas import tpu as pltpu

EPS = 1e-6   # nn.LayerNorm(eps=1e-6)
LANE = 128


def _round_up(n, m):
    return -(-n // m) * m


def film_dnn_kernel(x_ref, y_ref, bias_ref, wfc_ref, wo_ref,
                    w1_ref, w2_ref, w3_ref, o_ref):
    tm, d = x_ref.shape
    wcols = wfc_ref.shape[1]        # = dpad + d (gamma block padded to lanes)
    dpad = wcols - d
    w_dt = wfc_ref.dtype

    # Packed (8, wcols) f32 bias/LN slab (row layout set up in film_dnn).
    ln_g = bias_ref[0:1, :d]
    ln_b = bias_ref[1:2, :d]
    b_fc = bias_ref[2:3, :]
    b_o = bias_ref[3:4, :d]
    b_1 = bias_ref[4:5, :d]
    b_2 = bias_ref[5:6, :d]
    b_3 = bias_ref[6:7, :d]

    def layer_norm(v):
        v = v.astype(jnp.float32)
        mu = jnp.mean(v, axis=-1, keepdims=True)
        c = v - mu
        var = jnp.mean(c * c, axis=-1, keepdims=True)   # torch: E[(x-mu)^2]
        return c * lax.rsqrt(var + EPS) * ln_g + ln_b

    def mm(a_lo, w_ref, b):
        # bf16 operands on the MXU, f32 accumulation; bias add stays in f32.
        return jnp.dot(a_lo, w_ref[...], preferred_element_type=jnp.float32) + b

    film = layer_norm(x_ref[...])          # x_film=True: film comes from x
    to_be_film = layer_norm(y_ref[...])    # ... to_be_film from y

    # Fused fc: one [D, dpad+D] matmul; gamma occupies lanes [0, d), beta
    # starts at the lane-aligned offset dpad, so both slices are free.
    gb = mm(film.astype(w_dt), wfc_ref, b_fc)            # [tm, wcols] f32
    gamma = gb[:, :d]
    beta = gb[:, dpad:]

    out = gamma * to_be_film + beta                      # FiLM (f32)
    out = mm(out.astype(w_dt), wo_ref, b_o)              # fc_out (f32)

    # MLP: 3 x (Dropout -> Linear -> ReLU); dropout is identity here.
    # Intermediates held in bf16, cast once right after the f32 bias+ReLU.
    h = jnp.maximum(mm(out.astype(w_dt), w1_ref, b_1), 0.0).astype(w_dt)
    h = jnp.maximum(mm(h, w2_ref, b_2), 0.0).astype(w_dt)
    h = jnp.maximum(mm(h, w3_ref, b_3), 0.0)
    o_ref[...] = h.astype(o_ref.dtype)


def film_dnn(x, y, p, *, tm=256):
    B, D = x.shape
    n_tiles = pl.cdiv(B, tm)
    Bp = n_tiles * tm
    if Bp != B:                     # pad batch to a tile multiple (rows discarded)
        x = jnp.pad(x, ((0, Bp - B), (0, 0)))
        y = jnp.pad(y, ((0, Bp - B), (0, 0)))

    # ---- pack parameters into kernel layout --------------------------------
    w_dt = p["wfc"].dtype
    dpad = _round_up(D, LANE)       # gamma weight block padded to a lane multiple
    wcols = dpad + D

    wfc = p["wfc"]                  # [D, 2D]: cols [0,D)=gamma, [D,2D)=beta
    if dpad != D:
        wfc = jnp.concatenate(
            [wfc[:, :D], jnp.zeros((D, dpad - D), w_dt), wfc[:, D:]], axis=1)

    bias = jnp.zeros((8, wcols), jnp.float32)
    bias = bias.at[0, :D].set(p["ln_g"])
    bias = bias.at[1, :D].set(p["ln_b"])
    bias = bias.at[2, :D].set(p["bfc"][:D])       # gamma bias
    bias = bias.at[2, dpad:].set(p["bfc"][D:])    # beta bias (lane aligned)
    bias = bias.at[3, :D].set(p["bo"])
    bias = bias.at[4, :D].set(p["b1"])
    bias = bias.at[5, :D].set(p["b2"])
    bias = bias.at[6, :D].set(p["b3"])

    weights = (bias, wfc, p["wo"], p["w1"], p["w2"], p["w3"])
    # TODO(synk): for very large D (12*D^2 bytes approaching v7x's 64 MiB
    # budget) stream the MLP/fc_out weights over an extra grid axis instead
    # of keeping all of them resident.

    act_spec = pl.BlockSpec((tm, D), lambda i: (i, 0))

    weight_bytes = sum(math.prod(w.shape) * w.dtype.itemsize for w in weights)
    act_bytes = tm * D * 4
    inner_bytes = 12 * act_bytes + 2 * tm * wcols * 4   # in-kernel temporaries

    try:
        info = pltpu.get_tpu_info()
        vmem_cap = int(getattr(info, "vmem_capacity_bytes", 64 << 20))
    except Exception:
        vmem_cap = 64 << 20

    flops = 2 * Bp * D * (wcols + 4 * D)   # fused fc + fc_out + 3x MLP layers
    transcendentals = 2 * Bp               # one rsqrt per normalized row (x and y)
    bytes_accessed = weight_bytes + 3 * Bp * D * x.dtype.itemsize

    def build_and_run(single_buffer_weights):
        def weight_spec(shape):
            if single_buffer_weights:
                # Constant index_map -> the block is only DMA'd once; a single
                # buffer halves resident weight VMEM (matters on v7x's 64 MiB).
                return pl.BlockSpec(shape, lambda i: (0, 0),
                                    pipeline_mode=pl.Buffered(buffer_count=1))
            return pl.BlockSpec(shape, lambda i: (0, 0))

        weight_specs = [weight_spec(w.shape) for w in weights]
        w_mult = 1 if single_buffer_weights else 2
        vmem_need = w_mult * weight_bytes + 2 * 3 * act_bytes + inner_bytes
        vmem_limit = int(min(max(vmem_need + (4 << 20), 32 << 20),
                             (vmem_cap * 7) // 8))

        out = pl.pallas_call(
            film_dnn_kernel,
            out_shape=jax.ShapeDtypeStruct((Bp, D), x.dtype),
            grid=(n_tiles,),
            in_specs=[act_spec, act_spec] + weight_specs,
            out_specs=act_spec,
            compiler_params=pltpu.CompilerParams(
                dimension_semantics=("parallel",),
                vmem_limit_bytes=vmem_limit),
            cost_estimate=pl.CostEstimate(
                flops=int(flops), transcendentals=int(transcendentals),
                bytes_accessed=int(bytes_accessed)),
        )(x, y, *weights)
        return jax.block_until_ready(out)

    try:
        out = build_and_run(True)     # single-buffered resident weights
    except Exception:
        out = build_and_run(False)    # fallback: default double buffering
    return out[:B]


def xavier_normal(key, shape):
    # torch nn.Linear weight shape is [out_features, in_features]
    fan_out, fan_in = shape
    std = (2.0 / (fan_in + fan_out)) ** 0.5
    return std * jax.random.normal(key, shape, dtype=jnp.float32)


def make_params(key, D, w_dtype=jnp.bfloat16):
    kfc, kout, k1, k2, k3 = jax.random.split(key, 5)
    zeros_d = jnp.zeros((D,), jnp.float32)
    return dict(
        ln_g=jnp.ones((D,), jnp.float32),                      # LayerNorm weight
        ln_b=jnp.zeros((D,), jnp.float32),                     # LayerNorm bias
        wfc=xavier_normal(kfc, (2 * D, D)).T.astype(w_dtype),  # fc -> [D, 2D]
        bfc=jnp.zeros((2 * D,), jnp.float32),
        wo=xavier_normal(kout, (D, D)).T.astype(w_dtype), bo=zeros_d,   # fc_out
        w1=xavier_normal(k1, (D, D)).T.astype(w_dtype), b1=zeros_d,     # MLP 1
        w2=xavier_normal(k2, (D, D)).T.astype(w_dtype), b2=zeros_d,     # MLP 2
        w3=xavier_normal(k3, (D, D)).T.astype(w_dtype), b3=zeros_d,     # MLP 3
    )


def film_dnn_ref(x, y, p):
    D = x.shape[-1]

    def ln(v):
        mu = v.mean(-1, keepdims=True)
        var = ((v - mu) ** 2).mean(-1, keepdims=True)
        return (v - mu) / jnp.sqrt(var + EPS) * p["ln_g"] + p["ln_b"]

    def mm(a, w, b):
        return jnp.dot(a.astype(w.dtype), w,
                       preferred_element_type=jnp.float32) + b

    film, tbf = ln(x), ln(y)
    gb = mm(film, p["wfc"], p["bfc"])
    gamma, beta = gb[:, :D], gb[:, D:]
    o = gamma * tbf + beta
    o = mm(o, p["wo"], p["bo"])
    o = jnp.maximum(mm(o, p["w1"], p["b1"]), 0.0)
    o = jnp.maximum(mm(o, p["w2"], p["b2"]), 0.0)
    o = jnp.maximum(mm(o, p["w3"], p["b3"]), 0.0)
    return o


if __name__ == "__main__":
    # Batch deliberately not a multiple of TM to exercise the padding path.
    B, D = 200, 128
    key = jax.random.PRNGKey(0)
    kx, ky, kp = jax.random.split(key, 3)
    x = jax.random.normal(kx, (B, D), jnp.float32)
    y = jax.random.normal(ky, (B, D), jnp.float32)
    params = make_params(kp, D)

    out = film_dnn(x, y, params)          # default tm=256
    jax.block_until_ready(out)

    ref = film_dnn_ref(x, y, params)
    assert out.shape == ref.shape
    # bf16 matmul operands in both paths; tolerance covers accumulation-order
    # differences (LN now uses torch's E[(x-mu)^2] formulation in both).
    assert jnp.allclose(out, ref, atol=5e-2, rtol=5e-2), (
        f"mismatch vs reference: max abs err {jnp.max(jnp.abs(out - ref)):.3e}")
    print("KERNEL_OK")
</pallas_src>

<mosaic_0001>
module attributes {stable_mosaic.version = 11 : i64} {
  func.func @film_dnn_kernel(%arg0: i32, %arg1: memref<256x128xf32, #tpu.memory_space<vmem>>, %arg2: memref<256x128xf32, #tpu.memory_space<vmem>>, %arg3: memref<8x256xf32, #tpu.memory_space<vmem>>, %arg4: memref<128x256xbf16, #tpu.memory_space<vmem>>, %arg5: memref<128x128xbf16, #tpu.memory_space<vmem>>, %arg6: memref<128x128xbf16, #tpu.memory_space<vmem>>, %arg7: memref<128x128xbf16, #tpu.memory_space<vmem>>, %arg8: memref<128x128xbf16, #tpu.memory_space<vmem>>, %arg9: memref<256x128xf32, #tpu.memory_space<vmem>>) attributes {dimension_semantics = [#tpu.dimension_semantics<parallel>], iteration_bounds = array<i64: 1>, scalar_prefetch = 0 : i64, scratch_operands = 0 : i64, tpu.core_type = #tpu.core_type<tc>, window_params = [{transform_indices = @transform_0, window_bounds = array<i64: 256, 128>}, {transform_indices = @transform_1, window_bounds = array<i64: 256, 128>}, {pipeline_mode = #tpu.pipeline_mode<synchronous>, transform_indices = @transform_2, window_bounds = array<i64: 8, 256>}, {pipeline_mode = #tpu.pipeline_mode<synchronous>, transform_indices = @transform_3, window_bounds = array<i64: 128, 256>}, {pipeline_mode = #tpu.pipeline_mode<synchronous>, transform_indices = @transform_4, window_bounds = array<i64: 128, 128>}, {pipeline_mode = #tpu.pipeline_mode<synchronous>, transform_indices = @transform_5, window_bounds = array<i64: 128, 128>}, {pipeline_mode = #tpu.pipeline_mode<synchronous>, transform_indices = @transform_6, window_bounds = array<i64: 128, 128>}, {pipeline_mode = #tpu.pipeline_mode<synchronous>, transform_indices = @transform_7, window_bounds = array<i64: 128, 128>}, {transform_indices = @transform_8, window_bounds = array<i64: 256, 128>}]} {
    %c0 = arith.constant 0 : index
    %c0_0 = arith.constant 0 : index
    %0 = vector.load %arg3[%c0, %c0_0] : memref<8x256xf32, #tpu.memory_space<vmem>>, vector<1x128xf32>
    %c1 = arith.constant 1 : index
    %c0_1 = arith.constant 0 : index
    %1 = vector.load %arg3[%c1, %c0_1] : memref<8x256xf32, #tpu.memory_space<vmem>>, vector<1x128xf32>
    %c2 = arith.constant 2 : index
    %c0_2 = arith.constant 0 : index
    %2 = vector.load %arg3[%c2, %c0_2] : memref<8x256xf32, #tpu.memory_space<vmem>>, vector<1x256xf32>
    %c3 = arith.constant 3 : index
    %c0_3 = arith.constant 0 : index
    %3 = vector.load %arg3[%c3, %c0_3] : memref<8x256xf32, #tpu.memory_space<vmem>>, vector<1x128xf32>
    %c4 = arith.constant 4 : index
    %c0_4 = arith.constant 0 : index
    %4 = vector.load %arg3[%c4, %c0_4] : memref<8x256xf32, #tpu.memory_space<vmem>>, vector<1x128xf32>
    %c5 = arith.constant 5 : index
    %c0_5 = arith.constant 0 : index
    %5 = vector.load %arg3[%c5, %c0_5] : memref<8x256xf32, #tpu.memory_space<vmem>>, vector<1x128xf32>
    %c6 = arith.constant 6 : index
    %c0_6 = arith.constant 0 : index
    %6 = vector.load %arg3[%c6, %c0_6] : memref<8x256xf32, #tpu.memory_space<vmem>>, vector<1x128xf32>
    %c0_7 = arith.constant 0 : index
    %c0_8 = arith.constant 0 : index
    %7 = vector.load %arg1[%c0_7, %c0_8] : memref<256x128xf32, #tpu.memory_space<vmem>>, vector<256x128xf32>
    %cst = arith.constant dense<0.000000e+00> : vector<256xf32>
    %8 = vector.multi_reduction <add>, %7, %cst [1] : vector<256x128xf32> to vector<256xf32>
    %9 = vector.shape_cast %8 : vector<256xf32> to vector<256x1xf32>
    %cst_9 = arith.constant 1.280000e+02 : f32
    %10 = vector.broadcast %cst_9 : f32 to vector<256x1xf32>
    %11 = arith.divf %9, %10 : vector<256x1xf32>
    %12 = vector.broadcast %11 : vector<256x1xf32> to vector<256x128xf32>
    %13 = arith.subf %7, %12 : vector<256x128xf32>
    %14 = arith.mulf %13, %13 : vector<256x128xf32>
    %cst_10 = arith.constant dense<0.000000e+00> : vector<256xf32>
    %15 = vector.multi_reduction <add>, %14, %cst_10 [1] : vector<256x128xf32> to vector<256xf32>
    %16 = vector.shape_cast %15 : vector<256xf32> to vector<256x1xf32>
    %cst_11 = arith.constant 1.280000e+02 : f32
    %17 = vector.broadcast %cst_11 : f32 to vector<256x1xf32>
    %18 = arith.divf %16, %17 : vector<256x1xf32>
    %cst_12 = arith.constant 9.99999997E-7 : f32
    %19 = vector.broadcast %cst_12 : f32 to vector<256x1xf32>
    %20 = arith.addf %18, %19 : vector<256x1xf32>
    %21 = math.rsqrt %20 : vector<256x1xf32>
    %22 = vector.broadcast %21 : vector<256x1xf32> to vector<256x128xf32>
    %23 = arith.mulf %13, %22 : vector<256x128xf32>
    %24 = vector.broadcast %0 : vector<1x128xf32> to vector<256x128xf32>
    %25 = arith.mulf %23, %24 : vector<256x128xf32>
    %26 = vector.broadcast %1 : vector<1x128xf32> to vector<256x128xf32>
    %27 = arith.addf %25, %26 : vector<256x128xf32>
    %c0_13 = arith.constant 0 : index
    %c0_14 = arith.constant 0 : index
    %28 = vector.load %arg2[%c0_13, %c0_14] : memref<256x128xf32, #tpu.memory_space<vmem>>, vector<256x128xf32>
    %cst_15 = arith.constant dense<0.000000e+00> : vector<256xf32>
    %29 = vector.multi_reduction <add>, %28, %cst_15 [1] : vector<256x128xf32> to vector<256xf32>
    %30 = vector.shape_cast %29 : vector<256xf32> to vector<256x1xf32>
    %cst_16 = arith.constant 1.280000e+02 : f32
    %31 = vector.broadcast %cst_16 : f32 to vector<256x1xf32>
    %32 = arith.divf %30, %31 : vector<256x1xf32>
    %33 = vector.broadcast %32 : vector<256x1xf32> to vector<256x128xf32>
    %34 = arith.subf %28, %33 : vector<256x128xf32>
    %35 = arith.mulf %34, %34 : vector<256x128xf32>
    %cst_17 = arith.constant dense<0.000000e+00> : vector<256xf32>
    %36 = vector.multi_reduction <add>, %35, %cst_17 [1] : vector<256x128xf32> to vector<256xf32>
    %37 = vector.shape_cast %36 : vector<256xf32> to vector<256x1xf32>
    %cst_18 = arith.constant 1.280000e+02 : f32
    %38 = vector.broadcast %cst_18 : f32 to vector<256x1xf32>
    %39 = arith.divf %37, %38 : vector<256x1xf32>
    %cst_19 = arith.constant 9.99999997E-7 : f32
    %40 = vector.broadcast %cst_19 : f32 to vector<256x1xf32>
    %41 = arith.addf %39, %40 : vector<256x1xf32>
    %42 = math.rsqrt %41 : vector<256x1xf32>
    %43 = vector.broadcast %42 : vector<256x1xf32> to vector<256x128xf32>
    %44 = arith.mulf %34, %43 : vector<256x128xf32>
    %45 = vector.broadcast %0 : vector<1x128xf32> to vector<256x128xf32>
    %46 = arith.mulf %44, %45 : vector<256x128xf32>
    %47 = vector.broadcast %1 : vector<1x128xf32> to vector<256x128xf32>
    %48 = arith.addf %46, %47 : vector<256x128xf32>
    %49 = arith.truncf %27 : vector<256x128xf32> to vector<256x128xbf16>
    %c0_20 = arith.constant 0 : index
    %c0_21 = arith.constant 0 : index
    %50 = vector.load %arg4[%c0_20, %c0_21] : memref<128x256xbf16, #tpu.memory_space<vmem>>, vector<128x256xbf16>
    %cst_22 = arith.constant dense<0.000000e+00> : vector<256x256xf32>
    %51 = tpu.matmul %49, %50, %cst_22 {dimension_numbers = #tpu.dot_dimension_numbers<[1], [0], [0], [1], [0, 0, 1, 1], [], []>} : vector<256x128xbf16>, vector<128x256xbf16>, vector<256x256xf32> -> vector<256x256xf32>
    %52 = vector.broadcast %2 : vector<1x256xf32> to vector<256x256xf32>
    %53 = arith.addf %51, %52 : vector<256x256xf32>
    %54 = vector.extract_strided_slice %53 {offsets = [0, 0], sizes = [256, 128], strides = [1, 1]} : vector<256x256xf32> to vector<256x128xf32>
    %55 = vector.extract_strided_slice %53 {offsets = [0, 128], sizes = [256, 128], strides = [1, 1]} : vector<256x256xf32> to vector<256x128xf32>
    %56 = arith.mulf %54, %48 : vector<256x128xf32>
    %57 = arith.addf %56, %55 : vector<256x128xf32>
    %58 = arith.truncf %57 : vector<256x128xf32> to vector<256x128xbf16>
    %c0_23 = arith.constant 0 : index
    %c0_24 = arith.constant 0 : index
    %59 = vector.load %arg5[%c0_23, %c0_24] : memref<128x128xbf16, #tpu.memory_space<vmem>>, vector<128x128xbf16>
    %cst_25 = arith.constant dense<0.000000e+00> : vector<256x128xf32>
    %60 = tpu.matmul %58, %59, %cst_25 {dimension_numbers = #tpu.dot_dimension_numbers<[1], [0], [0], [1], [0, 0, 1, 1], [], []>} : vector<256x128xbf16>, vector<128x128xbf16>, vector<256x128xf32> -> vector<256x128xf32>
    %61 = vector.broadcast %3 : vector<1x128xf32> to vector<256x128xf32>
    %62 = arith.addf %60, %61 : vector<256x128xf32>
    %63 = arith.truncf %62 : vector<256x128xf32> to vector<256x128xbf16>
    %c0_26 = arith.constant 0 : index
    %c0_27 = arith.constant 0 : index
    %64 = vector.load %arg6[%c0_26, %c0_27] : memref<128x128xbf16, #tpu.memory_space<vmem>>, vector<128x128xbf16>
    %cst_28 = arith.constant dense<0.000000e+00> : vector<256x128xf32>
    %65 = tpu.matmul %63, %64, %cst_28 {dimension_numbers = #tpu.dot_dimension_numbers<[1], [0], [0], [1], [0, 0, 1, 1], [], []>} : vector<256x128xbf16>, vector<128x128xbf16>, vector<256x128xf32> -> vector<256x128xf32>
    %66 = vector.broadcast %4 : vector<1x128xf32> to vector<256x128xf32>
    %67 = arith.addf %65, %66 : vector<256x128xf32>
    %cst_29 = arith.constant 0.000000e+00 : f32
    %68 = vector.broadcast %cst_29 : f32 to vector<256x128xf32>
    %69 = arith.maximumf %67, %68 : vector<256x128xf32>
    %70 = arith.truncf %69 : vector<256x128xf32> to vector<256x128xbf16>
    %c0_30 = arith.constant 0 : index
    %c0_31 = arith.constant 0 : index
    %71 = vector.load %arg7[%c0_30, %c0_31] : memref<128x128xbf16, #tpu.memory_space<vmem>>, vector<128x128xbf16>
    %cst_32 = arith.constant dense<0.000000e+00> : vector<256x128xf32>
    %72 = tpu.matmul %70, %71, %cst_32 {dimension_numbers = #tpu.dot_dimension_numbers<[1], [0], [0], [1], [0, 0, 1, 1], [], []>} : vector<256x128xbf16>, vector<128x128xbf16>, vector<256x128xf32> -> vector<256x128xf32>
    %73 = vector.broadcast %5 : vector<1x128xf32> to vector<256x128xf32>
    %74 = arith.addf %72, %73 : vector<256x128xf32>
    %cst_33 = arith.constant 0.000000e+00 : f32
    %75 = vector.broadcast %cst_33 : f32 to vector<256x128xf32>
    %76 = arith.maximumf %74, %75 : vector<256x128xf32>
    %77 = arith.truncf %76 : vector<256x128xf32> to vector<256x128xbf16>
    %c0_34 = arith.constant 0 : index
    %c0_35 = arith.constant 0 : index
    %78 = vector.load %arg8[%c0_34, %c0_35] : memref<128x128xbf16, #tpu.memory_space<vmem>>, vector<128x128xbf16>
    %cst_36 = arith.constant dense<0.000000e+00> : vector<256x128xf32>
    %79 = tpu.matmul %77, %78, %cst_36 {dimension_numbers = #tpu.dot_dimension_numbers<[1], [0], [0], [1], [0, 0, 1, 1], [], []>} : vector<256x128xbf16>, vector<128x128xbf16>, vector<256x128xf32> -> vector<256x128xf32>
    %80 = vector.broadcast %6 : vector<1x128xf32> to vector<256x128xf32>
    %81 = arith.addf %79, %80 : vector<256x128xf32>
    %cst_37 = arith.constant 0.000000e+00 : f32
    %82 = vector.broadcast %cst_37 : f32 to vector<256x128xf32>
    %83 = arith.maximumf %81, %82 : vector<256x128xf32>
    %c0_38 = arith.constant 0 : index
    %c0_39 = arith.constant 0 : index
    %84 = vector.load %arg9[%c0_38, %c0_39] : memref<256x128xf32, #tpu.memory_space<vmem>>, vector<256x128xf32>
    tpu.vector_store %arg9[%c0_38, %c0_39], %83 {strides = array<i32>} : memref<256x128xf32, #tpu.memory_space<vmem>>, vector<256x128xf32>,
    return
  }
  func.func @transform_0(%arg0: i32) -> (i32, i32) {
    %c0_i32 = arith.constant 0 : i32
    %c0_i32_0 = arith.constant 0 : i32
    return %arg0, %c0_i32 : i32, i32
  }
  func.func @transform_1(%arg0: i32) -> (i32, i32) {
    %c0_i32 = arith.constant 0 : i32
    %c0_i32_0 = arith.constant 0 : i32
    return %arg0, %c0_i32 : i32, i32
  }
  func.func @transform_2(%arg0: i32) -> (i32, i32) {
    %c0_i32 = arith.constant 0 : i32
    %c0_i32_0 = arith.constant 0 : i32
    %c0_i32_1 = arith.constant 0 : i32
    return %c0_i32, %c0_i32_0 : i32, i32
  }
  func.func @transform_3(%arg0: i32) -> (i32, i32) {
    %c0_i32 = arith.constant 0 : i32
    %c0_i32_0 = arith.constant 0 : i32
    %c0_i32_1 = arith.constant 0 : i32
    return %c0_i32, %c0_i32_0 : i32, i32
  }
  func.func @transform_4(%arg0: i32) -> (i32, i32) {
    %c0_i32 = arith.constant 0 : i32
    %c0_i32_0 = arith.constant 0 : i32
    %c0_i32_1 = arith.constant 0 : i32
    return %c0_i32, %c0_i32_0 : i32, i32
  }
  func.func @transform_5(%arg0: i32) -> (i32, i32) {
    %c0_i32 = arith.constant 0 : i32
    %c0_i32_0 = arith.constant 0 : i32
    %c0_i32_1 = arith.constant 0 : i32
    return %c0_i32, %c0_i32_0 : i32, i32
  }
  func.func @transform_6(%arg0: i32) -> (i32, i32) {
    %c0_i32 = arith.constant 0 : i32
    %c0_i32_0 = arith.constant 0 : i32
    %c0_i32_1 = arith.constant 0 : i32
    return %c0_i32, %c0_i32_0 : i32, i32
  }
  func.func @transform_7(%arg0: i32) -> (i32, i32) {
    %c0_i32 = arith.constant 0 : i32
    %c0_i32_0 = arith.constant 0 : i32
    %c0_i32_1 = arith.constant 0 : i32
    return %c0_i32, %c0_i32_0 : i32, i32
  }
  func.func @transform_8(%arg0: i32) -> (i32, i32) {
    %c0_i32 = arith.constant 0 : i32
    %c0_i32_0 = arith.constant 0 : i32
    return %arg0, %c0_i32 : i32, i32
  }
}

module attributes {stable_mosaic.version = 11 : i64} {
  func.func @film_dnn_kernel(%arg0: i32, %arg1: memref<256x128xf32, #tpu.memory_space<vmem>>, %arg2: memref<256x128xf32, #tpu.memory_space<vmem>>, %arg3: memref<8x256xf32, #tpu.memory_space<vmem>>, %arg4: memref<128x256xbf16, #tpu.memory_space<vmem>>, %arg5: memref<128x128xbf16, #tpu.memory_space<vmem>>, %arg6: memref<128x128xbf16, #tpu.memory_space<vmem>>, %arg7: memref<128x128xbf16, #tpu.memory_space<vmem>>, %arg8: memref<128x128xbf16, #tpu.memory_space<vmem>>, %arg9: memref<256x128xf32, #tpu.memory_space<vmem>>) attributes {dimension_semantics = [#tpu.dimension_semantics<parallel>], iteration_bounds = array<i64: 1>, scalar_prefetch = 0 : i64, scratch_operands = 0 : i64, tpu.core_type = #tpu.core_type<tc>, window_params = [{transform_indices = @transform_0, window_bounds = array<i64: 256, 128>}, {transform_indices = @transform_1, window_bounds = array<i64: 256, 128>}, {pipeline_mode = #tpu.pipeline_mode<synchronous>, transform_indices = @transform_2, window_bounds = array<i64: 8, 256>}, {pipeline_mode = #tpu.pipeline_mode<synchronous>, transform_indices = @transform_3, window_bounds = array<i64: 128, 256>}, {pipeline_mode = #tpu.pipeline_mode<synchronous>, transform_indices = @transform_4, window_bounds = array<i64: 128, 128>}, {pipeline_mode = #tpu.pipeline_mode<synchronous>, transform_indices = @transform_5, window_bounds = array<i64: 128, 128>}, {pipeline_mode = #tpu.pipeline_mode<synchronous>, transform_indices = @transform_6, window_bounds = array<i64: 128, 128>}, {pipeline_mode = #tpu.pipeline_mode<synchronous>, transform_indices = @transform_7, window_bounds = array<i64: 128, 128>}, {transform_indices = @transform_8, window_bounds = array<i64: 256, 128>}]} {
    %c0 = arith.constant 0 : index
    %c0_0 = arith.constant 0 : index
    %0 = vector.load %arg3[%c0, %c0_0] : memref<8x256xf32, #tpu.memory_space<vmem>>, vector<1x128xf32>
    %c1 = arith.constant 1 : index
    %c0_1 = arith.constant 0 : index
    %1 = vector.load %arg3[%c1, %c0_1] : memref<8x256xf32, #tpu.memory_space<vmem>>, vector<1x128xf32>
    %c2 = arith.constant 2 : index
    %c0_2 = arith.constant 0 : index
    %2 = vector.load %arg3[%c2, %c0_2] : memref<8x256xf32, #tpu.memory_space<vmem>>, vector<1x256xf32>
    %c3 = arith.constant 3 : index
    %c0_3 = arith.constant 0 : index
    %3 = vector.load %arg3[%c3, %c0_3] : memref<8x256xf32, #tpu.memory_space<vmem>>, vector<1x128xf32>
    %c4 = arith.constant 4 : index
    %c0_4 = arith.constant 0 : index
    %4 = vector.load %arg3[%c4, %c0_4] : memref<8x256xf32, #tpu.memory_space<vmem>>, vector<1x128xf32>
    %c5 = arith.constant 5 : index
    %c0_5 = arith.constant 0 : index
    %5 = vector.load %arg3[%c5, %c0_5] : memref<8x256xf32, #tpu.memory_space<vmem>>, vector<1x128xf32>
    %c6 = arith.constant 6 : index
    %c0_6 = arith.constant 0 : index
    %6 = vector.load %arg3[%c6, %c0_6] : memref<8x256xf32, #tpu.memory_space<vmem>>, vector<1x128xf32>
    %c0_7 = arith.constant 0 : index
    %c0_8 = arith.constant 0 : index
    %7 = vector.load %arg1[%c0_7, %c0_8] : memref<256x128xf32, #tpu.memory_space<vmem>>, vector<256x128xf32>
    %cst = arith.constant dense<0.000000e+00> : vector<256xf32>
    %8 = vector.multi_reduction <add>, %7, %cst [1] : vector<256x128xf32> to vector<256xf32>
    %9 = vector.shape_cast %8 : vector<256xf32> to vector<256x1xf32>
    %cst_9 = arith.constant 1.280000e+02 : f32
    %10 = vector.broadcast %cst_9 : f32 to vector<256x1xf32>
    %11 = arith.divf %9, %10 : vector<256x1xf32>
    %12 = vector.broadcast %11 : vector<256x1xf32> to vector<256x128xf32>
    %13 = arith.subf %7, %12 : vector<256x128xf32>
    %14 = arith.mulf %13, %13 : vector<256x128xf32>
    %cst_10 = arith.constant dense<0.000000e+00> : vector<256xf32>
    %15 = vector.multi_reduction <add>, %14, %cst_10 [1] : vector<256x128xf32> to vector<256xf32>
    %16 = vector.shape_cast %15 : vector<256xf32> to vector<256x1xf32>
    %cst_11 = arith.constant 1.280000e+02 : f32
    %17 = vector.broadcast %cst_11 : f32 to vector<256x1xf32>
    %18 = arith.divf %16, %17 : vector<256x1xf32>
    %cst_12 = arith.constant 9.99999997E-7 : f32
    %19 = vector.broadcast %cst_12 : f32 to vector<256x1xf32>
    %20 = arith.addf %18, %19 : vector<256x1xf32>
    %21 = math.rsqrt %20 : vector<256x1xf32>
    %22 = vector.broadcast %21 : vector<256x1xf32> to vector<256x128xf32>
    %23 = arith.mulf %13, %22 : vector<256x128xf32>
    %24 = vector.broadcast %0 : vector<1x128xf32> to vector<256x128xf32>
    %25 = arith.mulf %23, %24 : vector<256x128xf32>
    %26 = vector.broadcast %1 : vector<1x128xf32> to vector<256x128xf32>
    %27 = arith.addf %25, %26 : vector<256x128xf32>
    %c0_13 = arith.constant 0 : index
    %c0_14 = arith.constant 0 : index
    %28 = vector.load %arg2[%c0_13, %c0_14] : memref<256x128xf32, #tpu.memory_space<vmem>>, vector<256x128xf32>
    %cst_15 = arith.constant dense<0.000000e+00> : vector<256xf32>
    %29 = vector.multi_reduction <add>, %28, %cst_15 [1] : vector<256x128xf32> to vector<256xf32>
    %30 = vector.shape_cast %29 : vector<256xf32> to vector<256x1xf32>
    %cst_16 = arith.constant 1.280000e+02 : f32
    %31 = vector.broadcast %cst_16 : f32 to vector<256x1xf32>
    %32 = arith.divf %30, %31 : vector<256x1xf32>
    %33 = vector.broadcast %32 : vector<256x1xf32> to vector<256x128xf32>
    %34 = arith.subf %28, %33 : vector<256x128xf32>
    %35 = arith.mulf %34, %34 : vector<256x128xf32>
    %cst_17 = arith.constant dense<0.000000e+00> : vector<256xf32>
    %36 = vector.multi_reduction <add>, %35, %cst_17 [1] : vector<256x128xf32> to vector<256xf32>
    %37 = vector.shape_cast %36 : vector<256xf32> to vector<256x1xf32>
    %cst_18 = arith.constant 1.280000e+02 : f32
    %38 = vector.broadcast %cst_18 : f32 to vector<256x1xf32>
    %39 = arith.divf %37, %38 : vector<256x1xf32>
    %cst_19 = arith.constant 9.99999997E-7 : f32
    %40 = vector.broadcast %cst_19 : f32 to vector<256x1xf32>
    %41 = arith.addf %39, %40 : vector<256x1xf32>
    %42 = math.rsqrt %41 : vector<256x1xf32>
    %43 = vector.broadcast %42 : vector<256x1xf32> to vector<256x128xf32>
    %44 = arith.mulf %34, %43 : vector<256x128xf32>
    %45 = vector.broadcast %0 : vector<1x128xf32> to vector<256x128xf32>
    %46 = arith.mulf %44, %45 : vector<256x128xf32>
    %47 = vector.broadcast %1 : vector<1x128xf32> to vector<256x128xf32>
    %48 = arith.addf %46, %47 : vector<256x128xf32>
    %49 = arith.truncf %27 : vector<256x128xf32> to vector<256x128xbf16>
    %c0_20 = arith.constant 0 : index
    %c0_21 = arith.constant 0 : index
    %50 = vector.load %arg4[%c0_20, %c0_21] : memref<128x256xbf16, #tpu.memory_space<vmem>>, vector<128x256xbf16>
    %cst_22 = arith.constant dense<0.000000e+00> : vector<256x256xf32>
    %51 = tpu.matmul %49, %50, %cst_22 {dimension_numbers = #tpu.dot_dimension_numbers<[1], [0], [0], [1], [0, 0, 1, 1], [], []>} : vector<256x128xbf16>, vector<128x256xbf16>, vector<256x256xf32> -> vector<256x256xf32>
    %52 = vector.broadcast %2 : vector<1x256xf32> to vector<256x256xf32>
    %53 = arith.addf %51, %52 : vector<256x256xf32>
    %54 = vector.extract_strided_slice %53 {offsets = [0, 0], sizes = [256, 128], strides = [1, 1]} : vector<256x256xf32> to vector<256x128xf32>
    %55 = vector.extract_strided_slice %53 {offsets = [0, 128], sizes = [256, 128], strides = [1, 1]} : vector<256x256xf32> to vector<256x128xf32>
    %56 = arith.mulf %54, %48 : vector<256x128xf32>
    %57 = arith.addf %56, %55 : vector<256x128xf32>
    %58 = arith.truncf %57 : vector<256x128xf32> to vector<256x128xbf16>
    %c0_23 = arith.constant 0 : index
    %c0_24 = arith.constant 0 : index
    %59 = vector.load %arg5[%c0_23, %c0_24] : memref<128x128xbf16, #tpu.memory_space<vmem>>, vector<128x128xbf16>
    %cst_25 = arith.constant dense<0.000000e+00> : vector<256x128xf32>
    %60 = tpu.matmul %58, %59, %cst_25 {dimension_numbers = #tpu.dot_dimension_numbers<[1], [0], [0], [1], [0, 0, 1, 1], [], []>} : vector<256x128xbf16>, vector<128x128xbf16>, vector<256x128xf32> -> vector<256x128xf32>
    %61 = vector.broadcast %3 : vector<1x128xf32> to vector<256x128xf32>
    %62 = arith.addf %60, %61 : vector<256x128xf32>
    %63 = arith.truncf %62 : vector<256x128xf32> to vector<256x128xbf16>
    %c0_26 = arith.constant 0 : index
    %c0_27 = arith.constant 0 : index
    %64 = vector.load %arg6[%c0_26, %c0_27] : memref<128x128xbf16, #tpu.memory_space<vmem>>, vector<128x128xbf16>
    %cst_28 = arith.constant dense<0.000000e+00> : vector<256x128xf32>
    %65 = tpu.matmul %63, %64, %cst_28 {dimension_numbers = #tpu.dot_dimension_numbers<[1], [0], [0], [1], [0, 0, 1, 1], [], []>} : vector<256x128xbf16>, vector<128x128xbf16>, vector<256x128xf32> -> vector<256x128xf32>
    %66 = vector.broadcast %4 : vector<1x128xf32> to vector<256x128xf32>
    %67 = arith.addf %65, %66 : vector<256x128xf32>
    %cst_29 = arith.constant 0.000000e+00 : f32
    %68 = vector.broadcast %cst_29 : f32 to vector<256x128xf32>
    %69 = arith.maximumf %67, %68 : vector<256x128xf32>
    %70 = arith.truncf %69 : vector<256x128xf32> to vector<256x128xbf16>
    %c0_30 = arith.constant 0 : index
    %c0_31 = arith.constant 0 : index
    %71 = vector.load %arg7[%c0_30, %c0_31] : memref<128x128xbf16, #tpu.memory_space<vmem>>, vector<128x128xbf16>
    %cst_32 = arith.constant dense<0.000000e+00> : vector<256x128xf32>
    %72 = tpu.matmul %70, %71, %cst_32 {dimension_numbers = #tpu.dot_dimension_numbers<[1], [0], [0], [1], [0, 0, 1, 1], [], []>} : vector<256x128xbf16>, vector<128x128xbf16>, vector<256x128xf32> -> vector<256x128xf32>
    %73 = vector.broadcast %5 : vector<1x128xf32> to vector<256x128xf32>
    %74 = arith.addf %72, %73 : vector<256x128xf32>
    %cst_33 = arith.constant 0.000000e+00 : f32
    %75 = vector.broadcast %cst_33 : f32 to vector<256x128xf32>
    %76 = arith.maximumf %74, %75 : vector<256x128xf32>
    %77 = arith.truncf %76 : vector<256x128xf32> to vector<256x128xbf16>
    %c0_34 = arith.constant 0 : index
    %c0_35 = arith.constant 0 : index
    %78 = vector.load %arg8[%c0_34, %c0_35] : memref<128x128xbf16, #tpu.memory_space<vmem>>, vector<128x128xbf16>
    %cst_36 = arith.constant dense<0.000000e+00> : vector<256x128xf32>
    %79 = tpu.matmul %77, %78, %cst_36 {dimension_numbers = #tpu.dot_dimension_numbers<[1], [0], [0], [1], [0, 0, 1, 1], [], []>} : vector<256x128xbf16>, vector<128x128xbf16>, vector<256x128xf32> -> vector<256x128xf32>
    %80 = vector.broadcast %6 : vector<1x128xf32> to vector<256x128xf32>
    %81 = arith.addf %79, %80 : vector<256x128xf32>
    %cst_37 = arith.constant 0.000000e+00 : f32
    %82 = vector.broadcast %cst_37 : f32 to vector<256x128xf32>
    %83 = arith.maximumf %81, %82 : vector<256x128xf32>
    %c0_38 = arith.constant 0 : index
    %c0_39 = arith.constant 0 : index
    %84 = vector.load %arg9[%c0_38, %c0_39] : memref<256x128xf32, #tpu.memory_space<vmem>>, vector<256x128xf32>
    tpu.vector_store %arg9[%c0_38, %c0_39], %83 {strides = array<i32>} : memref<256x128xf32, #tpu.memory_space<vmem>>, vector<256x128xf32>,
    return
  }
  func.func @transform_0(%arg0: i32) -> (i32, i32) {
    %c0_i32 = arith.constant 0 : i32
    %c0_i32_0 = arith.constant 0 : i32
    return %arg0, %c0_i32 : i32, i32
  }
  func.func @transform_1(%arg0: i32) -> (i32, i32) {
    %c0_i32 = arith.constant 0 : i32
    %c0_i32_0 = arith.constant 0 : i32
    return %arg0, %c0_i32 : i32, i32
  }
  func.func @transform_2(%arg0: i32) -> (i32, i32) {
    %c0_i32 = arith.constant 0 : i32
    %c0_i32_0 = arith.constant 0 : i32
    %c0_i32_1 = arith.constant 0 : i32
    return %c0_i32, %c0_i32_0 : i32, i32
  }
  func.func @transform_3(%arg0: i32) -> (i32, i32) {
    %c0_i32 = arith.constant 0 : i32
    %c0_i32_0 = arith.constant 0 : i32
    %c0_i32_1 = arith.constant 0 : i32
    return %c0_i32, %c0_i32_0 : i32, i32
  }
  func.func @transform_4(%arg0: i32) -> (i32, i32) {
    %c0_i32 = arith.constant 0 : i32
    %c0_i32_0 = arith.constant 0 : i32
    %c0_i32_1 = arith.constant 0 : i32
    return %c0_i32, %c0_i32_0 : i32, i32
  }
  func.func @transform_5(%arg0: i32) -> (i32, i32) {
    %c0_i32 = arith.constant 0 : i32
    %c0_i32_0 = arith.constant 0 : i32
    %c0_i32_1 = arith.constant 0 : i32
    return %c0_i32, %c0_i32_0 : i32, i32
  }
  func.func @transform_6(%arg0: i32) -> (i32, i32) {
    %c0_i32 = arith.constant 0 : i32
    %c0_i32_0 = arith.constant 0 : i32
    %c0_i32_1 = arith.constant 0 : i32
    return %c0_i32, %c0_i32_0 : i32, i32
  }
  func.func @transform_7(%arg0: i32) -> (i32, i32) {
    %c0_i32 = arith.constant 0 : i32
    %c0_i32_0 = arith.constant 0 : i32
    %c0_i32_1 = arith.constant 0 : i32
    return %c0_i32, %c0_i32_0 : i32, i32
  }
  func.func @transform_8(%arg0: i32) -> (i32, i32) {
    %c0_i32 = arith.constant 0 : i32
    %c0_i32_0 = arith.constant 0 : i32
    return %arg0, %c0_i32 : i32, i32
  }
}

</mosaic_0001>

<llo_original>
// kernel: tpu_custom_call.1
$region0: #{tpu_custom_call.1}
  #allocation0 [shape = 'u32[]', space=smem, size = 0x4, offset = 0x4, fixed_abs, tag = 'smem constant byte address 0x4 - core index']
  #allocation1 [shape = 'u32[144,128]{1,0:T(1,128)}', space=vmem, size = 0x12000, scoped, tag = 'internal scratch']
  %s0 = inlined_call_operand.hbm [shape: f32[256,128], index: 0, kind: input, shape index: {}]
  %s1 = inlined_call_operand.hbm [shape: f32[256,128], index: 1, kind: input, shape index: {}]
  %s2 = inlined_call_operand.hbm [shape: f32[8,256], index: 2, kind: input, shape index: {}]
  %s3 = inlined_call_operand.hbm [shape: bf16[128,256], index: 3, kind: input, shape index: {}]
  %s4 = inlined_call_operand.hbm [shape: bf16[128,128], index: 4, kind: input, shape index: {}]
  %s5 = inlined_call_operand.hbm [shape: bf16[128,128], index: 5, kind: input, shape index: {}]
  %s6 = inlined_call_operand.hbm [shape: bf16[128,128], index: 6, kind: input, shape index: {}]
  %s7 = inlined_call_operand.hbm [shape: bf16[128,128], index: 7, kind: input, shape index: {}]
  %s8 = inlined_call_operand.hbm [shape: f32[256,128], index: 8, kind: output, shape index: {}]
  %s9 = sld [smem:[#allocation0]]
  $region74: #{tpu_custom_call.1} parent=0
    _
  %s11 = ssub.s32 1, %s9
  %s12 = scalar_select 0, %s11, %s9
  $region1: #{tpu_custom_call.1} parent=0
    #allocation2 [shape = 'u8[131072]{0}', space=vmem, size = 0x20000, scoped, tag = 'input window, operand 0, single buffered']
    #allocation3 [shape = 's32[1]{0}', space=sflag, size = 0x4, scoped, tag = 'scoped memory for tpu_custom_call.1']
    #allocation4 [shape = 's32[1]{0}', space=sflag, size = 0x4, scoped, tag = 'scoped memory for tpu_custom_call.1']
    #allocation5 [shape = 'u8[131072]{0}', space=vmem, size = 0x20000, scoped, tag = 'input window, operand 1, single buffered']
    #allocation6 [shape = 's32[1]{0}', space=sflag, size = 0x4, scoped, tag = 'scoped memory for tpu_custom_call.1']
    #allocation7 [shape = 'u8[8192]{0}', space=vmem, size = 0x2000, scoped, tag = 'input window, operand 2, single buffered']
    #allocation8 [shape = 'u8[65536]{0}', space=vmem, size = 0x10000, scoped, tag = 'input window, operand 3, single buffered']
    #allocation9 [shape = 's32[1]{0}', space=sflag, size = 0x4, scoped, tag = 'scoped memory for tpu_custom_call.1']
    #allocation10 [shape = 'u8[32768]{0}', space=vmem, size = 0x8000, scoped, tag = 'input window, operand 4, single buffered']
    #allocation11 [shape = 'u8[32768]{0}', space=vmem, size = 0x8000, scoped, tag = 'input window, operand 5, single buffered']
    #allocation12 [shape = 's32[1]{0}', space=sflag, size = 0x4, scoped, tag = 'scoped memory for tpu_custom_call.1']
    #allocation13 [shape = 'u8[32768]{0}', space=vmem, size = 0x8000, scoped, tag = 'input window, operand 6, single buffered']
    #allocation14 [shape = 'u8[32768]{0}', space=vmem, size = 0x8000, scoped, tag = 'input window, operand 7, single buffered']
    #allocation15 [shape = 's32[1]{0}', space=sflag, size = 0x4, scoped, tag = 'scoped memory for tpu_custom_call.1']
    #allocation16 [shape = 'u8[131072]{0}', space=vmem, size = 0x20000, scoped, tag = 'output window, operand 0, single buffered']
    %13 = vsyncpa [#allocation3], 0
    %14 = vsyncpa [#allocation6], 0
    %15 = vsyncpa [#allocation9], 0
    %16 = vsyncpa [#allocation12], 0
    %17 = vsyncpa [#allocation15], 0
    %18 = vsyncpa [#allocation4], 0
    // Predicated region
    $region2: #{tpu_custom_call.1} parent=1 // pred_check
      _
    $region3: #{tpu_custom_call.1} parent=1 // pred_check_branch
      %20 = sbr.rel (0) target = $region5
    $region4: #{tpu_custom_call.1} parent=1 // pred_region
      %s22 = ssub.s32 4096, 4096
      %23 = vsyncadd [#allocation3], %s22
      %s24 = sshll.u32 [#allocation2], 4
      %s25 = int_to_ptr.vmem [resolvable:$true] %s24
      %30 = dma.hbm_to_vmem [thread:$0]  %s0, 4096, %s25, [#allocation3], 128, 128, 8
    $region5: #{tpu_custom_call.1} parent=1 // pred_fallthru
      _
    // Predicated region
    $region6: #{tpu_custom_call.1} parent=1 // pred_check
      _
    $region7: #{tpu_custom_call.1} parent=1 // pred_check_branch
      %32 = sbr.rel (0) target = $region9
    $region8: #{tpu_custom_call.1} parent=1 // pred_region
      %s34 = ssub.s32 4096, 4096
      %35 = vsyncadd [#allocation6], %s34
      %s36 = sshll.u32 [#allocation5], 4
      %s37 = int_to_ptr.vmem [resolvable:$true] %s36
      %42 = dma.hbm_to_vmem [thread:$0]  %s1, 4096, %s37, [#allocation6], 128, 128, 8
    $region9: #{tpu_custom_call.1} parent=1 // pred_fallthru
      _
    // Predicated region
    $region10: #{tpu_custom_call.1} parent=1 // pred_check
      _
    $region11: #{tpu_custom_call.1} parent=1 // pred_check_branch
      %44 = sbr.rel (0) target = $region13
    $region12: #{tpu_custom_call.1} parent=1 // pred_region
      %s46 = ssub.s32 256, 256
      %47 = vsyncadd [#allocation6], %s46
      %s49 = sshll.u32 [#allocation7], 4
      %s50 = int_to_ptr.vmem [resolvable:$true] %s49
      %52 = dma.hbm_to_vmem [thread:$0]  %s2, 256, %s50, [#allocation6]
    $region13: #{tpu_custom_call.1} parent=1 // pred_fallthru
      _
    // Predicated region
    $region14: #{tpu_custom_call.1} parent=1 // pred_check
      _
    $region15: #{tpu_custom_call.1} parent=1 // pred_check_branch
      %54 = sbr.rel (0) target = $region17
    $region16: #{tpu_custom_call.1} parent=1 // pred_region
      %s56 = ssub.s32 2048, 2048
      %57 = vsyncadd [#allocation9], %s56
      %s58 = sshll.u32 [#allocation8], 4
      %s59 = int_to_ptr.vmem [resolvable:$true] %s58
      %64 = dma.hbm_to_vmem [thread:$0]  %s3, 2048, %s59, [#allocation9], 128, 128, 8
    $region17: #{tpu_custom_call.1} parent=1 // pred_fallthru
      _
    // Predicated region
    $region18: #{tpu_custom_call.1} parent=1 // pred_check
      _
    $region19: #{tpu_custom_call.1} parent=1 // pred_check_branch
      %66 = sbr.rel (0) target = $region21
    $region20: #{tpu_custom_call.1} parent=1 // pred_region
      %s68 = ssub.s32 1024, 1024
      %69 = vsyncadd [#allocation9], %s68
      %s70 = sshll.u32 [#allocation10], 4
      %s71 = int_to_ptr.vmem [resolvable:$true] %s70
      %76 = dma.hbm_to_vmem [thread:$0]  %s4, 1024, %s71, [#allocation9], 64, 64, 4
    $region21: #{tpu_custom_call.1} parent=1 // pred_fallthru
      _
    // Predicated region
    $region22: #{tpu_custom_call.1} parent=1 // pred_check
      _
    $region23: #{tpu_custom_call.1} parent=1 // pred_check_branch
      %78 = sbr.rel (0) target = $region25
    $region24: #{tpu_custom_call.1} parent=1 // pred_region
      %s80 = ssub.s32 1024, 1024
      %81 = vsyncadd [#allocation12], %s80
      %s82 = sshll.u32 [#allocation11], 4
      %s83 = int_to_ptr.vmem [resolvable:$true] %s82
      %88 = dma.hbm_to_vmem [thread:$0]  %s5, 1024, %s83, [#allocation12], 64, 64, 4
    $region25: #{tpu_custom_call.1} parent=1 // pred_fallthru
      _
    // Predicated region
    $region26: #{tpu_custom_call.1} parent=1 // pred_check
      _
    $region27: #{tpu_custom_call.1} parent=1 // pred_check_branch
      %90 = sbr.rel (0) target = $region29
    $region28: #{tpu_custom_call.1} parent=1 // pred_region
      %s92 = ssub.s32 1024, 1024
      %93 = vsyncadd [#allocation12], %s92
      %s94 = sshll.u32 [#allocation13], 4
      %s95 = int_to_ptr.vmem [resolvable:$true] %s94
      %100 = dma.hbm_to_vmem [thread:$0]  %s6, 1024, %s95, [#allocation12], 64, 64, 4
    $region29: #{tpu_custom_call.1} parent=1 // pred_fallthru
      _
    // Predicated region
    $region30: #{tpu_custom_call.1} parent=1 // pred_check
      _
    $region31: #{tpu_custom_call.1} parent=1 // pred_check_branch
      %102 = sbr.rel (0) target = $region33
    $region32: #{tpu_custom_call.1} parent=1 // pred_region
      %s104 = ssub.s32 1024, 1024
      %105 = vsyncadd [#allocation15], %s104
      %s106 = sshll.u32 [#allocation14], 4
      %s107 = int_to_ptr.vmem [resolvable:$true] %s106
      %112 = dma.hbm_to_vmem [thread:$0]  %s7, 1024, %s107, [#allocation15], 64, 64, 4
    $region33: #{tpu_custom_call.1} parent=1 // pred_fallthru
      _
    // Predicated region
    $region34: #{tpu_custom_call.1} parent=1 // pred_check
      _
    $region35: #{tpu_custom_call.1} parent=1 // pred_check_branch
      %114 = sbr.rel (0) target = $region37
    $region36: #{tpu_custom_call.1} parent=1 // pred_region
      %115 = dma.done [#allocation3], 4096
    $region37: #{tpu_custom_call.1} parent=1 // pred_fallthru
      _
    // Predicated region
    $region38: #{tpu_custom_call.1} parent=1 // pred_check
      _
    $region39: #{tpu_custom_call.1} parent=1 // pred_check_branch
      %117 = sbr.rel (0) target = $region41
    $region40: #{tpu_custom_call.1} parent=1 // pred_region
      %118 = dma.done [#allocation6], 4096
    $region41: #{tpu_custom_call.1} parent=1 // pred_fallthru
      _
    // Predicated region
    $region42: #{tpu_custom_call.1} parent=1 // pred_check
      _
    $region43: #{tpu_custom_call.1} parent=1 // pred_check_branch
      %120 = sbr.rel (0) target = $region45
    $region44: #{tpu_custom_call.1} parent=1 // pred_region
      %121 = dma.done [#allocation6], 256
    $region45: #{tpu_custom_call.1} parent=1 // pred_fallthru
      _
    // Predicated region
    $region46: #{tpu_custom_call.1} parent=1 // pred_check
      _
    $region47: #{tpu_custom_call.1} parent=1 // pred_check_branch
      %123 = sbr.rel (0) target = $region49
    $region48: #{tpu_custom_call.1} parent=1 // pred_region
      %124 = dma.done [#allocation9], 2048
    $region49: #{tpu_custom_call.1} parent=1 // pred_fallthru
      _
    // Predicated region
    $region50: #{tpu_custom_call.1} parent=1 // pred_check
      _
    $region51: #{tpu_custom_call.1} parent=1 // pred_check_branch
      %126 = sbr.rel (0) target = $region53
    $region52: #{tpu_custom_call.1} parent=1 // pred_region
      %127 = dma.done [#allocation9], 1024
    $region53: #{tpu_custom_call.1} parent=1 // pred_fallthru
      _
    // Predicated region
    $region54: #{tpu_custom_call.1} parent=1 // pred_check
      _
    $region55: #{tpu_custom_call.1} parent=1 // pred_check_branch
      %129 = sbr.rel (0) target = $region57
    $region56: #{tpu_custom_call.1} parent=1 // pred_region
      %130 = dma.done [#allocation12], 1024
    $region57: #{tpu_custom_call.1} parent=1 // pred_fallthru
      _
    // Predicated region
    $region58: #{tpu_custom_call.1} parent=1 // pred_check
      _
    $region59: #{tpu_custom_call.1} parent=1 // pred_check_branch
      %132 = sbr.rel (0) target = $region61
    $region60: #{tpu_custom_call.1} parent=1 // pred_region
      %133 = dma.done [#allocation12], 1024
    $region61: #{tpu_custom_call.1} parent=1 // pred_fallthru
      _
    // Predicated region
    $region62: #{tpu_custom_call.1} parent=1 // pred_check
      _
    $region63: #{tpu_custom_call.1} parent=1 // pred_check_branch
      %135 = sbr.rel (0) target = $region65
    $region64: #{tpu_custom_call.1} parent=1 // pred_region
      %136 = dma.done [#allocation15], 1024
    $region65: #{tpu_custom_call.1} parent=1 // pred_fallthru
      _
    %v138 = vld [vmem:[#allocation7] ss:$0 sm:$0xff]
    %v139 = vld [vmem:[#allocation7 + $0x1] ss:$0 sm:$0xff]
    %s140 = scalar_lea.vmem [#allocation7], 2
    %v141 = vld [vmem:[%s140] ss:$8 sm:$0x3]
    %v142 = vld [vmem:[#allocation7 + $0x3] ss:$0 sm:$0xff]
    %v143 = vld [vmem:[#allocation7 + $0x4] ss:$0 sm:$0xff]
    %v144 = vld [vmem:[#allocation7 + $0x5] ss:$0 sm:$0xff]
    %v145 = vld [vmem:[#allocation7 + $0x6] ss:$0 sm:$0xff]
    %v146 = vld [vmem:[#allocation2] sm:$0xff]
    %v147 = vld [vmem:[#allocation2 + $0x8] sm:$0xff]
    %v148 = vld [vmem:[#allocation2 + $0x10] sm:$0xff]
    %v149 = vld [vmem:[#allocation2 + $0x18] sm:$0xff]
    %v150 = vld [vmem:[#allocation2 + $0x20] sm:$0xff]
    %v151 = vld [vmem:[#allocation2 + $0x28] sm:$0xff]
    %v152 = vld [vmem:[#allocation2 + $0x30] sm:$0xff]
    %v153 = vld [vmem:[#allocation2 + $0x38] sm:$0xff]
    %v154 = vld [vmem:[#allocation2 + $0x40] sm:$0xff]
    %v155 = vld [vmem:[#allocation2 + $0x48] sm:$0xff]
    %v156 = vld [vmem:[#allocation2 + $0x50] sm:$0xff]
    %v157 = vld [vmem:[#allocation2 + $0x58] sm:$0xff]
    %v158 = vld [vmem:[#allocation2 + $0x60] sm:$0xff]
    %v159 = vld [vmem:[#allocation2 + $0x68] sm:$0xff]
    %v160 = vld [vmem:[#allocation2 + $0x70] sm:$0xff]
    %v161 = vld [vmem:[#allocation2 + $0x78] sm:$0xff]
    %v162 = vld [vmem:[#allocation2 + $0x80] sm:$0xff]
    %v163 = vld [vmem:[#allocation2 + $0x88] sm:$0xff]
    %v164 = vld [vmem:[#allocation2 + $0x90] sm:$0xff]
    %v165 = vld [vmem:[#allocation2 + $0x98] sm:$0xff]
    %v166 = vld [vmem:[#allocation2 + $0xa0] sm:$0xff]
    %v167 = vld [vmem:[#allocation2 + $0xa8] sm:$0xff]
    %v168 = vld [vmem:[#allocation2 + $0xb0] sm:$0xff]
    %v169 = vld [vmem:[#allocation2 + $0xb8] sm:$0xff]
    %v170 = vld [vmem:[#allocation2 + $0xc0] sm:$0xff]
    %v171 = vld [vmem:[#allocation2 + $0xc8] sm:$0xff]
    %v172 = vld [vmem:[#allocation2 + $0xd0] sm:$0xff]
    %v173 = vld [vmem:[#allocation2 + $0xd8] sm:$0xff]
    %v174 = vld [vmem:[#allocation2 + $0xe0] sm:$0xff]
    %v175 = vld [vmem:[#allocation2 + $0xe8] sm:$0xff]
    %v176 = vld [vmem:[#allocation2 + $0xf0] sm:$0xff]
    %v177 = vld [vmem:[#allocation2 + $0xf8] sm:$0xff]
    %178 = vadd.xlane.f32.xlu0 %v146
    %v179 = vpop.xlane.xlu0 %178
    %180 = vadd.xlane.f32.xlu0 %v147
    %v181 = vpop.xlane.xlu0 %180
    %182 = vadd.xlane.f32.xlu0 %v148
    %v183 = vpop.xlane.xlu0 %182
    %184 = vadd.xlane.f32.xlu0 %v149
    %v185 = vpop.xlane.xlu0 %184
    %186 = vadd.xlane.f32.xlu0 %v150
    %v187 = vpop.xlane.xlu0 %186
    %188 = vadd.xlane.f32.xlu0 %v151
    %v189 = vpop.xlane.xlu0 %188
    %190 = vadd.xlane.f32.xlu0 %v152
    %v191 = vpop.xlane.xlu0 %190
    %192 = vadd.xlane.f32.xlu0 %v153
    %v193 = vpop.xlane.xlu0 %192
    %194 = vadd.xlane.f32.xlu0 %v154
    %v195 = vpop.xlane.xlu0 %194
    %196 = vadd.xlane.f32.xlu0 %v155
    %v197 = vpop.xlane.xlu0 %196
    %198 = vadd.xlane.f32.xlu0 %v156
    %v199 = vpop.xlane.xlu0 %198
    %200 = vadd.xlane.f32.xlu0 %v157
    %v201 = vpop.xlane.xlu0 %200
    %202 = vadd.xlane.f32.xlu0 %v158
    %v203 = vpop.xlane.xlu0 %202
    %204 = vadd.xlane.f32.xlu0 %v159
    %v205 = vpop.xlane.xlu0 %204
    %206 = vadd.xlane.f32.xlu0 %v160
    %v207 = vpop.xlane.xlu0 %206
    %208 = vadd.xlane.f32.xlu0 %v161
    %v209 = vpop.xlane.xlu0 %208
    %210 = vadd.xlane.f32.xlu0 %v162
    %v211 = vpop.xlane.xlu0 %210
    %212 = vadd.xlane.f32.xlu0 %v163
    %v213 = vpop.xlane.xlu0 %212
    %214 = vadd.xlane.f32.xlu0 %v164
    %v215 = vpop.xlane.xlu0 %214
    %216 = vadd.xlane.f32.xlu0 %v165
    %v217 = vpop.xlane.xlu0 %216
    %218 = vadd.xlane.f32.xlu0 %v166
    %v219 = vpop.xlane.xlu0 %218
    %220 = vadd.xlane.f32.xlu0 %v167
    %v221 = vpop.xlane.xlu0 %220
    %222 = vadd.xlane.f32.xlu0 %v168
    %v223 = vpop.xlane.xlu0 %222
    %224 = vadd.xlane.f32.xlu0 %v169
    %v225 = vpop.xlane.xlu0 %224
    %226 = vadd.xlane.f32.xlu0 %v170
    %v227 = vpop.xlane.xlu0 %226
    %228 = vadd.xlane.f32.xlu0 %v171
    %v229 = vpop.xlane.xlu0 %228
    %230 = vadd.xlane.f32.xlu0 %v172
    %v231 = vpop.xlane.xlu0 %230
    %232 = vadd.xlane.f32.xlu0 %v173
    %v233 = vpop.xlane.xlu0 %232
    %234 = vadd.xlane.f32.xlu0 %v174
    %v235 = vpop.xlane.xlu0 %234
    %236 = vadd.xlane.f32.xlu0 %v175
    %v237 = vpop.xlane.xlu0 %236
    %238 = vadd.xlane.f32.xlu0 %v176
    %v239 = vpop.xlane.xlu0 %238
    %240 = vadd.xlane.f32.xlu0 %v177
    %v241 = vpop.xlane.xlu0 %240
    %v242 = vrcp.pop 128.0
    %v243 = vmul.f32 %v179, %v242
    %v244 = vmul.f32 %v181, %v242
    %v245 = vmul.f32 %v183, %v242
    %v246 = vmul.f32 %v185, %v242
    %v247 = vmul.f32 %v187, %v242
    %v248 = vmul.f32 %v189, %v242
    %v249 = vmul.f32 %v191, %v242
    %v250 = vmul.f32 %v193, %v242
    %v251 = vmul.f32 %v195, %v242
    %v252 = vmul.f32 %v197, %v242
    %v253 = vmul.f32 %v199, %v242
    %v254 = vmul.f32 %v201, %v242
    %v255 = vmul.f32 %v203, %v242
    %v256 = vmul.f32 %v205, %v242
    %v257 = vmul.f32 %v207, %v242
    %v258 = vmul.f32 %v209, %v242
    %v259 = vmul.f32 %v211, %v242
    %v260 = vmul.f32 %v213, %v242
    %v261 = vmul.f32 %v215, %v242
    %v262 = vmul.f32 %v217, %v242
    %v263 = vmul.f32 %v219, %v242
    %v264 = vmul.f32 %v221, %v242
    %v265 = vmul.f32 %v223, %v242
    %v266 = vmul.f32 %v225, %v242
    %v267 = vmul.f32 %v227, %v242
    %v268 = vmul.f32 %v229, %v242
    %v269 = vmul.f32 %v231, %v242
    %v270 = vmul.f32 %v233, %v242
    %v271 = vmul.f32 %v235, %v242
    %v272 = vmul.f32 %v237, %v242
    %v273 = vmul.f32 %v239, %v242
    %v274 = vmul.f32 %v241, %v242
    %v275 = vsub.f32 %v146, %v243
    %v276 = vsub.f32 %v147, %v244
    %v277 = vsub.f32 %v148, %v245
    %v278 = vsub.f32 %v149, %v246
    %v279 = vsub.f32 %v150, %v247
    %v280 = vsub.f32 %v151, %v248
    %v281 = vsub.f32 %v152, %v249
    %v282 = vsub.f32 %v153, %v250
    %v283 = vsub.f32 %v154, %v251
    %v284 = vsub.f32 %v155, %v252
    %v285 = vsub.f32 %v156, %v253
    %v286 = vsub.f32 %v157, %v254
    %v287 = vsub.f32 %v158, %v255
    %v288 = vsub.f32 %v159, %v256
    %v289 = vsub.f32 %v160, %v257
    %v290 = vsub.f32 %v161, %v258
    %v291 = vsub.f32 %v162, %v259
    %v292 = vsub.f32 %v163, %v260
    %v293 = vsub.f32 %v164, %v261
    %v294 = vsub.f32 %v165, %v262
    %v295 = vsub.f32 %v166, %v263
    %v296 = vsub.f32 %v167, %v264
    %v297 = vsub.f32 %v168, %v265
    %v298 = vsub.f32 %v169, %v266
    %v299 = vsub.f32 %v170, %v267
    %v300 = vsub.f32 %v171, %v268
    %v301 = vsub.f32 %v172, %v269
    %v302 = vsub.f32 %v173, %v270
    %v303 = vsub.f32 %v174, %v271
    %v304 = vsub.f32 %v175, %v272
    %v305 = vsub.f32 %v176, %v273
    %v306 = vsub.f32 %v177, %v274
    %v307 = vmul.f32 %v275, %v275
    %v308 = vmul.f32 %v276, %v276
    %v309 = vmul.f32 %v277, %v277
    %v310 = vmul.f32 %v278, %v278
    %v311 = vmul.f32 %v279, %v279
    %v312 = vmul.f32 %v280, %v280
    %v313 = vmul.f32 %v281, %v281
    %v314 = vmul.f32 %v282, %v282
    %v315 = vmul.f32 %v283, %v283
    %v316 = vmul.f32 %v284, %v284
    %v317 = vmul.f32 %v285, %v285
    %v318 = vmul.f32 %v286, %v286
    %v319 = vmul.f32 %v287, %v287
    %v320 = vmul.f32 %v288, %v288
    %v321 = vmul.f32 %v289, %v289
    %v322 = vmul.f32 %v290, %v290
    %v323 = vmul.f32 %v291, %v291
    %v324 = vmul.f32 %v292, %v292
    %v325 = vmul.f32 %v293, %v293
    %v326 = vmul.f32 %v294, %v294
    %v327 = vmul.f32 %v295, %v295
    %v328 = vmul.f32 %v296, %v296
    %v329 = vmul.f32 %v297, %v297
    %v330 = vmul.f32 %v298, %v298
    %v331 = vmul.f32 %v299, %v299
    %v332 = vmul.f32 %v300, %v300
    %v333 = vmul.f32 %v301, %v301
    %v334 = vmul.f32 %v302, %v302
    %v335 = vmul.f32 %v303, %v303
    %v336 = vmul.f32 %v304, %v304
    %v337 = vmul.f32 %v305, %v305
    %v338 = vmul.f32 %v306, %v306
    %339 = vadd.xlane.f32.xlu0 %v307
    %v340 = vpop.xlane.xlu0 %339
    %341 = vadd.xlane.f32.xlu0 %v308
    %v342 = vpop.xlane.xlu0 %341
    %343 = vadd.xlane.f32.xlu0 %v309
    %v344 = vpop.xlane.xlu0 %343
    %345 = vadd.xlane.f32.xlu0 %v310
    %v346 = vpop.xlane.xlu0 %345
    %347 = vadd.xlane.f32.xlu0 %v311
    %v348 = vpop.xlane.xlu0 %347
    %349 = vadd.xlane.f32.xlu0 %v312
    %v350 = vpop.xlane.xlu0 %349
    %351 = vadd.xlane.f32.xlu0 %v313
    %v352 = vpop.xlane.xlu0 %351
    %353 = vadd.xlane.f32.xlu0 %v314
    %v354 = vpop.xlane.xlu0 %353
    %355 = vadd.xlane.f32.xlu0 %v315
    %v356 = vpop.xlane.xlu0 %355
    %357 = vadd.xlane.f32.xlu0 %v316
    %v358 = vpop.xlane.xlu0 %357
    %359 = vadd.xlane.f32.xlu0 %v317
    %v360 = vpop.xlane.xlu0 %359
    %361 = vadd.xlane.f32.xlu0 %v318
    %v362 = vpop.xlane.xlu0 %361
    %363 = vadd.xlane.f32.xlu0 %v319
    %v364 = vpop.xlane.xlu0 %363
    %365 = vadd.xlane.f32.xlu0 %v320
    %v366 = vpop.xlane.xlu0 %365
    %367 = vadd.xlane.f32.xlu0 %v321
    %v368 = vpop.xlane.xlu0 %367
    %369 = vadd.xlane.f32.xlu0 %v322
    %v370 = vpop.xlane.xlu0 %369
    %371 = vadd.xlane.f32.xlu0 %v323
    %v372 = vpop.xlane.xlu0 %371
    %373 = vadd.xlane.f32.xlu0 %v324
    %v374 = vpop.xlane.xlu0 %373
    %375 = vadd.xlane.f32.xlu0 %v325
    %v376 = vpop.xlane.xlu0 %375
    %377 = vadd.xlane.f32.xlu0 %v326
    %v378 = vpop.xlane.xlu0 %377
    %379 = vadd.xlane.f32.xlu0 %v327
    %v380 = vpop.xlane.xlu0 %379
    %381 = vadd.xlane.f32.xlu0 %v328
    %v382 = vpop.xlane.xlu0 %381
    %383 = vadd.xlane.f32.xlu0 %v329
    %v384 = vpop.xlane.xlu0 %383
    %385 = vadd.xlane.f32.xlu0 %v330
    %v386 = vpop.xlane.xlu0 %385
    %387 = vadd.xlane.f32.xlu0 %v331
    %v388 = vpop.xlane.xlu0 %387
    %389 = vadd.xlane.f32.xlu0 %v332
    %v390 = vpop.xlane.xlu0 %389
    %391 = vadd.xlane.f32.xlu0 %v333
    %v392 = vpop.xlane.xlu0 %391
    %393 = vadd.xlane.f32.xlu0 %v334
    %v394 = vpop.xlane.xlu0 %393
    %395 = vadd.xlane.f32.xlu0 %v335
    %v396 = vpop.xlane.xlu0 %395
    %397 = vadd.xlane.f32.xlu0 %v336
    %v398 = vpop.xlane.xlu0 %397
    %399 = vadd.xlane.f32.xlu0 %v337
    %v400 = vpop.xlane.xlu0 %399
    %401 = vadd.xlane.f32.xlu0 %v338
    %v402 = vpop.xlane.xlu0 %401
    %v403 = vmul.f32 %v340, %v242
    %v404 = vmul.f32 %v342, %v242
    %v405 = vmul.f32 %v344, %v242
    %v406 = vmul.f32 %v346, %v242
    %v407 = vmul.f32 %v348, %v242
    %v408 = vmul.f32 %v350, %v242
    %v409 = vmul.f32 %v352, %v242
    %v410 = vmul.f32 %v354, %v242
    %v411 = vmul.f32 %v356, %v242
    %v412 = vmul.f32 %v358, %v242
    %v413 = vmul.f32 %v360, %v242
    %v414 = vmul.f32 %v362, %v242
    %v415 = vmul.f32 %v364, %v242
    %v416 = vmul.f32 %v366, %v242
    %v417 = vmul.f32 %v368, %v242
    %v418 = vmul.f32 %v370, %v242
    %v419 = vmul.f32 %v372, %v242
    %v420 = vmul.f32 %v374, %v242
    %v421 = vmul.f32 %v376, %v242
    %v422 = vmul.f32 %v378, %v242
    %v423 = vmul.f32 %v380, %v242
    %v424 = vmul.f32 %v382, %v242
    %v425 = vmul.f32 %v384, %v242
    %v426 = vmul.f32 %v386, %v242
    %v427 = vmul.f32 %v388, %v242
    %v428 = vmul.f32 %v390, %v242
    %v429 = vmul.f32 %v392, %v242
    %v430 = vmul.f32 %v394, %v242
    %v431 = vmul.f32 %v396, %v242
    %v432 = vmul.f32 %v398, %v242
    %v433 = vmul.f32 %v400, %v242
    %v434 = vmul.f32 %v402, %v242
    %v435 = vadd.f32 %v403, 1e-06
    %v436 = vadd.f32 %v404, 1e-06
    %v437 = vadd.f32 %v405, 1e-06
    %v438 = vadd.f32 %v406, 1e-06
    %v439 = vadd.f32 %v407, 1e-06
    %v440 = vadd.f32 %v408, 1e-06
    %v441 = vadd.f32 %v409, 1e-06
    %v442 = vadd.f32 %v410, 1e-06
    %v443 = vadd.f32 %v411, 1e-06
    %v444 = vadd.f32 %v412, 1e-06
    %v445 = vadd.f32 %v413, 1e-06
    %v446 = vadd.f32 %v414, 1e-06
    %v447 = vadd.f32 %v415, 1e-06
    %v448 = vadd.f32 %v416, 1e-06
    %v449 = vadd.f32 %v417, 1e-06
    %v450 = vadd.f32 %v418, 1e-06
    %v451 = vadd.f32 %v419, 1e-06
    %v452 = vadd.f32 %v420, 1e-06
    %v453 = vadd.f32 %v421, 1e-06
    %v454 = vadd.f32 %v422, 1e-06
    %v455 = vadd.f32 %v423, 1e-06
    %v456 = vadd.f32 %v424, 1e-06
    %v457 = vadd.f32 %v425, 1e-06
    %v458 = vadd.f32 %v426, 1e-06
    %v459 = vadd.f32 %v427, 1e-06
    %v460 = vadd.f32 %v428, 1e-06
    %v461 = vadd.f32 %v429, 1e-06
    %v462 = vadd.f32 %v430, 1e-06
    %v463 = vadd.f32 %v431, 1e-06
    %v464 = vadd.f32 %v432, 1e-06
    %v465 = vadd.f32 %v433, 1e-06
    %v466 = vadd.f32 %v434, 1e-06
    %v467 = vrsqrt.pop %v435
    %v468 = vrsqrt.pop %v436
    %v469 = vrsqrt.pop %v437
    %v470 = vrsqrt.pop %v438
    %v471 = vrsqrt.pop %v439
    %v472 = vrsqrt.pop %v440
    %v473 = vrsqrt.pop %v441
    %v474 = vrsqrt.pop %v442
    %v475 = vrsqrt.pop %v443
    %v476 = vrsqrt.pop %v444
    %v477 = vrsqrt.pop %v445
    %v478 = vrsqrt.pop %v446
    %v479 = vrsqrt.pop %v447
    %v480 = vrsqrt.pop %v448
    %v481 = vrsqrt.pop %v449
    %v482 = vrsqrt.pop %v450
    %v483 = vrsqrt.pop %v451
    %v484 = vrsqrt.pop %v452
    %v485 = vrsqrt.pop %v453
    %v486 = vrsqrt.pop %v454
    %v487 = vrsqrt.pop %v455
    %v488 = vrsqrt.pop %v456
    %v489 = vrsqrt.pop %v457
    %v490 = vrsqrt.pop %v458
    %v491 = vrsqrt.pop %v459
    %v492 = vrsqrt.pop %v460
    %v493 = vrsqrt.pop %v461
    %v494 = vrsqrt.pop %v462
    %v495 = vrsqrt.pop %v463
    %v496 = vrsqrt.pop %v464
    %v497 = vrsqrt.pop %v465
    %v498 = vrsqrt.pop %v466
    %v499 = vmul.f32 %v275, %v467
    %v500 = vmul.f32 %v276, %v468
    %v501 = vmul.f32 %v277, %v469
    %v502 = vmul.f32 %v278, %v470
    %v503 = vmul.f32 %v279, %v471
    %v504 = vmul.f32 %v280, %v472
    %v505 = vmul.f32 %v281, %v473
    %v506 = vmul.f32 %v282, %v474
    %v507 = vmul.f32 %v283, %v475
    %v508 = vmul.f32 %v284, %v476
    %v509 = vmul.f32 %v285, %v477
    %v510 = vmul.f32 %v286, %v478
    %v511 = vmul.f32 %v287, %v479
    %v512 = vmul.f32 %v288, %v480
    %v513 = vmul.f32 %v289, %v481
    %v514 = vmul.f32 %v290, %v482
    %v515 = vmul.f32 %v291, %v483
    %v516 = vmul.f32 %v292, %v484
    %v517 = vmul.f32 %v293, %v485
    %v518 = vmul.f32 %v294, %v486
    %v519 = vmul.f32 %v295, %v487
    %v520 = vmul.f32 %v296, %v488
    %v521 = vmul.f32 %v297, %v489
    %v522 = vmul.f32 %v298, %v490
    %v523 = vmul.f32 %v299, %v491
    %v524 = vmul.f32 %v300, %v492
    %v525 = vmul.f32 %v301, %v493
    %v526 = vmul.f32 %v302, %v494
    %v527 = vmul.f32 %v303, %v495
    %v528 = vmul.f32 %v304, %v496
    %v529 = vmul.f32 %v305, %v497
    %v530 = vmul.f32 %v306, %v498
    %v531 = vmul.f32 %v499, %v138
    %v532 = vmul.f32 %v500, %v138
    %v533 = vmul.f32 %v501, %v138
    %v534 = vmul.f32 %v502, %v138
    %v535 = vmul.f32 %v503, %v138
    %v536 = vmul.f32 %v504, %v138
    %v537 = vmul.f32 %v505, %v138
    %v538 = vmul.f32 %v506, %v138
    %v539 = vmul.f32 %v507, %v138
    %v540 = vmul.f32 %v508, %v138
    %v541 = vmul.f32 %v509, %v138
    %v542 = vmul.f32 %v510, %v138
    %v543 = vmul.f32 %v511, %v138
    %v544 = vmul.f32 %v512, %v138
    %v545 = vmul.f32 %v513, %v138
    %v546 = vmul.f32 %v514, %v138
    %v547 = vmul.f32 %v515, %v138
    %v548 = vmul.f32 %v516, %v138
    %v549 = vmul.f32 %v517, %v138
    %v550 = vmul.f32 %v518, %v138
    %v551 = vmul.f32 %v519, %v138
    %v552 = vmul.f32 %v520, %v138
    %v553 = vmul.f32 %v521, %v138
    %v554 = vmul.f32 %v522, %v138
    %v555 = vmul.f32 %v523, %v138
    %v556 = vmul.f32 %v524, %v138
    %v557 = vmul.f32 %v525, %v138
    %v558 = vmul.f32 %v526, %v138
    %v559 = vmul.f32 %v527, %v138
    %v560 = vmul.f32 %v528, %v138
    %v561 = vmul.f32 %v529, %v138
    %v562 = vmul.f32 %v530, %v138
    %v563 = vadd.f32 %v531, %v139
    %v564 = vadd.f32 %v532, %v139
    %v565 = vadd.f32 %v533, %v139
    %v566 = vadd.f32 %v534, %v139
    %v567 = vadd.f32 %v535, %v139
    %v568 = vadd.f32 %v536, %v139
    %v569 = vadd.f32 %v537, %v139
    %v570 = vadd.f32 %v538, %v139
    %v571 = vadd.f32 %v539, %v139
    %v572 = vadd.f32 %v540, %v139
    %v573 = vadd.f32 %v541, %v139
    %v574 = vadd.f32 %v542, %v139
    %v575 = vadd.f32 %v543, %v139
    %v576 = vadd.f32 %v544, %v139
    %v577 = vadd.f32 %v545, %v139
    %v578 = vadd.f32 %v546, %v139
    %v579 = vadd.f32 %v547, %v139
    %v580 = vadd.f32 %v548, %v139
    %v581 = vadd.f32 %v549, %v139
    %v582 = vadd.f32 %v550, %v139
    %v583 = vadd.f32 %v551, %v139
    %v584 = vadd.f32 %v552, %v139
    %v585 = vadd.f32 %v553, %v139
    %v586 = vadd.f32 %v554, %v139
    %v587 = vadd.f32 %v555, %v139
    %v588 = vadd.f32 %v556, %v139
    %v589 = vadd.f32 %v557, %v139
    %v590 = vadd.f32 %v558, %v139
    %v591 = vadd.f32 %v559, %v139
    %v592 = vadd.f32 %v560, %v139
    %v593 = vadd.f32 %v561, %v139
    %v594 = vadd.f32 %v562, %v139
    %v595 = vld [vmem:[#allocation5] sm:$0xff]
    %v596 = vld [vmem:[#allocation5 + $0x8] sm:$0xff]
    %v597 = vld [vmem:[#allocation5 + $0x10] sm:$0xff]
    %v598 = vld [vmem:[#allocation5 + $0x18] sm:$0xff]
    %v599 = vld [vmem:[#allocation5 + $0x20] sm:$0xff]
    %v600 = vld [vmem:[#allocation5 + $0x28] sm:$0xff]
    %v601 = vld [vmem:[#allocation5 + $0x30] sm:$0xff]
    %v602 = vld [vmem:[#allocation5 + $0x38] sm:$0xff]
    %v603 = vld [vmem:[#allocation5 + $0x40] sm:$0xff]
    %v604 = vld [vmem:[#allocation5 + $0x48] sm:$0xff]
    %v605 = vld [vmem:[#allocation5 + $0x50] sm:$0xff]
    %v606 = vld [vmem:[#allocation5 + $0x58] sm:$0xff]
    %v607 = vld [vmem:[#allocation5 + $0x60] sm:$0xff]
    %v608 = vld [vmem:[#allocation5 + $0x68] sm:$0xff]
    %v609 = vld [vmem:[#allocation5 + $0x70] sm:$0xff]
    %v610 = vld [vmem:[#allocation5 + $0x78] sm:$0xff]
    %v611 = vld [vmem:[#allocation5 + $0x80] sm:$0xff]
    %v612 = vld [vmem:[#allocation5 + $0x88] sm:$0xff]
    %v613 = vld [vmem:[#allocation5 + $0x90] sm:$0xff]
    %v614 = vld [vmem:[#allocation5 + $0x98] sm:$0xff]
    %v615 = vld [vmem:[#allocation5 + $0xa0] sm:$0xff]
    %v616 = vld [vmem:[#allocation5 + $0xa8] sm:$0xff]
    %v617 = vld [vmem:[#allocation5 + $0xb0] sm:$0xff]
    %v618 = vld [vmem:[#allocation5 + $0xb8] sm:$0xff]
    %v619 = vld [vmem:[#allocation5 + $0xc0] sm:$0xff]
    %v620 = vld [vmem:[#allocation5 + $0xc8] sm:$0xff]
    %v621 = vld [vmem:[#allocation5 + $0xd0] sm:$0xff]
    %v622 = vld [vmem:[#allocation5 + $0xd8] sm:$0xff]
    %v623 = vld [vmem:[#allocation5 + $0xe0] sm:$0xff]
    %v624 = vld [vmem:[#allocation5 + $0xe8] sm:$0xff]
    %v625 = vld [vmem:[#allocation5 + $0xf0] sm:$0xff]
    %v626 = vld [vmem:[#allocation5 + $0xf8] sm:$0xff]
    %627 = vadd.xlane.f32.xlu0 %v595
    %v628 = vpop.xlane.xlu0 %627
    %629 = vadd.xlane.f32.xlu0 %v596
    %v630 = vpop.xlane.xlu0 %629
    %631 = vadd.xlane.f32.xlu0 %v597
    %v632 = vpop.xlane.xlu0 %631
    %633 = vadd.xlane.f32.xlu0 %v598
    %v634 = vpop.xlane.xlu0 %633
    %635 = vadd.xlane.f32.xlu0 %v599
    %v636 = vpop.xlane.xlu0 %635
    %637 = vadd.xlane.f32.xlu0 %v600
    %v638 = vpop.xlane.xlu0 %637
    %639 = vadd.xlane.f32.xlu0 %v601
    %v640 = vpop.xlane.xlu0 %639
    %641 = vadd.xlane.f32.xlu0 %v602
    %v642 = vpop.xlane.xlu0 %641
    %643 = vadd.xlane.f32.xlu0 %v603
    %v644 = vpop.xlane.xlu0 %643
    %645 = vadd.xlane.f32.xlu0 %v604
    %v646 = vpop.xlane.xlu0 %645
    %647 = vadd.xlane.f32.xlu0 %v605
    %v648 = vpop.xlane.xlu0 %647
    %649 = vadd.xlane.f32.xlu0 %v606
    %v650 = vpop.xlane.xlu0 %649
    %651 = vadd.xlane.f32.xlu0 %v607
    %v652 = vpop.xlane.xlu0 %651
    %653 = vadd.xlane.f32.xlu0 %v608
    %v654 = vpop.xlane.xlu0 %653
    %655 = vadd.xlane.f32.xlu0 %v609
    %v656 = vpop.xlane.xlu0 %655
    %657 = vadd.xlane.f32.xlu0 %v610
    %v658 = vpop.xlane.xlu0 %657
    %659 = vadd.xlane.f32.xlu0 %v611
    %v660 = vpop.xlane.xlu0 %659
    %661 = vadd.xlane.f32.xlu0 %v612
    %v662 = vpop.xlane.xlu0 %661
    %663 = vadd.xlane.f32.xlu0 %v613
    %v664 = vpop.xlane.xlu0 %663
    %665 = vadd.xlane.f32.xlu0 %v614
    %v666 = vpop.xlane.xlu0 %665
    %667 = vadd.xlane.f32.xlu0 %v615
    %v668 = vpop.xlane.xlu0 %667
    %669 = vadd.xlane.f32.xlu0 %v616
    %v670 = vpop.xlane.xlu0 %669
    %671 = vadd.xlane.f32.xlu0 %v617
    %v672 = vpop.xlane.xlu0 %671
    %673 = vadd.xlane.f32.xlu0 %v618
    %v674 = vpop.xlane.xlu0 %673
    %675 = vadd.xlane.f32.xlu0 %v619
    %v676 = vpop.xlane.xlu0 %675
    %677 = vadd.xlane.f32.xlu0 %v620
    %v678 = vpop.xlane.xlu0 %677
    %679 = vadd.xlane.f32.xlu0 %v621
    %v680 = vpop.xlane.xlu0 %679
    %681 = vadd.xlane.f32.xlu0 %v622
    %v682 = vpop.xlane.xlu0 %681
    %683 = vadd.xlane.f32.xlu0 %v623
    %v684 = vpop.xlane.xlu0 %683
    %685 = vadd.xlane.f32.xlu0 %v624
    %v686 = vpop.xlane.xlu0 %685
    %687 = vadd.xlane.f32.xlu0 %v625
    %v688 = vpop.xlane.xlu0 %687
    %689 = vadd.xlane.f32.xlu0 %v626
    %v690 = vpop.xlane.xlu0 %689
    %v691 = vmul.f32 %v628, %v242
    %v692 = vmul.f32 %v630, %v242
    %v693 = vmul.f32 %v632, %v242
    %v694 = vmul.f32 %v634, %v242
    %v695 = vmul.f32 %v636, %v242
    %v696 = vmul.f32 %v638, %v242
    %v697 = vmul.f32 %v640, %v242
    %v698 = vmul.f32 %v642, %v242
    %v699 = vmul.f32 %v644, %v242
    %v700 = vmul.f32 %v646, %v242
    %v701 = vmul.f32 %v648, %v242
    %v702 = vmul.f32 %v650, %v242
    %v703 = vmul.f32 %v652, %v242
    %v704 = vmul.f32 %v654, %v242
    %v705 = vmul.f32 %v656, %v242
    %v706 = vmul.f32 %v658, %v242
    %v707 = vmul.f32 %v660, %v242
    %v708 = vmul.f32 %v662, %v242
    %v709 = vmul.f32 %v664, %v242
    %v710 = vmul.f32 %v666, %v242
    %v711 = vmul.f32 %v668, %v242
    %v712 = vmul.f32 %v670, %v242
    %v713 = vmul.f32 %v672, %v242
    %v714 = vmul.f32 %v674, %v242
    %v715 = vmul.f32 %v676, %v242
    %v716 = vmul.f32 %v678, %v242
    %v717 = vmul.f32 %v680, %v242
    %v718 = vmul.f32 %v682, %v242
    %v719 = vmul.f32 %v684, %v242
    %v720 = vmul.f32 %v686, %v242
    %v721 = vmul.f32 %v688, %v242
    %v722 = vmul.f32 %v690, %v242
    %v723 = vsub.f32 %v595, %v691
    %v724 = vsub.f32 %v596, %v692
    %v725 = vsub.f32 %v597, %v693
    %v726 = vsub.f32 %v598, %v694
    %v727 = vsub.f32 %v599, %v695
    %v728 = vsub.f32 %v600, %v696
    %v729 = vsub.f32 %v601, %v697
    %v730 = vsub.f32 %v602, %v698
    %v731 = vsub.f32 %v603, %v699
    %v732 = vsub.f32 %v604, %v700
    %v733 = vsub.f32 %v605, %v701
    %v734 = vsub.f32 %v606, %v702
    %v735 = vsub.f32 %v607, %v703
    %v736 = vsub.f32 %v608, %v704
    %v737 = vsub.f32 %v609, %v705
    %v738 = vsub.f32 %v610, %v706
    %v739 = vsub.f32 %v611, %v707
    %v740 = vsub.f32 %v612, %v708
    %v741 = vsub.f32 %v613, %v709
    %v742 = vsub.f32 %v614, %v710
    %v743 = vsub.f32 %v615, %v711
    %v744 = vsub.f32 %v616, %v712
    %v745 = vsub.f32 %v617, %v713
    %v746 = vsub.f32 %v618, %v714
    %v747 = vsub.f32 %v619, %v715
    %v748 = vsub.f32 %v620, %v716
    %v749 = vsub.f32 %v621, %v717
    %v750 = vsub.f32 %v622, %v718
    %v751 = vsub.f32 %v623, %v719
    %v752 = vsub.f32 %v624, %v720
    %v753 = vsub.f32 %v625, %v721
    %v754 = vsub.f32 %v626, %v722
    %v755 = vmul.f32 %v723, %v723
    %v756 = vmul.f32 %v724, %v724
    %v757 = vmul.f32 %v725, %v725
    %v758 = vmul.f32 %v726, %v726
    %v759 = vmul.f32 %v727, %v727
    %v760 = vmul.f32 %v728, %v728
    %v761 = vmul.f32 %v729, %v729
    %v762 = vmul.f32 %v730, %v730
    %v763 = vmul.f32 %v731, %v731
    %v764 = vmul.f32 %v732, %v732
    %v765 = vmul.f32 %v733, %v733
    %v766 = vmul.f32 %v734, %v734
    %v767 = vmul.f32 %v735, %v735
    %v768 = vmul.f32 %v736, %v736
    %v769 = vmul.f32 %v737, %v737
    %v770 = vmul.f32 %v738, %v738
    %v771 = vmul.f32 %v739, %v739
    %v772 = vmul.f32 %v740, %v740
    %v773 = vmul.f32 %v741, %v741
    %v774 = vmul.f32 %v742, %v742
    %v775 = vmul.f32 %v743, %v743
    %v776 = vmul.f32 %v744, %v744
    %v777 = vmul.f32 %v745, %v745
    %v778 = vmul.f32 %v746, %v746
    %v779 = vmul.f32 %v747, %v747
    %v780 = vmul.f32 %v748, %v748
    %v781 = vmul.f32 %v749, %v749
    %v782 = vmul.f32 %v750, %v750
    %v783 = vmul.f32 %v751, %v751
    %v784 = vmul.f32 %v752, %v752
    %v785 = vmul.f32 %v753, %v753
    %v786 = vmul.f32 %v754, %v754
    %787 = vadd.xlane.f32.xlu0 %v755
    %v788 = vpop.xlane.xlu0 %787
    %789 = vadd.xlane.f32.xlu0 %v756
    %v790 = vpop.xlane.xlu0 %789
    %791 = vadd.xlane.f32.xlu0 %v757
    %v792 = vpop.xlane.xlu0 %791
    %793 = vadd.xlane.f32.xlu0 %v758
    %v794 = vpop.xlane.xlu0 %793
    %795 = vadd.xlane.f32.xlu0 %v759
    %v796 = vpop.xlane.xlu0 %795
    %797 = vadd.xlane.f32.xlu0 %v760
    %v798 = vpop.xlane.xlu0 %797
    %799 = vadd.xlane.f32.xlu0 %v761
    %v800 = vpop.xlane.xlu0 %799
    %801 = vadd.xlane.f32.xlu0 %v762
    %v802 = vpop.xlane.xlu0 %801
    %803 = vadd.xlane.f32.xlu0 %v763
    %v804 = vpop.xlane.xlu0 %803
    %805 = vadd.xlane.f32.xlu0 %v764
    %v806 = vpop.xlane.xlu0 %805
    %807 = vadd.xlane.f32.xlu0 %v765
    %v808 = vpop.xlane.xlu0 %807
    %809 = vadd.xlane.f32.xlu0 %v766
    %v810 = vpop.xlane.xlu0 %809
    %811 = vadd.xlane.f32.xlu0 %v767
    %v812 = vpop.xlane.xlu0 %811
    %813 = vadd.xlane.f32.xlu0 %v768
    %v814 = vpop.xlane.xlu0 %813
    %815 = vadd.xlane.f32.xlu0 %v769
    %v816 = vpop.xlane.xlu0 %815
    %817 = vadd.xlane.f32.xlu0 %v770
    %v818 = vpop.xlane.xlu0 %817
    %819 = vadd.xlane.f32.xlu0 %v771
    %v820 = vpop.xlane.xlu0 %819
    %821 = vadd.xlane.f32.xlu0 %v772
    %v822 = vpop.xlane.xlu0 %821
    %823 = vadd.xlane.f32.xlu0 %v773
    %v824 = vpop.xlane.xlu0 %823
    %825 = vadd.xlane.f32.xlu0 %v774
    %v826 = vpop.xlane.xlu0 %825
    %827 = vadd.xlane.f32.xlu0 %v775
    %v828 = vpop.xlane.xlu0 %827
    %829 = vadd.xlane.f32.xlu0 %v776
    %v830 = vpop.xlane.xlu0 %829
    %831 = vadd.xlane.f32.xlu0 %v777
    %v832 = vpop.xlane.xlu0 %831
    %833 = vadd.xlane.f32.xlu0 %v778
    %v834 = vpop.xlane.xlu0 %833
    %835 = vadd.xlane.f32.xlu0 %v779
    %v836 = vpop.xlane.xlu0 %835
    %837 = vadd.xlane.f32.xlu0 %v780
    %v838 = vpop.xlane.xlu0 %837
    %839 = vadd.xlane.f32.xlu0 %v781
    %v840 = vpop.xlane.xlu0 %839
    %841 = vadd.xlane.f32.xlu0 %v782
    %v842 = vpop.xlane.xlu0 %841
    %843 = vadd.xlane.f32.xlu0 %v783
    %v844 = vpop.xlane.xlu0 %843
    %845 = vadd.xlane.f32.xlu0 %v784
    %v846 = vpop.xlane.xlu0 %845
    %847 = vadd.xlane.f32.xlu0 %v785
    %v848 = vpop.xlane.xlu0 %847
    %849 = vadd.xlane.f32.xlu0 %v786
    %v850 = vpop.xlane.xlu0 %849
    %v851 = vmul.f32 %v788, %v242
    %v852 = vmul.f32 %v790, %v242
    %v853 = vmul.f32 %v792, %v242
    %v854 = vmul.f32 %v794, %v242
    %v855 = vmul.f32 %v796, %v242
    %v856 = vmul.f32 %v798, %v242
    %v857 = vmul.f32 %v800, %v242
    %v858 = vmul.f32 %v802, %v242
    %v859 = vmul.f32 %v804, %v242
    %v860 = vmul.f32 %v806, %v242
    %v861 = vmul.f32 %v808, %v242
    %v862 = vmul.f32 %v810, %v242
    %v863 = vmul.f32 %v812, %v242
    %v864 = vmul.f32 %v814, %v242
    %v865 = vmul.f32 %v816, %v242
    %v866 = vmul.f32 %v818, %v242
    %v867 = vmul.f32 %v820, %v242
    %v868 = vmul.f32 %v822, %v242
    %v869 = vmul.f32 %v824, %v242
    %v870 = vmul.f32 %v826, %v242
    %v871 = vmul.f32 %v828, %v242
    %v872 = vmul.f32 %v830, %v242
    %v873 = vmul.f32 %v832, %v242
    %v874 = vmul.f32 %v834, %v242
    %v875 = vmul.f32 %v836, %v242
    %v876 = vmul.f32 %v838, %v242
    %v877 = vmul.f32 %v840, %v242
    %v878 = vmul.f32 %v842, %v242
    %v879 = vmul.f32 %v844, %v242
    %v880 = vmul.f32 %v846, %v242
    %v881 = vmul.f32 %v848, %v242
    %v882 = vmul.f32 %v850, %v242
    %v883 = vadd.f32 %v851, 1e-06
    %v884 = vadd.f32 %v852, 1e-06
    %v885 = vadd.f32 %v853, 1e-06
    %v886 = vadd.f32 %v854, 1e-06
    %v887 = vadd.f32 %v855, 1e-06
    %v888 = vadd.f32 %v856, 1e-06
    %v889 = vadd.f32 %v857, 1e-06
    %v890 = vadd.f32 %v858, 1e-06
    %v891 = vadd.f32 %v859, 1e-06
    %v892 = vadd.f32 %v860, 1e-06
    %v893 = vadd.f32 %v861, 1e-06
    %v894 = vadd.f32 %v862, 1e-06
    %v895 = vadd.f32 %v863, 1e-06
    %v896 = vadd.f32 %v864, 1e-06
    %v897 = vadd.f32 %v865, 1e-06
    %v898 = vadd.f32 %v866, 1e-06
    %v899 = vadd.f32 %v867, 1e-06
    %v900 = vadd.f32 %v868, 1e-06
    %v901 = vadd.f32 %v869, 1e-06
    %v902 = vadd.f32 %v870, 1e-06
    %v903 = vadd.f32 %v871, 1e-06
    %v904 = vadd.f32 %v872, 1e-06
    %v905 = vadd.f32 %v873, 1e-06
    %v906 = vadd.f32 %v874, 1e-06
    %v907 = vadd.f32 %v875, 1e-06
    %v908 = vadd.f32 %v876, 1e-06
    %v909 = vadd.f32 %v877, 1e-06
    %v910 = vadd.f32 %v878, 1e-06
    %v911 = vadd.f32 %v879, 1e-06
    %v912 = vadd.f32 %v880, 1e-06
    %v913 = vadd.f32 %v881, 1e-06
    %v914 = vadd.f32 %v882, 1e-06
    %v915 = vrsqrt.pop %v883
    %v916 = vrsqrt.pop %v884
    %v917 = vrsqrt.pop %v885
    %v918 = vrsqrt.pop %v886
    %v919 = vrsqrt.pop %v887
    %v920 = vrsqrt.pop %v888
    %v921 = vrsqrt.pop %v889
    %v922 = vrsqrt.pop %v890
    %v923 = vrsqrt.pop %v891
    %v924 = vrsqrt.pop %v892
    %v925 = vrsqrt.pop %v893
    %v926 = vrsqrt.pop %v894
    %v927 = vrsqrt.pop %v895
    %v928 = vrsqrt.pop %v896
    %v929 = vrsqrt.pop %v897
    %v930 = vrsqrt.pop %v898
    %v931 = vrsqrt.pop %v899
    %v932 = vrsqrt.pop %v900
    %v933 = vrsqrt.pop %v901
    %v934 = vrsqrt.pop %v902
    %v935 = vrsqrt.pop %v903
    %v936 = vrsqrt.pop %v904
    %v937 = vrsqrt.pop %v905
    %v938 = vrsqrt.pop %v906
    %v939 = vrsqrt.pop %v907
    %v940 = vrsqrt.pop %v908
    %v941 = vrsqrt.pop %v909
    %v942 = vrsqrt.pop %v910
    %v943 = vrsqrt.pop %v911
    %v944 = vrsqrt.pop %v912
    %v945 = vrsqrt.pop %v913
    %v946 = vrsqrt.pop %v914
    %v947 = vmul.f32 %v723, %v915
    %v948 = vmul.f32 %v724, %v916
    %v949 = vmul.f32 %v725, %v917
    %v950 = vmul.f32 %v726, %v918
    %v951 = vmul.f32 %v727, %v919
    %v952 = vmul.f32 %v728, %v920
    %v953 = vmul.f32 %v729, %v921
    %v954 = vmul.f32 %v730, %v922
    %v955 = vmul.f32 %v731, %v923
    %v956 = vmul.f32 %v732, %v924
    %v957 = vmul.f32 %v733, %v925
    %v958 = vmul.f32 %v734, %v926
    %v959 = vmul.f32 %v735, %v927
    %v960 = vmul.f32 %v736, %v928
    %v961 = vmul.f32 %v737, %v929
    %v962 = vmul.f32 %v738, %v930
    %v963 = vmul.f32 %v739, %v931
    %v964 = vmul.f32 %v740, %v932
    %v965 = vmul.f32 %v741, %v933
    %v966 = vmul.f32 %v742, %v934
    %v967 = vmul.f32 %v743, %v935
    %v968 = vmul.f32 %v744, %v936
    %v969 = vmul.f32 %v745, %v937
    %v970 = vmul.f32 %v746, %v938
    %v971 = vmul.f32 %v747, %v939
    %v972 = vmul.f32 %v748, %v940
    %v973 = vmul.f32 %v749, %v941
    %v974 = vmul.f32 %v750, %v942
    %v975 = vmul.f32 %v751, %v943
    %v976 = vmul.f32 %v752, %v944
    %v977 = vmul.f32 %v753, %v945
    %v978 = vmul.f32 %v754, %v946
    %v979 = vmul.f32 %v947, %v138
    %v980 = vmul.f32 %v948, %v138
    %v981 = vmul.f32 %v949, %v138
    %v982 = vmul.f32 %v950, %v138
    %v983 = vmul.f32 %v951, %v138
    %v984 = vmul.f32 %v952, %v138
    %v985 = vmul.f32 %v953, %v138
    %v986 = vmul.f32 %v954, %v138
    %v987 = vmul.f32 %v955, %v138
    %v988 = vmul.f32 %v956, %v138
    %v989 = vmul.f32 %v957, %v138
    %v990 = vmul.f32 %v958, %v138
    %v991 = vmul.f32 %v959, %v138
    %v992 = vmul.f32 %v960, %v138
    %v993 = vmul.f32 %v961, %v138
    %v994 = vmul.f32 %v962, %v138
    %v995 = vmul.f32 %v963, %v138
    %v996 = vmul.f32 %v964, %v138
    %v997 = vmul.f32 %v965, %v138
    %v998 = vmul.f32 %v966, %v138
    %v999 = vmul.f32 %v967, %v138
    %v1000 = vmul.f32 %v968, %v138
    %v1001 = vmul.f32 %v969, %v138
    %v1002 = vmul.f32 %v970, %v138
    %v1003 = vmul.f32 %v971, %v138
    %v1004 = vmul.f32 %v972, %v138
    %v1005 = vmul.f32 %v973, %v138
    %v1006 = vmul.f32 %v974, %v138
    %v1007 = vmul.f32 %v975, %v138
    %v1008 = vmul.f32 %v976, %v138
    %v1009 = vmul.f32 %v977, %v138
    %v1010 = vmul.f32 %v978, %v138
    %v1011 = vadd.f32 %v979, %v139
    %v1012 = vadd.f32 %v980, %v139
    %v1013 = vadd.f32 %v981, %v139
    %v1014 = vadd.f32 %v982, %v139
    %v1015 = vadd.f32 %v983, %v139
    %v1016 = vadd.f32 %v984, %v139
    %v1017 = vadd.f32 %v985, %v139
    %v1018 = vadd.f32 %v986, %v139
    %v1019 = vadd.f32 %v987, %v139
    %v1020 = vadd.f32 %v988, %v139
    %v1021 = vadd.f32 %v989, %v139
    %v1022 = vadd.f32 %v990, %v139
    %v1023 = vadd.f32 %v991, %v139
    %v1024 = vadd.f32 %v992, %v139
    %v1025 = vadd.f32 %v993, %v139
    %v1026 = vadd.f32 %v994, %v139
    %v1027 = vadd.f32 %v995, %v139
    %v1028 = vadd.f32 %v996, %v139
    %v1029 = vadd.f32 %v997, %v139
    %v1030 = vadd.f32 %v998, %v139
    %v1031 = vadd.f32 %v999, %v139
    %v1032 = vadd.f32 %v1000, %v139
    %v1033 = vadd.f32 %v1001, %v139
    %v1034 = vadd.f32 %v1002, %v139
    %v1035 = vadd.f32 %v1003, %v139
    %v1036 = vadd.f32 %v1004, %v139
    %v1037 = vadd.f32 %v1005, %v139
    %v1038 = vadd.f32 %v1006, %v139
    %v1039 = vadd.f32 %v1007, %v139
    %v1040 = vadd.f32 %v1008, %v139
    %v1041 = vadd.f32 %v1009, %v139
    %v1042 = vadd.f32 %v1010, %v139
    %v1043 = vpack.c.bf16 %v564, %v563
    %v1044 = vpack.c.bf16 %v566, %v565
    %v1045 = vpack.c.bf16 %v568, %v567
    %v1046 = vpack.c.bf16 %v570, %v569
    %v1047 = vpack.c.bf16 %v572, %v571
    %v1048 = vpack.c.bf16 %v574, %v573
    %v1049 = vpack.c.bf16 %v576, %v575
    %v1050 = vpack.c.bf16 %v578, %v577
    %v1051 = vpack.c.bf16 %v580, %v579
    %v1052 = vpack.c.bf16 %v582, %v581
    %v1053 = vpack.c.bf16 %v584, %v583
    %v1054 = vpack.c.bf16 %v586, %v585
    %v1055 = vpack.c.bf16 %v588, %v587
    %v1056 = vpack.c.bf16 %v590, %v589
    %v1057 = vpack.c.bf16 %v592, %v591
    %v1058 = vpack.c.bf16 %v594, %v593
    %v1059 = vld [vmem:[#allocation8] sm:$0xff]
    %v1060 = vld [vmem:[#allocation8 + $0x8] sm:$0xff]
    %v1061 = vld [vmem:[#allocation8 + $0x10] sm:$0xff]
    %v1062 = vld [vmem:[#allocation8 + $0x18] sm:$0xff]
    %v1063 = vld [vmem:[#allocation8 + $0x20] sm:$0xff]
    %v1064 = vld [vmem:[#allocation8 + $0x28] sm:$0xff]
    %v1065 = vld [vmem:[#allocation8 + $0x30] sm:$0xff]
    %v1066 = vld [vmem:[#allocation8 + $0x38] sm:$0xff]
    %v1067 = vld [vmem:[#allocation8 + $0x40] sm:$0xff]
    %v1068 = vld [vmem:[#allocation8 + $0x48] sm:$0xff]
    %v1069 = vld [vmem:[#allocation8 + $0x50] sm:$0xff]
    %v1070 = vld [vmem:[#allocation8 + $0x58] sm:$0xff]
    %v1071 = vld [vmem:[#allocation8 + $0x60] sm:$0xff]
    %v1072 = vld [vmem:[#allocation8 + $0x68] sm:$0xff]
    %v1073 = vld [vmem:[#allocation8 + $0x70] sm:$0xff]
    %v1074 = vld [vmem:[#allocation8 + $0x78] sm:$0xff]
    %v1076 = vlaneseq
    %v1077 = vshrl.u32 %v1076, 7
    %v1078 = vsub.s32 0, %v1077
    %v1079 = vrot.slane %v141, %v1078
    %v1080 = vlaneseq
    %v1081 = vshrl.u32 %v1080, 7
    %v1082 = vsub.s32 1, %v1081
    %v1083 = vrot.slane %v141, %v1082
    %v1102 = vunpack.c.l.b16 %v1059
    %v1103 = vunpack.c.h.b16 %v1059
    %v1104 = vunpack.c.l.b16 %v1060
    %v1105 = vunpack.c.h.b16 %v1060
    %v1106 = vunpack.c.l.b16 %v1061
    %v1107 = vunpack.c.h.b16 %v1061
    %v1108 = vunpack.c.l.b16 %v1062
    %v1109 = vunpack.c.h.b16 %v1062
    %v1110 = vunpack.c.l.b16 %v1063
    %v1111 = vunpack.c.h.b16 %v1063
    %v1112 = vunpack.c.l.b16 %v1064
    %v1113 = vunpack.c.h.b16 %v1064
    %v1114 = vunpack.c.l.b16 %v1065
    %v1115 = vunpack.c.h.b16 %v1065
    %v1116 = vunpack.c.l.b16 %v1066
    %v1117 = vunpack.c.h.b16 %v1066
    %v1118 = vunpack.c.l.b16 %v1067
    %v1119 = vunpack.c.h.b16 %v1067
    %v1120 = vunpack.c.l.b16 %v1068
    %v1121 = vunpack.c.h.b16 %v1068
    %v1122 = vunpack.c.l.b16 %v1069
    %v1123 = vunpack.c.h.b16 %v1069
    %v1124 = vunpack.c.l.b16 %v1070
    %v1125 = vunpack.c.h.b16 %v1070
    %v1126 = vunpack.c.l.b16 %v1071
    %v1127 = vunpack.c.h.b16 %v1071
    %v1128 = vunpack.c.l.b16 %v1072
    %v1129 = vunpack.c.h.b16 %v1072
    %v1130 = vunpack.c.l.b16 %v1073
    %v1131 = vunpack.c.h.b16 %v1073
    %v1132 = vunpack.c.l.b16 %v1074
    %v1133 = vunpack.c.h.b16 %v1074
    %v1134 = vpack.c.b16 %v1104, %v1102
    %v1135 = vpack.c.b16 %v1105, %v1103
    %v1136 = vpack.c.b16 %v1108, %v1106
    %v1137 = vpack.c.b16 %v1109, %v1107
    %v1138 = vpack.c.b16 %v1112, %v1110
    %v1139 = vpack.c.b16 %v1113, %v1111
    %v1140 = vpack.c.b16 %v1116, %v1114
    %v1141 = vpack.c.b16 %v1117, %v1115
    %v1142 = vpack.c.b16 %v1120, %v1118
    %v1143 = vpack.c.b16 %v1121, %v1119
    %v1144 = vpack.c.b16 %v1124, %v1122
    %v1145 = vpack.c.b16 %v1125, %v1123
    %v1146 = vpack.c.b16 %v1128, %v1126
    %v1147 = vpack.c.b16 %v1129, %v1127
    %v1148 = vpack.c.b16 %v1132, %v1130
    %v1149 = vpack.c.b16 %v1133, %v1131
    %1166 = vmatprep.subr.bf16.mxu0 %v1149
    %1167 = vmatpush1.bf16.msra.mxu0 %v1148
    %1168 = vmatprep.subr.bf16.mxu0 %v1147
    %1169 = vmatpush1.bf16.msra.mxu0 %v1146
    %1170 = vmatprep.subr.bf16.mxu0 %v1145
    %1171 = vmatpush1.bf16.msra.mxu0 %v1144
    %1172 = vmatprep.subr.bf16.mxu0 %v1143
    %1173 = vmatpush1.bf16.msra.mxu0 %v1142
    %1174 = vmatprep.subr.bf16.mxu0 %v1141
    %1175 = vmatpush1.bf16.msra.mxu0 %v1140
    %1176 = vmatprep.subr.bf16.mxu0 %v1139
    %1177 = vmatpush1.bf16.msra.mxu0 %v1138
    %1178 = vmatprep.subr.bf16.mxu0 %v1137
    %1179 = vmatpush1.bf16.msra.mxu0 %v1136
    %1180 = vmatprep.subr.bf16.mxu0 %v1135
    %1181 = vmatpush1.bf16.msra.mxu0 %v1134
    %1182 = vmatprep.subr.bf16.mxu0 0
    %1183 = vmatpush2.bf16.msra.mxu0 0
    %1184 = vmatprep.subr.bf16.mxu0 0
    %1185 = vmatpush2.bf16.msra.mxu0 0
    %1186 = vmatprep.subr.bf16.mxu0 0
    %1187 = vmatpush2.bf16.msra.mxu0 0
    %1188 = vmatprep.subr.bf16.mxu0 0
    %1189 = vmatpush2.bf16.msra.mxu0 0
    %1190 = vmatprep.subr.bf16.mxu0 0
    %1191 = vmatpush2.bf16.msra.mxu0 0
    %1192 = vmatprep.subr.bf16.mxu0 0
    %1193 = vmatpush2.bf16.msra.mxu0 0
    %1194 = vmatprep.subr.bf16.mxu0 0
    %1195 = vmatpush2.bf16.msra.mxu0 0
    %1196 = vmatprep.subr.bf16.mxu0 0
    %1197 = vmatpush2.bf16.msra.mxu0 0
    %1198 = vmatprep.mubr.bf16.mxu0 0
    %1199 = vmatmul.mubr.bf16.gmra.mxu0 %v1043
    %v1200 = vpop.f32.mrf.mxu0
    %v1201 = vadd.f32 %v1079, %v1200
    %v1202 = vpop.f32.mrf.mxu0
    %v1203 = vadd.f32 %v1083, %v1202
    %v1204 = vpop.f32.mrf.mxu0
    %v1205 = vadd.f32 %v1079, %v1204
    %v1206 = vpop.f32.mrf.mxu0
    %v1207 = vadd.f32 %v1083, %v1206
    %1208 = vmatprep.mubr.bf16.mxu0 0
    %1209 = vmatmul.mubr.bf16.gmra.mxu0 %v1044
    %v1210 = vpop.f32.mrf.mxu0
    %v1211 = vadd.f32 %v1079, %v1210
    %v1212 = vpop.f32.mrf.mxu0
    %v1213 = vadd.f32 %v1083, %v1212
    %v1214 = vpop.f32.mrf.mxu0
    %v1215 = vadd.f32 %v1079, %v1214
    %v1216 = vpop.f32.mrf.mxu0
    %v1217 = vadd.f32 %v1083, %v1216
    %1218 = vmatprep.mubr.bf16.mxu0 0
    %1219 = vmatmul.mubr.bf16.gmra.mxu0 %v1045
    %v1220 = vpop.f32.mrf.mxu0
    %v1221 = vadd.f32 %v1079, %v1220
    %v1222 = vpop.f32.mrf.mxu0
    %v1223 = vadd.f32 %v1083, %v1222
    %v1224 = vpop.f32.mrf.mxu0
    %v1225 = vadd.f32 %v1079, %v1224
    %v1226 = vpop.f32.mrf.mxu0
    %v1227 = vadd.f32 %v1083, %v1226
    %1228 = vmatprep.mubr.bf16.mxu0 0
    %1229 = vmatmul.mubr.bf16.gmra.mxu0 %v1046
    %v1230 = vpop.f32.mrf.mxu0
    %v1231 = vadd.f32 %v1079, %v1230
    %v1232 = vpop.f32.mrf.mxu0
    %v1233 = vadd.f32 %v1083, %v1232
    %v1234 = vpop.f32.mrf.mxu0
    %v1235 = vadd.f32 %v1079, %v1234
    %v1236 = vpop.f32.mrf.mxu0
    %v1237 = vadd.f32 %v1083, %v1236
    %1238 = vmatprep.mubr.bf16.mxu0 0
    %1239 = vmatmul.mubr.bf16.gmra.mxu0 %v1047
    %v1240 = vpop.f32.mrf.mxu0
    %v1241 = vadd.f32 %v1079, %v1240
    %v1242 = vpop.f32.mrf.mxu0
    %v1243 = vadd.f32 %v1083, %v1242
    %v1244 = vpop.f32.mrf.mxu0
    %v1245 = vadd.f32 %v1079, %v1244
    %v1246 = vpop.f32.mrf.mxu0
    %v1247 = vadd.f32 %v1083, %v1246
    %1248 = vmatprep.mubr.bf16.mxu0 0
    %1249 = vmatmul.mubr.bf16.gmra.mxu0 %v1048
    %v1250 = vpop.f32.mrf.mxu0
    %v1251 = vadd.f32 %v1079, %v1250
    %v1252 = vpop.f32.mrf.mxu0
    %v1253 = vadd.f32 %v1083, %v1252
    %v1254 = vpop.f32.mrf.mxu0
    %v1255 = vadd.f32 %v1079, %v1254
    %v1256 = vpop.f32.mrf.mxu0
    %v1257 = vadd.f32 %v1083, %v1256
    %1258 = vmatprep.mubr.bf16.mxu0 0
    %1259 = vmatmul.mubr.bf16.gmra.mxu0 %v1049
    %v1260 = vpop.f32.mrf.mxu0
    %v1261 = vadd.f32 %v1079, %v1260
    %v1262 = vpop.f32.mrf.mxu0
    %v1263 = vadd.f32 %v1083, %v1262
    %v1264 = vpop.f32.mrf.mxu0
    %v1265 = vadd.f32 %v1079, %v1264
    %v1266 = vpop.f32.mrf.mxu0
    %v1267 = vadd.f32 %v1083, %v1266
    %1268 = vmatprep.mubr.bf16.mxu0 0
    %1269 = vmatmul.mubr.bf16.gmra.mxu0 %v1050
    %v1270 = vpop.f32.mrf.mxu0
    %v1271 = vadd.f32 %v1079, %v1270
    %v1272 = vpop.f32.mrf.mxu0
    %v1273 = vadd.f32 %v1083, %v1272
    %v1274 = vpop.f32.mrf.mxu0
    %v1275 = vadd.f32 %v1079, %v1274
    %v1276 = vpop.f32.mrf.mxu0
    %v1277 = vadd.f32 %v1083, %v1276
    %1278 = vmatprep.mubr.bf16.mxu0 0
    %1279 = vmatmul.mubr.bf16.gmra.mxu0 %v1051
    %v1280 = vpop.f32.mrf.mxu0
    %v1281 = vadd.f32 %v1079, %v1280
    %v1282 = vpop.f32.mrf.mxu0
    %v1283 = vadd.f32 %v1083, %v1282
    %v1284 = vpop.f32.mrf.mxu0
    %v1285 = vadd.f32 %v1079, %v1284
    %v1286 = vpop.f32.mrf.mxu0
    %v1287 = vadd.f32 %v1083, %v1286
    %1288 = vmatprep.mubr.bf16.mxu0 0
    %1289 = vmatmul.mubr.bf16.gmra.mxu0 %v1052
    %v1290 = vpop.f32.mrf.mxu0
    %v1291 = vadd.f32 %v1079, %v1290
    %v1292 = vpop.f32.mrf.mxu0
    %v1293 = vadd.f32 %v1083, %v1292
    %v1294 = vpop.f32.mrf.mxu0
    %v1295 = vadd.f32 %v1079, %v1294
    %v1296 = vpop.f32.mrf.mxu0
    %v1297 = vadd.f32 %v1083, %v1296
    %1298 = vmatprep.mubr.bf16.mxu0 0
    %1299 = vmatmul.mubr.bf16.gmra.mxu0 %v1053
    %v1300 = vpop.f32.mrf.mxu0
    %v1301 = vadd.f32 %v1079, %v1300
    %v1302 = vpop.f32.mrf.mxu0
    %v1303 = vadd.f32 %v1083, %v1302
    %v1304 = vpop.f32.mrf.mxu0
    %v1305 = vadd.f32 %v1079, %v1304
    %v1306 = vpop.f32.mrf.mxu0
    %v1307 = vadd.f32 %v1083, %v1306
    %1308 = vmatprep.mubr.bf16.mxu0 0
    %1309 = vmatmul.mubr.bf16.gmra.mxu0 %v1054
    %v1310 = vpop.f32.mrf.mxu0
    %v1311 = vadd.f32 %v1079, %v1310
    %v1312 = vpop.f32.mrf.mxu0
    %v1313 = vadd.f32 %v1083, %v1312
    %v1314 = vpop.f32.mrf.mxu0
    %v1315 = vadd.f32 %v1079, %v1314
    %v1316 = vpop.f32.mrf.mxu0
    %v1317 = vadd.f32 %v1083, %v1316
    %1318 = vmatprep.mubr.bf16.mxu0 0
    %1319 = vmatmul.mubr.bf16.gmra.mxu0 %v1055
    %v1320 = vpop.f32.mrf.mxu0
    %v1321 = vadd.f32 %v1079, %v1320
    %v1322 = vpop.f32.mrf.mxu0
    %v1323 = vadd.f32 %v1083, %v1322
    %v1324 = vpop.f32.mrf.mxu0
    %v1325 = vadd.f32 %v1079, %v1324
    %v1326 = vpop.f32.mrf.mxu0
    %v1327 = vadd.f32 %v1083, %v1326
    %1328 = vmatprep.mubr.bf16.mxu0 0
    %1329 = vmatmul.mubr.bf16.gmra.mxu0 %v1056
    %v1330 = vpop.f32.mrf.mxu0
    %v1331 = vadd.f32 %v1079, %v1330
    %v1332 = vpop.f32.mrf.mxu0
    %v1333 = vadd.f32 %v1083, %v1332
    %v1334 = vpop.f32.mrf.mxu0
    %v1335 = vadd.f32 %v1079, %v1334
    %v1336 = vpop.f32.mrf.mxu0
    %v1337 = vadd.f32 %v1083, %v1336
    %1338 = vmatprep.mubr.bf16.mxu0 0
    %1339 = vmatmul.mubr.bf16.gmra.mxu0 %v1057
    %v1340 = vpop.f32.mrf.mxu0
    %v1341 = vadd.f32 %v1079, %v1340
    %v1342 = vpop.f32.mrf.mxu0
    %v1343 = vadd.f32 %v1083, %v1342
    %v1344 = vpop.f32.mrf.mxu0
    %v1345 = vadd.f32 %v1079, %v1344
    %v1346 = vpop.f32.mrf.mxu0
    %v1347 = vadd.f32 %v1083, %v1346
    %1348 = vmatprep.mubr.bf16.mxu0 0
    %1349 = vmatmul.mubr.bf16.gmra.mxu0 %v1058
    %v1350 = vpop.f32.mrf.mxu0
    %v1351 = vadd.f32 %v1079, %v1350
    %v1352 = vpop.f32.mrf.mxu0
    %v1353 = vadd.f32 %v1083, %v1352
    %v1354 = vpop.f32.mrf.mxu0
    %v1355 = vadd.f32 %v1079, %v1354
    %v1356 = vpop.f32.mrf.mxu0
    %v1357 = vadd.f32 %v1083, %v1356
    %1358 = vdwg.mxu0
    %v1359 = vmul.f32 %v1201, %v1011
    %v1360 = vmul.f32 %v1205, %v1012
    %v1361 = vmul.f32 %v1211, %v1013
    %v1362 = vmul.f32 %v1215, %v1014
    %v1363 = vmul.f32 %v1221, %v1015
    %v1364 = vmul.f32 %v1225, %v1016
    %v1365 = vmul.f32 %v1231, %v1017
    %v1366 = vmul.f32 %v1235, %v1018
    %v1367 = vmul.f32 %v1241, %v1019
    %v1368 = vmul.f32 %v1245, %v1020
    %v1369 = vmul.f32 %v1251, %v1021
    %v1370 = vmul.f32 %v1255, %v1022
    %v1371 = vmul.f32 %v1261, %v1023
    %v1372 = vmul.f32 %v1265, %v1024
    %v1373 = vmul.f32 %v1271, %v1025
    %v1374 = vmul.f32 %v1275, %v1026
    %v1375 = vmul.f32 %v1281, %v1027
    %v1376 = vmul.f32 %v1285, %v1028
    %v1377 = vmul.f32 %v1291, %v1029
    %v1378 = vmul.f32 %v1295, %v1030
    %v1379 = vmul.f32 %v1301, %v1031
    %v1380 = vmul.f32 %v1305, %v1032
    %v1381 = vmul.f32 %v1311, %v1033
    %v1382 = vmul.f32 %v1315, %v1034
    %v1383 = vmul.f32 %v1321, %v1035
    %v1384 = vmul.f32 %v1325, %v1036
    %v1385 = vmul.f32 %v1331, %v1037
    %v1386 = vmul.f32 %v1335, %v1038
    %v1387 = vmul.f32 %v1341, %v1039
    %v1388 = vmul.f32 %v1345, %v1040
    %v1389 = vmul.f32 %v1351, %v1041
    %v1390 = vmul.f32 %v1355, %v1042
    %v1391 = vadd.f32 %v1359, %v1203
    %v1392 = vadd.f32 %v1360, %v1207
    %v1393 = vadd.f32 %v1361, %v1213
    %v1394 = vadd.f32 %v1362, %v1217
    %v1395 = vadd.f32 %v1363, %v1223
    %v1396 = vadd.f32 %v1364, %v1227
    %v1397 = vadd.f32 %v1365, %v1233
    %v1398 = vadd.f32 %v1366, %v1237
    %v1399 = vadd.f32 %v1367, %v1243
    %v1400 = vadd.f32 %v1368, %v1247
    %v1401 = vadd.f32 %v1369, %v1253
    %v1402 = vadd.f32 %v1370, %v1257
    %v1403 = vadd.f32 %v1371, %v1263
    %v1404 = vadd.f32 %v1372, %v1267
    %v1405 = vadd.f32 %v1373, %v1273
    %v1406 = vadd.f32 %v1374, %v1277
    %v1407 = vadd.f32 %v1375, %v1283
    %v1408 = vadd.f32 %v1376, %v1287
    %v1409 = vadd.f32 %v1377, %v1293
    %v1410 = vadd.f32 %v1378, %v1297
    %v1411 = vadd.f32 %v1379, %v1303
    %v1412 = vadd.f32 %v1380, %v1307
    %v1413 = vadd.f32 %v1381, %v1313
    %v1414 = vadd.f32 %v1382, %v1317
    %v1415 = vadd.f32 %v1383, %v1323
    %v1416 = vadd.f32 %v1384, %v1327
    %v1417 = vadd.f32 %v1385, %v1333
    %v1418 = vadd.f32 %v1386, %v1337
    %v1419 = vadd.f32 %v1387, %v1343
    %v1420 = vadd.f32 %v1388, %v1347
    %v1421 = vadd.f32 %v1389, %v1353
    %v1422 = vadd.f32 %v1390, %v1357
    %v1423 = vpack.c.bf16 %v1392, %v1391
    %v1424 = vpack.c.bf16 %v1394, %v1393
    %v1425 = vpack.c.bf16 %v1396, %v1395
    %v1426 = vpack.c.bf16 %v1398, %v1397
    %v1427 = vpack.c.bf16 %v1400, %v1399
    %v1428 = vpack.c.bf16 %v1402, %v1401
    %v1429 = vpack.c.bf16 %v1404, %v1403
    %v1430 = vpack.c.bf16 %v1406, %v1405
    %v1431 = vpack.c.bf16 %v1408, %v1407
    %v1432 = vpack.c.bf16 %v1410, %v1409
    %v1433 = vpack.c.bf16 %v1412, %v1411
    %v1434 = vpack.c.bf16 %v1414, %v1413
    %v1435 = vpack.c.bf16 %v1416, %v1415
    %v1436 = vpack.c.bf16 %v1418, %v1417
    %v1437 = vpack.c.bf16 %v1420, %v1419
    %v1438 = vpack.c.bf16 %v1422, %v1421
    %v1439 = vld [vmem:[#allocation10] sm:$0xf]
    %v1440 = vld [vmem:[#allocation10 + $0x4] sm:$0xf]
    %v1441 = vld [vmem:[#allocation10 + $0x8] sm:$0xf]
    %v1442 = vld [vmem:[#allocation10 + $0xc] sm:$0xf]
    %v1443 = vld [vmem:[#allocation10 + $0x10] sm:$0xf]
    %v1444 = vld [vmem:[#allocation10 + $0x14] sm:$0xf]
    %v1445 = vld [vmem:[#allocation10 + $0x18] sm:$0xf]
    %v1446 = vld [vmem:[#allocation10 + $0x1c] sm:$0xf]
    %v1447 = vld [vmem:[#allocation10 + $0x20] sm:$0xf]
    %v1448 = vld [vmem:[#allocation10 + $0x24] sm:$0xf]
    %v1449 = vld [vmem:[#allocation10 + $0x28] sm:$0xf]
    %v1450 = vld [vmem:[#allocation10 + $0x2c] sm:$0xf]
    %v1451 = vld [vmem:[#allocation10 + $0x30] sm:$0xf]
    %v1452 = vld [vmem:[#allocation10 + $0x34] sm:$0xf]
    %v1453 = vld [vmem:[#allocation10 + $0x38] sm:$0xf]
    %v1454 = vld [vmem:[#allocation10 + $0x3c] sm:$0xf]
    %v1471 = vunpack.c.l.b16 %v1439
    %v1472 = vunpack.c.l.b16 %v1440
    %v1473 = vunpack.c.l.b16 %v1441
    %v1474 = vunpack.c.l.b16 %v1442
    %v1475 = vunpack.c.l.b16 %v1443
    %v1476 = vunpack.c.l.b16 %v1444
    %v1477 = vunpack.c.l.b16 %v1445
    %v1478 = vunpack.c.l.b16 %v1446
    %v1479 = vunpack.c.l.b16 %v1447
    %v1480 = vunpack.c.l.b16 %v1448
    %v1481 = vunpack.c.l.b16 %v1449
    %v1482 = vunpack.c.l.b16 %v1450
    %v1483 = vunpack.c.l.b16 %v1451
    %v1484 = vunpack.c.l.b16 %v1452
    %v1485 = vunpack.c.l.b16 %v1453
    %v1486 = vunpack.c.l.b16 %v1454
    %v1487 = vpack.c.b16 %v1472, %v1471
    %v1488 = vpack.c.b16 %v1474, %v1473
    %v1489 = vpack.c.b16 %v1476, %v1475
    %v1490 = vpack.c.b16 %v1478, %v1477
    %v1491 = vpack.c.b16 %v1480, %v1479
    %v1492 = vpack.c.b16 %v1482, %v1481
    %v1493 = vpack.c.b16 %v1484, %v1483
    %v1494 = vpack.c.b16 %v1486, %v1485
    %1503 = vmatprep.subr.bf16.mxu0 0
    %1504 = vmatpush1.bf16.msra.mxu0 %v1494
    %1505 = vmatprep.subr.bf16.mxu0 0
    %1506 = vmatpush1.bf16.msra.mxu0 %v1493
    %1507 = vmatprep.subr.bf16.mxu0 0
    %1508 = vmatpush1.bf16.msra.mxu0 %v1492
    %1509 = vmatprep.subr.bf16.mxu0 0
    %1510 = vmatpush1.bf16.msra.mxu0 %v1491
    %1511 = vmatprep.subr.bf16.mxu0 0
    %1512 = vmatpush1.bf16.msra.mxu0 %v1490
    %1513 = vmatprep.subr.bf16.mxu0 0
    %1514 = vmatpush1.bf16.msra.mxu0 %v1489
    %1515 = vmatprep.subr.bf16.mxu0 0
    %1516 = vmatpush1.bf16.msra.mxu0 %v1488
    %1517 = vmatprep.subr.bf16.mxu0 0
    %1518 = vmatpush1.bf16.msra.mxu0 %v1487
    %1519 = vmatprep.subr.bf16.mxu0 0
    %1520 = vmatpush2.bf16.msra.mxu0 0
    %1521 = vmatprep.subr.bf16.mxu0 0
    %1522 = vmatpush2.bf16.msra.mxu0 0
    %1523 = vmatprep.subr.bf16.mxu0 0
    %1524 = vmatpush2.bf16.msra.mxu0 0
    %1525 = vmatprep.subr.bf16.mxu0 0
    %1526 = vmatpush2.bf16.msra.mxu0 0
    %1527 = vmatprep.subr.bf16.mxu0 0
    %1528 = vmatpush2.bf16.msra.mxu0 0
    %1529 = vmatprep.subr.bf16.mxu0 0
    %1530 = vmatpush2.bf16.msra.mxu0 0
    %1531 = vmatprep.subr.bf16.mxu0 0
    %1532 = vmatpush2.bf16.msra.mxu0 0
    %1533 = vmatprep.subr.bf16.mxu0 0
    %1534 = vmatpush2.bf16.msra.mxu0 0
    %1535 = vmatprep.mubr.bf16.mxu0 0
    %1536 = vmatmul.mubr.bf16.gmra.mxu0 %v1423
    %v1537 = vpop.f32.mrf.mxu0
    %v1538 = vadd.f32 %v142, %v1537
    %v1539 = vpop.f32.mrf.mxu0
    %v1540 = vpop.f32.mrf.mxu0
    %v1541 = vadd.f32 %v142, %v1540
    %v1542 = vpop.f32.mrf.mxu0
    %1543 = vmatprep.mubr.bf16.mxu0 0
    %1544 = vmatmul.mubr.bf16.gmra.mxu0 %v1424
    %v1545 = vpop.f32.mrf.mxu0
    %v1546 = vadd.f32 %v142, %v1545
    %v1547 = vpop.f32.mrf.mxu0
    %v1548 = vpop.f32.mrf.mxu0
    %v1549 = vadd.f32 %v142, %v1548
    %v1550 = vpop.f32.mrf.mxu0
    %1551 = vmatprep.mubr.bf16.mxu0 0
    %1552 = vmatmul.mubr.bf16.gmra.mxu0 %v1425
    %v1553 = vpop.f32.mrf.mxu0
    %v1554 = vadd.f32 %v142, %v1553
    %v1555 = vpop.f32.mrf.mxu0
    %v1556 = vpop.f32.mrf.mxu0
    %v1557 = vadd.f32 %v142, %v1556
    %v1558 = vpop.f32.mrf.mxu0
    %1559 = vmatprep.mubr.bf16.mxu0 0
    %1560 = vmatmul.mubr.bf16.gmra.mxu0 %v1426
    %v1561 = vpop.f32.mrf.mxu0
    %v1562 = vadd.f32 %v142, %v1561
    %v1563 = vpop.f32.mrf.mxu0
    %v1564 = vpop.f32.mrf.mxu0
    %v1565 = vadd.f32 %v142, %v1564
    %v1566 = vpop.f32.mrf.mxu0
    %1567 = vmatprep.mubr.bf16.mxu0 0
    %1568 = vmatmul.mubr.bf16.gmra.mxu0 %v1427
    %v1569 = vpop.f32.mrf.mxu0
    %v1570 = vadd.f32 %v142, %v1569
    %v1571 = vpop.f32.mrf.mxu0
    %v1572 = vpop.f32.mrf.mxu0
    %v1573 = vadd.f32 %v142, %v1572
    %v1574 = vpop.f32.mrf.mxu0
    %1575 = vmatprep.mubr.bf16.mxu0 0
    %1576 = vmatmul.mubr.bf16.gmra.mxu0 %v1428
    %v1577 = vpop.f32.mrf.mxu0
    %v1578 = vadd.f32 %v142, %v1577
    %v1579 = vpop.f32.mrf.mxu0
    %v1580 = vpop.f32.mrf.mxu0
    %v1581 = vadd.f32 %v142, %v1580
    %v1582 = vpop.f32.mrf.mxu0
    %1583 = vmatprep.mubr.bf16.mxu0 0
    %1584 = vmatmul.mubr.bf16.gmra.mxu0 %v1429
    %v1585 = vpop.f32.mrf.mxu0
    %v1586 = vadd.f32 %v142, %v1585
    %v1587 = vpop.f32.mrf.mxu0
    %v1588 = vpop.f32.mrf.mxu0
    %v1589 = vadd.f32 %v142, %v1588
    %v1590 = vpop.f32.mrf.mxu0
    %1591 = vmatprep.mubr.bf16.mxu0 0
    %1592 = vmatmul.mubr.bf16.gmra.mxu0 %v1430
    %v1593 = vpop.f32.mrf.mxu0
    %v1594 = vadd.f32 %v142, %v1593
    %v1595 = vpop.f32.mrf.mxu0
    %v1596 = vpop.f32.mrf.mxu0
    %v1597 = vadd.f32 %v142, %v1596
    %v1598 = vpop.f32.mrf.mxu0
    %1599 = vmatprep.mubr.bf16.mxu0 0
    %1600 = vmatmul.mubr.bf16.gmra.mxu0 %v1431
    %v1601 = vpop.f32.mrf.mxu0
    %v1602 = vadd.f32 %v142, %v1601
    %v1603 = vpop.f32.mrf.mxu0
    %v1604 = vpop.f32.mrf.mxu0
    %v1605 = vadd.f32 %v142, %v1604
    %v1606 = vpop.f32.mrf.mxu0
    %1607 = vmatprep.mubr.bf16.mxu0 0
    %1608 = vmatmul.mubr.bf16.gmra.mxu0 %v1432
    %v1609 = vpop.f32.mrf.mxu0
    %v1610 = vadd.f32 %v142, %v1609
    %v1611 = vpop.f32.mrf.mxu0
    %v1612 = vpop.f32.mrf.mxu0
    %v1613 = vadd.f32 %v142, %v1612
    %v1614 = vpop.f32.mrf.mxu0
    %1615 = vmatprep.mubr.bf16.mxu0 0
    %1616 = vmatmul.mubr.bf16.gmra.mxu0 %v1433
    %v1617 = vpop.f32.mrf.mxu0
    %v1618 = vadd.f32 %v142, %v1617
    %v1619 = vpop.f32.mrf.mxu0
    %v1620 = vpop.f32.mrf.mxu0
    %v1621 = vadd.f32 %v142, %v1620
    %v1622 = vpop.f32.mrf.mxu0
    %1623 = vmatprep.mubr.bf16.mxu0 0
    %1624 = vmatmul.mubr.bf16.gmra.mxu0 %v1434
    %v1625 = vpop.f32.mrf.mxu0
    %v1626 = vadd.f32 %v142, %v1625
    %v1627 = vpop.f32.mrf.mxu0
    %v1628 = vpop.f32.mrf.mxu0
    %v1629 = vadd.f32 %v142, %v1628
    %v1630 = vpop.f32.mrf.mxu0
    %1631 = vmatprep.mubr.bf16.mxu0 0
    %1632 = vmatmul.mubr.bf16.gmra.mxu0 %v1435
    %v1633 = vpop.f32.mrf.mxu0
    %v1634 = vadd.f32 %v142, %v1633
    %v1635 = vpop.f32.mrf.mxu0
    %v1636 = vpop.f32.mrf.mxu0
    %v1637 = vadd.f32 %v142, %v1636
    %v1638 = vpop.f32.mrf.mxu0
    %1639 = vmatprep.mubr.bf16.mxu0 0
    %1640 = vmatmul.mubr.bf16.gmra.mxu0 %v1436
    %v1641 = vpop.f32.mrf.mxu0
    %v1642 = vadd.f32 %v142, %v1641
    %v1643 = vpop.f32.mrf.mxu0
    %v1644 = vpop.f32.mrf.mxu0
    %v1645 = vadd.f32 %v142, %v1644
    %v1646 = vpop.f32.mrf.mxu0
    %1647 = vmatprep.mubr.bf16.mxu0 0
    %1648 = vmatmul.mubr.bf16.gmra.mxu0 %v1437
    %v1649 = vpop.f32.mrf.mxu0
    %v1650 = vadd.f32 %v142, %v1649
    %v1651 = vpop.f32.mrf.mxu0
    %v1652 = vpop.f32.mrf.mxu0
    %v1653 = vadd.f32 %v142, %v1652
    %v1654 = vpop.f32.mrf.mxu0
    %1655 = vmatprep.mubr.bf16.mxu0 0
    %1656 = vmatmul.mubr.bf16.gmra.mxu0 %v1438
    %v1657 = vpop.f32.mrf.mxu0
    %v1658 = vadd.f32 %v142, %v1657
    %v1659 = vpop.f32.mrf.mxu0
    %v1660 = vpop.f32.mrf.mxu0
    %v1661 = vadd.f32 %v142, %v1660
    %v1662 = vpop.f32.mrf.mxu0
    %1663 = vdwg.mxu0
    %v1664 = vpack.c.bf16 %v1541, %v1538
    %v1665 = vpack.c.bf16 %v1549, %v1546
    %v1666 = vpack.c.bf16 %v1557, %v1554
    %v1667 = vpack.c.bf16 %v1565, %v1562
    %v1668 = vpack.c.bf16 %v1573, %v1570
    %v1669 = vpack.c.bf16 %v1581, %v1578
    %v1670 = vpack.c.bf16 %v1589, %v1586
    %v1671 = vpack.c.bf16 %v1597, %v1594
    %v1672 = vpack.c.bf16 %v1605, %v1602
    %v1673 = vpack.c.bf16 %v1613, %v1610
    %v1674 = vpack.c.bf16 %v1621, %v1618
    %v1675 = vpack.c.bf16 %v1629, %v1626
    %v1676 = vpack.c.bf16 %v1637, %v1634
    %v1677 = vpack.c.bf16 %v1645, %v1642
    %v1678 = vpack.c.bf16 %v1653, %v1650
    %v1679 = vpack.c.bf16 %v1661, %v1658
    %v1680 = vld [vmem:[#allocation11] sm:$0xf]
    %v1681 = vld [vmem:[#allocation11 + $0x4] sm:$0xf]
    %v1682 = vld [vmem:[#allocation11 + $0x8] sm:$0xf]
    %v1683 = vld [vmem:[#allocation11 + $0xc] sm:$0xf]
    %v1684 = vld [vmem:[#allocation11 + $0x10] sm:$0xf]
    %v1685 = vld [vmem:[#allocation11 + $0x14] sm:$0xf]
    %v1686 = vld [vmem:[#allocation11 + $0x18] sm:$0xf]
    %v1687 = vld [vmem:[#allocation11 + $0x1c] sm:$0xf]
    %v1688 = vld [vmem:[#allocation11 + $0x20] sm:$0xf]
    %v1689 = vld [vmem:[#allocation11 + $0x24] sm:$0xf]
    %v1690 = vld [vmem:[#allocation11 + $0x28] sm:$0xf]
    %v1691 = vld [vmem:[#allocation11 + $0x2c] sm:$0xf]
    %v1692 = vld [vmem:[#allocation11 + $0x30] sm:$0xf]
    %v1693 = vld [vmem:[#allocation11 + $0x34] sm:$0xf]
    %v1694 = vld [vmem:[#allocation11 + $0x38] sm:$0xf]
    %v1695 = vld [vmem:[#allocation11 + $0x3c] sm:$0xf]
    %v1712 = vunpack.c.l.b16 %v1680
    %v1713 = vunpack.c.l.b16 %v1681
    %v1714 = vunpack.c.l.b16 %v1682
    %v1715 = vunpack.c.l.b16 %v1683
    %v1716 = vunpack.c.l.b16 %v1684
    %v1717 = vunpack.c.l.b16 %v1685
    %v1718 = vunpack.c.l.b16 %v1686
    %v1719 = vunpack.c.l.b16 %v1687
    %v1720 = vunpack.c.l.b16 %v1688
    %v1721 = vunpack.c.l.b16 %v1689
    %v1722 = vunpack.c.l.b16 %v1690
    %v1723 = vunpack.c.l.b16 %v1691
    %v1724 = vunpack.c.l.b16 %v1692
    %v1725 = vunpack.c.l.b16 %v1693
    %v1726 = vunpack.c.l.b16 %v1694
    %v1727 = vunpack.c.l.b16 %v1695
    %v1728 = vpack.c.b16 %v1713, %v1712
    %v1729 = vpack.c.b16 %v1715, %v1714
    %v1730 = vpack.c.b16 %v1717, %v1716
    %v1731 = vpack.c.b16 %v1719, %v1718
    %v1732 = vpack.c.b16 %v1721, %v1720
    %v1733 = vpack.c.b16 %v1723, %v1722
    %v1734 = vpack.c.b16 %v1725, %v1724
    %v1735 = vpack.c.b16 %v1727, %v1726
    %1744 = vmatprep.subr.bf16.mxu0 0
    %1745 = vmatpush1.bf16.msra.mxu0 %v1735
    %1746 = vmatprep.subr.bf16.mxu0 0
    %1747 = vmatpush1.bf16.msra.mxu0 %v1734
    %1748 = vmatprep.subr.bf16.mxu0 0
    %1749 = vmatpush1.bf16.msra.mxu0 %v1733
    %1750 = vmatprep.subr.bf16.mxu0 0
    %1751 = vmatpush1.bf16.msra.mxu0 %v1732
    %1752 = vmatprep.subr.bf16.mxu0 0
    %1753 = vmatpush1.bf16.msra.mxu0 %v1731
    %1754 = vmatprep.subr.bf16.mxu0 0
    %1755 = vmatpush1.bf16.msra.mxu0 %v1730
    %1756 = vmatprep.subr.bf16.mxu0 0
    %1757 = vmatpush1.bf16.msra.mxu0 %v1729
    %1758 = vmatprep.subr.bf16.mxu0 0
    %1759 = vmatpush1.bf16.msra.mxu0 %v1728
    %1760 = vmatprep.subr.bf16.mxu0 0
    %1761 = vmatpush2.bf16.msra.mxu0 0
    %1762 = vmatprep.subr.bf16.mxu0 0
    %1763 = vmatpush2.bf16.msra.mxu0 0
    %1764 = vmatprep.subr.bf16.mxu0 0
    %1765 = vmatpush2.bf16.msra.mxu0 0
    %1766 = vmatprep.subr.bf16.mxu0 0
    %1767 = vmatpush2.bf16.msra.mxu0 0
    %1768 = vmatprep.subr.bf16.mxu0 0
    %1769 = vmatpush2.bf16.msra.mxu0 0
    %1770 = vmatprep.subr.bf16.mxu0 0
    %1771 = vmatpush2.bf16.msra.mxu0 0
    %1772 = vmatprep.subr.bf16.mxu0 0
    %1773 = vmatpush2.bf16.msra.mxu0 0
    %1774 = vmatprep.subr.bf16.mxu0 0
    %1775 = vmatpush2.bf16.msra.mxu0 0
    %1776 = vmatprep.mubr.bf16.mxu0 0
    %1777 = vmatmul.mubr.bf16.gmra.mxu0 %v1664
    %v1778 = vpop.f32.mrf.mxu0
    %v1779 = vadd.f32 %v143, %v1778
    %v1780 = vpop.f32.mrf.mxu0
    %v1781 = vpop.f32.mrf.mxu0
    %v1782 = vadd.f32 %v143, %v1781
    %v1783 = vpop.f32.mrf.mxu0
    %1784 = vmatprep.mubr.bf16.mxu0 0
    %1785 = vmatmul.mubr.bf16.gmra.mxu0 %v1665
    %v1786 = vpop.f32.mrf.mxu0
    %v1787 = vadd.f32 %v143, %v1786
    %v1788 = vpop.f32.mrf.mxu0
    %v1789 = vpop.f32.mrf.mxu0
    %v1790 = vadd.f32 %v143, %v1789
    %v1791 = vpop.f32.mrf.mxu0
    %1792 = vmatprep.mubr.bf16.mxu0 0
    %1793 = vmatmul.mubr.bf16.gmra.mxu0 %v1666
    %v1794 = vpop.f32.mrf.mxu0
    %v1795 = vadd.f32 %v143, %v1794
    %v1796 = vpop.f32.mrf.mxu0
    %v1797 = vpop.f32.mrf.mxu0
    %v1798 = vadd.f32 %v143, %v1797
    %v1799 = vpop.f32.mrf.mxu0
    %1800 = vmatprep.mubr.bf16.mxu0 0
    %1801 = vmatmul.mubr.bf16.gmra.mxu0 %v1667
    %v1802 = vpop.f32.mrf.mxu0
    %v1803 = vadd.f32 %v143, %v1802
    %v1804 = vpop.f32.mrf.mxu0
    %v1805 = vpop.f32.mrf.mxu0
    %v1806 = vadd.f32 %v143, %v1805
    %v1807 = vpop.f32.mrf.mxu0
    %1808 = vmatprep.mubr.bf16.mxu0 0
    %1809 = vmatmul.mubr.bf16.gmra.mxu0 %v1668
    %v1810 = vpop.f32.mrf.mxu0
    %v1811 = vadd.f32 %v143, %v1810
    %v1812 = vpop.f32.mrf.mxu0
    %v1813 = vpop.f32.mrf.mxu0
    %v1814 = vadd.f32 %v143, %v1813
    %v1815 = vpop.f32.mrf.mxu0
    %1816 = vmatprep.mubr.bf16.mxu0 0
    %1817 = vmatmul.mubr.bf16.gmra.mxu0 %v1669
    %v1818 = vpop.f32.mrf.mxu0
    %v1819 = vadd.f32 %v143, %v1818
    %v1820 = vpop.f32.mrf.mxu0
    %v1821 = vpop.f32.mrf.mxu0
    %v1822 = vadd.f32 %v143, %v1821
    %v1823 = vpop.f32.mrf.mxu0
    %1824 = vmatprep.mubr.bf16.mxu0 0
    %1825 = vmatmul.mubr.bf16.gmra.mxu0 %v1670
    %v1826 = vpop.f32.mrf.mxu0
    %v1827 = vadd.f32 %v143, %v1826
    %v1828 = vpop.f32.mrf.mxu0
    %v1829 = vpop.f32.mrf.mxu0
    %v1830 = vadd.f32 %v143, %v1829
    %v1831 = vpop.f32.mrf.mxu0
    %1832 = vmatprep.mubr.bf16.mxu0 0
    %1833 = vmatmul.mubr.bf16.gmra.mxu0 %v1671
    %v1834 = vpop.f32.mrf.mxu0
    %v1835 = vadd.f32 %v143, %v1834
    %v1836 = vpop.f32.mrf.mxu0
    %v1837 = vpop.f32.mrf.mxu0
    %v1838 = vadd.f32 %v143, %v1837
    %v1839 = vpop.f32.mrf.mxu0
    %1840 = vmatprep.mubr.bf16.mxu0 0
    %1841 = vmatmul.mubr.bf16.gmra.mxu0 %v1672
    %v1842 = vpop.f32.mrf.mxu0
    %v1843 = vadd.f32 %v143, %v1842
    %v1844 = vpop.f32.mrf.mxu0
    %v1845 = vpop.f32.mrf.mxu0
    %v1846 = vadd.f32 %v143, %v1845
    %v1847 = vpop.f32.mrf.mxu0
    %1848 = vmatprep.mubr.bf16.mxu0 0
    %1849 = vmatmul.mubr.bf16.gmra.mxu0 %v1673
    %v1850 = vpop.f32.mrf.mxu0
    %v1851 = vadd.f32 %v143, %v1850
    %v1852 = vpop.f32.mrf.mxu0
    %v1853 = vpop.f32.mrf.mxu0
    %v1854 = vadd.f32 %v143, %v1853
    %v1855 = vpop.f32.mrf.mxu0
    %1856 = vmatprep.mubr.bf16.mxu0 0
    %1857 = vmatmul.mubr.bf16.gmra.mxu0 %v1674
    %v1858 = vpop.f32.mrf.mxu0
    %v1859 = vadd.f32 %v143, %v1858
    %v1860 = vpop.f32.mrf.mxu0
    %v1861 = vpop.f32.mrf.mxu0
    %v1862 = vadd.f32 %v143, %v1861
    %v1863 = vpop.f32.mrf.mxu0
    %1864 = vmatprep.mubr.bf16.mxu0 0
    %1865 = vmatmul.mubr.bf16.gmra.mxu0 %v1675
    %v1866 = vpop.f32.mrf.mxu0
    %v1867 = vadd.f32 %v143, %v1866
    %v1868 = vpop.f32.mrf.mxu0
    %v1869 = vpop.f32.mrf.mxu0
    %v1870 = vadd.f32 %v143, %v1869
    %v1871 = vpop.f32.mrf.mxu0
    %1872 = vmatprep.mubr.bf16.mxu0 0
    %1873 = vmatmul.mubr.bf16.gmra.mxu0 %v1676
    %v1874 = vpop.f32.mrf.mxu0
    %v1875 = vadd.f32 %v143, %v1874
    %v1876 = vpop.f32.mrf.mxu0
    %v1877 = vpop.f32.mrf.mxu0
    %v1878 = vadd.f32 %v143, %v1877
    %v1879 = vpop.f32.mrf.mxu0
    %1880 = vmatprep.mubr.bf16.mxu0 0
    %1881 = vmatmul.mubr.bf16.gmra.mxu0 %v1677
    %v1882 = vpop.f32.mrf.mxu0
    %v1883 = vadd.f32 %v143, %v1882
    %v1884 = vpop.f32.mrf.mxu0
    %v1885 = vpop.f32.mrf.mxu0
    %v1886 = vadd.f32 %v143, %v1885
    %v1887 = vpop.f32.mrf.mxu0
    %1888 = vmatprep.mubr.bf16.mxu0 0
    %1889 = vmatmul.mubr.bf16.gmra.mxu0 %v1678
    %v1890 = vpop.f32.mrf.mxu0
    %v1891 = vadd.f32 %v143, %v1890
    %v1892 = vpop.f32.mrf.mxu0
    %v1893 = vpop.f32.mrf.mxu0
    %v1894 = vadd.f32 %v143, %v1893
    %v1895 = vpop.f32.mrf.mxu0
    %1896 = vmatprep.mubr.bf16.mxu0 0
    %1897 = vmatmul.mubr.bf16.gmra.mxu0 %v1679
    %v1898 = vpop.f32.mrf.mxu0
    %v1899 = vadd.f32 %v143, %v1898
    %v1900 = vpop.f32.mrf.mxu0
    %v1901 = vpop.f32.mrf.mxu0
    %v1902 = vadd.f32 %v143, %v1901
    %v1903 = vpop.f32.mrf.mxu0
    %1904 = vdwg.mxu0
    %v1905 = vmax.f32 %v1779, 0.0
    %v1906 = vmax.f32 %v1782, 0.0
    %v1907 = vmax.f32 %v1787, 0.0
    %v1908 = vmax.f32 %v1790, 0.0
    %v1909 = vmax.f32 %v1795, 0.0
    %v1910 = vmax.f32 %v1798, 0.0
    %v1911 = vmax.f32 %v1803, 0.0
    %v1912 = vmax.f32 %v1806, 0.0
    %v1913 = vmax.f32 %v1811, 0.0
    %v1914 = vmax.f32 %v1814, 0.0
    %v1915 = vmax.f32 %v1819, 0.0
    %v1916 = vmax.f32 %v1822, 0.0
    %v1917 = vmax.f32 %v1827, 0.0
    %v1918 = vmax.f32 %v1830, 0.0
    %v1919 = vmax.f32 %v1835, 0.0
    %v1920 = vmax.f32 %v1838, 0.0
    %v1921 = vmax.f32 %v1843, 0.0
    %v1922 = vmax.f32 %v1846, 0.0
    %v1923 = vmax.f32 %v1851, 0.0
    %v1924 = vmax.f32 %v1854, 0.0
    %v1925 = vmax.f32 %v1859, 0.0
    %v1926 = vmax.f32 %v1862, 0.0
    %v1927 = vmax.f32 %v1867, 0.0
    %v1928 = vmax.f32 %v1870, 0.0
    %v1929 = vmax.f32 %v1875, 0.0
    %v1930 = vmax.f32 %v1878, 0.0
    %v1931 = vmax.f32 %v1883, 0.0
    %v1932 = vmax.f32 %v1886, 0.0
    %v1933 = vmax.f32 %v1891, 0.0
    %v1934 = vmax.f32 %v1894, 0.0
    %v1935 = vmax.f32 %v1899, 0.0
    %v1936 = vmax.f32 %v1902, 0.0
    %v1937 = vpack.c.bf16 %v1906, %v1905
    %v1938 = vpack.c.bf16 %v1908, %v1907
    %v1939 = vpack.c.bf16 %v1910, %v1909
    %v1940 = vpack.c.bf16 %v1912, %v1911
    %v1941 = vpack.c.bf16 %v1914, %v1913
    %v1942 = vpack.c.bf16 %v1916, %v1915
    %v1943 = vpack.c.bf16 %v1918, %v1917
    %v1944 = vpack.c.bf16 %v1920, %v1919
    %v1945 = vpack.c.bf16 %v1922, %v1921
    %v1946 = vpack.c.bf16 %v1924, %v1923
    %v1947 = vpack.c.bf16 %v1926, %v1925
    %v1948 = vpack.c.bf16 %v1928, %v1927
    %v1949 = vpack.c.bf16 %v1930, %v1929
    %v1950 = vpack.c.bf16 %v1932, %v1931
    %v1951 = vpack.c.bf16 %v1934, %v1933
    %v1952 = vpack.c.bf16 %v1936, %v1935
    %v1953 = vld [vmem:[#allocation13] sm:$0xf]
    %v1954 = vld [vmem:[#allocation13 + $0x4] sm:$0xf]
    %v1955 = vld [vmem:[#allocation13 + $0x8] sm:$0xf]
    %v1956 = vld [vmem:[#allocation13 + $0xc] sm:$0xf]
    %v1957 = vld [vmem:[#allocation13 + $0x10] sm:$0xf]
    %v1958 = vld [vmem:[#allocation13 + $0x14] sm:$0xf]
    %v1959 = vld [vmem:[#allocation13 + $0x18] sm:$0xf]
    %v1960 = vld [vmem:[#allocation13 + $0x1c] sm:$0xf]
    %v1961 = vld [vmem:[#allocation13 + $0x20] sm:$0xf]
    %v1962 = vld [vmem:[#allocation13 + $0x24] sm:$0xf]
    %v1963 = vld [vmem:[#allocation13 + $0x28] sm:$0xf]
    %v1964 = vld [vmem:[#allocation13 + $0x2c] sm:$0xf]
    %v1965 = vld [vmem:[#allocation13 + $0x30] sm:$0xf]
    %v1966 = vld [vmem:[#allocation13 + $0x34] sm:$0xf]
    %v1967 = vld [vmem:[#allocation13 + $0x38] sm:$0xf]
    %v1968 = vld [vmem:[#allocation13 + $0x3c] sm:$0xf]
    %v1985 = vunpack.c.l.b16 %v1953
    %v1986 = vunpack.c.l.b16 %v1954
    %v1987 = vunpack.c.l.b16 %v1955
    %v1988 = vunpack.c.l.b16 %v1956
    %v1989 = vunpack.c.l.b16 %v1957
    %v1990 = vunpack.c.l.b16 %v1958
    %v1991 = vunpack.c.l.b16 %v1959
    %v1992 = vunpack.c.l.b16 %v1960
    %v1993 = vunpack.c.l.b16 %v1961
    %v1994 = vunpack.c.l.b16 %v1962
    %v1995 = vunpack.c.l.b16 %v1963
    %v1996 = vunpack.c.l.b16 %v1964
    %v1997 = vunpack.c.l.b16 %v1965
    %v1998 = vunpack.c.l.b16 %v1966
    %v1999 = vunpack.c.l.b16 %v1967
    %v2000 = vunpack.c.l.b16 %v1968
    %v2001 = vpack.c.b16 %v1986, %v1985
    %v2002 = vpack.c.b16 %v1988, %v1987
    %v2003 = vpack.c.b16 %v1990, %v1989
    %v2004 = vpack.c.b16 %v1992, %v1991
    %v2005 = vpack.c.b16 %v1994, %v1993
    %v2006 = vpack.c.b16 %v1996, %v1995
    %v2007 = vpack.c.b16 %v1998, %v1997
    %v2008 = vpack.c.b16 %v2000, %v1999
    %2017 = vmatprep.subr.bf16.mxu0 0
    %2018 = vmatpush1.bf16.msra.mxu0 %v2008
    %2019 = vmatprep.subr.bf16.mxu0 0
    %2020 = vmatpush1.bf16.msra.mxu0 %v2007
    %2021 = vmatprep.subr.bf16.mxu0 0
    %2022 = vmatpush1.bf16.msra.mxu0 %v2006
    %2023 = vmatprep.subr.bf16.mxu0 0
    %2024 = vmatpush1.bf16.msra.mxu0 %v2005
    %2025 = vmatprep.subr.bf16.mxu0 0
    %2026 = vmatpush1.bf16.msra.mxu0 %v2004
    %2027 = vmatprep.subr.bf16.mxu0 0
    %2028 = vmatpush1.bf16.msra.mxu0 %v2003
    %2029 = vmatprep.subr.bf16.mxu0 0
    %2030 = vmatpush1.bf16.msra.mxu0 %v2002
    %2031 = vmatprep.subr.bf16.mxu0 0
    %2032 = vmatpush1.bf16.msra.mxu0 %v2001
    %2033 = vmatprep.subr.bf16.mxu0 0
    %2034 = vmatpush2.bf16.msra.mxu0 0
    %2035 = vmatprep.subr.bf16.mxu0 0
    %2036 = vmatpush2.bf16.msra.mxu0 0
    %2037 = vmatprep.subr.bf16.mxu0 0
    %2038 = vmatpush2.bf16.msra.mxu0 0
    %2039 = vmatprep.subr.bf16.mxu0 0
    %2040 = vmatpush2.bf16.msra.mxu0 0
    %2041 = vmatprep.subr.bf16.mxu0 0
    %2042 = vmatpush2.bf16.msra.mxu0 0
    %2043 = vmatprep.subr.bf16.mxu0 0
    %2044 = vmatpush2.bf16.msra.mxu0 0
    %2045 = vmatprep.subr.bf16.mxu0 0
    %2046 = vmatpush2.bf16.msra.mxu0 0
    %2047 = vmatprep.subr.bf16.mxu0 0
    %2048 = vmatpush2.bf16.msra.mxu0 0
    %2049 = vmatprep.mubr.bf16.mxu0 0
    %2050 = vmatmul.mubr.bf16.gmra.mxu0 %v1937
    %v2051 = vpop.f32.mrf.mxu0
    %v2052 = vadd.f32 %v144, %v2051
    %v2053 = vpop.f32.mrf.mxu0
    %v2054 = vpop.f32.mrf.mxu0
    %v2055 = vadd.f32 %v144, %v2054
    %v2056 = vpop.f32.mrf.mxu0
    %2057 = vmatprep.mubr.bf16.mxu0 0
    %2058 = vmatmul.mubr.bf16.gmra.mxu0 %v1938
    %v2059 = vpop.f32.mrf.mxu0
    %v2060 = vadd.f32 %v144, %v2059
    %v2061 = vpop.f32.mrf.mxu0
    %v2062 = vpop.f32.mrf.mxu0
    %v2063 = vadd.f32 %v144, %v2062
    %v2064 = vpop.f32.mrf.mxu0
    %2065 = vmatprep.mubr.bf16.mxu0 0
    %2066 = vmatmul.mubr.bf16.gmra.mxu0 %v1939
    %v2067 = vpop.f32.mrf.mxu0
    %v2068 = vadd.f32 %v144, %v2067
    %v2069 = vpop.f32.mrf.mxu0
    %v2070 = vpop.f32.mrf.mxu0
    %v2071 = vadd.f32 %v144, %v2070
    %v2072 = vpop.f32.mrf.mxu0
    %2073 = vmatprep.mubr.bf16.mxu0 0
    %2074 = vmatmul.mubr.bf16.gmra.mxu0 %v1940
    %v2075 = vpop.f32.mrf.mxu0
    %v2076 = vadd.f32 %v144, %v2075
    %v2077 = vpop.f32.mrf.mxu0
    %v2078 = vpop.f32.mrf.mxu0
    %v2079 = vadd.f32 %v144, %v2078
    %v2080 = vpop.f32.mrf.mxu0
    %2081 = vmatprep.mubr.bf16.mxu0 0
    %2082 = vmatmul.mubr.bf16.gmra.mxu0 %v1941
    %v2083 = vpop.f32.mrf.mxu0
    %v2084 = vadd.f32 %v144, %v2083
    %v2085 = vpop.f32.mrf.mxu0
    %v2086 = vpop.f32.mrf.mxu0
    %v2087 = vadd.f32 %v144, %v2086
    %v2088 = vpop.f32.mrf.mxu0
    %2089 = vmatprep.mubr.bf16.mxu0 0
    %2090 = vmatmul.mubr.bf16.gmra.mxu0 %v1942
    %v2091 = vpop.f32.mrf.mxu0
    %v2092 = vadd.f32 %v144, %v2091
    %v2093 = vpop.f32.mrf.mxu0
    %v2094 = vpop.f32.mrf.mxu0
    %v2095 = vadd.f32 %v144, %v2094
    %v2096 = vpop.f32.mrf.mxu0
    %2097 = vmatprep.mubr.bf16.mxu0 0
    %2098 = vmatmul.mubr.bf16.gmra.mxu0 %v1943
    %v2099 = vpop.f32.mrf.mxu0
    %v2100 = vadd.f32 %v144, %v2099
    %v2101 = vpop.f32.mrf.mxu0
    %v2102 = vpop.f32.mrf.mxu0
    %v2103 = vadd.f32 %v144, %v2102
    %v2104 = vpop.f32.mrf.mxu0
    %2105 = vmatprep.mubr.bf16.mxu0 0
    %2106 = vmatmul.mubr.bf16.gmra.mxu0 %v1944
    %v2107 = vpop.f32.mrf.mxu0
    %v2108 = vadd.f32 %v144, %v2107
    %v2109 = vpop.f32.mrf.mxu0
    %v2110 = vpop.f32.mrf.mxu0
    %v2111 = vadd.f32 %v144, %v2110
    %v2112 = vpop.f32.mrf.mxu0
    %2113 = vmatprep.mubr.bf16.mxu0 0
    %2114 = vmatmul.mubr.bf16.gmra.mxu0 %v1945
    %v2115 = vpop.f32.mrf.mxu0
    %v2116 = vadd.f32 %v144, %v2115
    %v2117 = vpop.f32.mrf.mxu0
    %v2118 = vpop.f32.mrf.mxu0
    %v2119 = vadd.f32 %v144, %v2118
    %v2120 = vpop.f32.mrf.mxu0
    %2121 = vmatprep.mubr.bf16.mxu0 0
    %2122 = vmatmul.mubr.bf16.gmra.mxu0 %v1946
    %v2123 = vpop.f32.mrf.mxu0
    %v2124 = vadd.f32 %v144, %v2123
    %v2125 = vpop.f32.mrf.mxu0
    %v2126 = vpop.f32.mrf.mxu0
    %v2127 = vadd.f32 %v144, %v2126
    %v2128 = vpop.f32.mrf.mxu0
    %2129 = vmatprep.mubr.bf16.mxu0 0
    %2130 = vmatmul.mubr.bf16.gmra.mxu0 %v1947
    %v2131 = vpop.f32.mrf.mxu0
    %v2132 = vadd.f32 %v144, %v2131
    %v2133 = vpop.f32.mrf.mxu0
    %v2134 = vpop.f32.mrf.mxu0
    %v2135 = vadd.f32 %v144, %v2134
    %v2136 = vpop.f32.mrf.mxu0
    %2137 = vmatprep.mubr.bf16.mxu0 0
    %2138 = vmatmul.mubr.bf16.gmra.mxu0 %v1948
    %v2139 = vpop.f32.mrf.mxu0
    %v2140 = vadd.f32 %v144, %v2139
    %v2141 = vpop.f32.mrf.mxu0
    %v2142 = vpop.f32.mrf.mxu0
    %v2143 = vadd.f32 %v144, %v2142
    %v2144 = vpop.f32.mrf.mxu0
    %2145 = vmatprep.mubr.bf16.mxu0 0
    %2146 = vmatmul.mubr.bf16.gmra.mxu0 %v1949
    %v2147 = vpop.f32.mrf.mxu0
    %v2148 = vadd.f32 %v144, %v2147
    %v2149 = vpop.f32.mrf.mxu0
    %v2150 = vpop.f32.mrf.mxu0
    %v2151 = vadd.f32 %v144, %v2150
    %v2152 = vpop.f32.mrf.mxu0
    %2153 = vmatprep.mubr.bf16.mxu0 0
    %2154 = vmatmul.mubr.bf16.gmra.mxu0 %v1950
    %v2155 = vpop.f32.mrf.mxu0
    %v2156 = vadd.f32 %v144, %v2155
    %v2157 = vpop.f32.mrf.mxu0
    %v2158 = vpop.f32.mrf.mxu0
    %v2159 = vadd.f32 %v144, %v2158
    %v2160 = vpop.f32.mrf.mxu0
    %2161 = vmatprep.mubr.bf16.mxu0 0
    %2162 = vmatmul.mubr.bf16.gmra.mxu0 %v1951
    %v2163 = vpop.f32.mrf.mxu0
    %v2164 = vadd.f32 %v144, %v2163
    %v2165 = vpop.f32.mrf.mxu0
    %v2166 = vpop.f32.mrf.mxu0
    %v2167 = vadd.f32 %v144, %v2166
    %v2168 = vpop.f32.mrf.mxu0
    %2169 = vmatprep.mubr.bf16.mxu0 0
    %2170 = vmatmul.mubr.bf16.gmra.mxu0 %v1952
    %v2171 = vpop.f32.mrf.mxu0
    %v2172 = vadd.f32 %v144, %v2171
    %v2173 = vpop.f32.mrf.mxu0
    %v2174 = vpop.f32.mrf.mxu0
    %v2175 = vadd.f32 %v144, %v2174
    %v2176 = vpop.f32.mrf.mxu0
    %2177 = vdwg.mxu0
    %v2178 = vmax.f32 %v2052, 0.0
    %v2179 = vmax.f32 %v2055, 0.0
    %v2180 = vmax.f32 %v2060, 0.0
    %v2181 = vmax.f32 %v2063, 0.0
    %v2182 = vmax.f32 %v2068, 0.0
    %v2183 = vmax.f32 %v2071, 0.0
    %v2184 = vmax.f32 %v2076, 0.0
    %v2185 = vmax.f32 %v2079, 0.0
    %v2186 = vmax.f32 %v2084, 0.0
    %v2187 = vmax.f32 %v2087, 0.0
    %v2188 = vmax.f32 %v2092, 0.0
    %v2189 = vmax.f32 %v2095, 0.0
    %v2190 = vmax.f32 %v2100, 0.0
    %v2191 = vmax.f32 %v2103, 0.0
    %v2192 = vmax.f32 %v2108, 0.0
    %v2193 = vmax.f32 %v2111, 0.0
    %v2194 = vmax.f32 %v2116, 0.0
    %v2195 = vmax.f32 %v2119, 0.0
    %v2196 = vmax.f32 %v2124, 0.0
    %v2197 = vmax.f32 %v2127, 0.0
    %v2198 = vmax.f32 %v2132, 0.0
    %v2199 = vmax.f32 %v2135, 0.0
    %v2200 = vmax.f32 %v2140, 0.0
    %v2201 = vmax.f32 %v2143, 0.0
    %v2202 = vmax.f32 %v2148, 0.0
    %v2203 = vmax.f32 %v2151, 0.0
    %v2204 = vmax.f32 %v2156, 0.0
    %v2205 = vmax.f32 %v2159, 0.0
    %v2206 = vmax.f32 %v2164, 0.0
    %v2207 = vmax.f32 %v2167, 0.0
    %v2208 = vmax.f32 %v2172, 0.0
    %v2209 = vmax.f32 %v2175, 0.0
    %v2210 = vpack.c.bf16 %v2179, %v2178
    %v2211 = vpack.c.bf16 %v2181, %v2180
    %v2212 = vpack.c.bf16 %v2183, %v2182
    %v2213 = vpack.c.bf16 %v2185, %v2184
    %v2214 = vpack.c.bf16 %v2187, %v2186
    %v2215 = vpack.c.bf16 %v2189, %v2188
    %v2216 = vpack.c.bf16 %v2191, %v2190
    %v2217 = vpack.c.bf16 %v2193, %v2192
    %v2218 = vpack.c.bf16 %v2195, %v2194
    %v2219 = vpack.c.bf16 %v2197, %v2196
    %v2220 = vpack.c.bf16 %v2199, %v2198
    %v2221 = vpack.c.bf16 %v2201, %v2200
    %v2222 = vpack.c.bf16 %v2203, %v2202
    %v2223 = vpack.c.bf16 %v2205, %v2204
    %v2224 = vpack.c.bf16 %v2207, %v2206
    %v2225 = vpack.c.bf16 %v2209, %v2208
    %v2226 = vld [vmem:[#allocation14] sm:$0xf]
    %v2227 = vld [vmem:[#allocation14 + $0x4] sm:$0xf]
    %v2228 = vld [vmem:[#allocation14 + $0x8] sm:$0xf]
    %v2229 = vld [vmem:[#allocation14 + $0xc] sm:$0xf]
    %v2230 = vld [vmem:[#allocation14 + $0x10] sm:$0xf]
    %v2231 = vld [vmem:[#allocation14 + $0x14] sm:$0xf]
    %v2232 = vld [vmem:[#allocation14 + $0x18] sm:$0xf]
    %v2233 = vld [vmem:[#allocation14 + $0x1c] sm:$0xf]
    %v2234 = vld [vmem:[#allocation14 + $0x20] sm:$0xf]
    %v2235 = vld [vmem:[#allocation14 + $0x24] sm:$0xf]
    %v2236 = vld [vmem:[#allocation14 + $0x28] sm:$0xf]
    %v2237 = vld [vmem:[#allocation14 + $0x2c] sm:$0xf]
    %v2238 = vld [vmem:[#allocation14 + $0x30] sm:$0xf]
    %v2239 = vld [vmem:[#allocation14 + $0x34] sm:$0xf]
    %v2240 = vld [vmem:[#allocation14 + $0x38] sm:$0xf]
    %v2241 = vld [vmem:[#allocation14 + $0x3c] sm:$0xf]
    %v2258 = vunpack.c.l.b16 %v2226
    %v2259 = vunpack.c.l.b16 %v2227
    %v2260 = vunpack.c.l.b16 %v2228
    %v2261 = vunpack.c.l.b16 %v2229
    %v2262 = vunpack.c.l.b16 %v2230
    %v2263 = vunpack.c.l.b16 %v2231
    %v2264 = vunpack.c.l.b16 %v2232
    %v2265 = vunpack.c.l.b16 %v2233
    %v2266 = vunpack.c.l.b16 %v2234
    %v2267 = vunpack.c.l.b16 %v2235
    %v2268 = vunpack.c.l.b16 %v2236
    %v2269 = vunpack.c.l.b16 %v2237
    %v2270 = vunpack.c.l.b16 %v2238
    %v2271 = vunpack.c.l.b16 %v2239
    %v2272 = vunpack.c.l.b16 %v2240
    %v2273 = vunpack.c.l.b16 %v2241
    %v2274 = vpack.c.b16 %v2259, %v2258
    %v2275 = vpack.c.b16 %v2261, %v2260
    %v2276 = vpack.c.b16 %v2263, %v2262
    %v2277 = vpack.c.b16 %v2265, %v2264
    %v2278 = vpack.c.b16 %v2267, %v2266
    %v2279 = vpack.c.b16 %v2269, %v2268
    %v2280 = vpack.c.b16 %v2271, %v2270
    %v2281 = vpack.c.b16 %v2273, %v2272
    %2290 = vmatprep.subr.bf16.mxu0 0
    %2291 = vmatpush1.bf16.msra.mxu0 %v2281
    %2292 = vmatprep.subr.bf16.mxu0 0
    %2293 = vmatpush1.bf16.msra.mxu0 %v2280
    %2294 = vmatprep.subr.bf16.mxu0 0
    %2295 = vmatpush1.bf16.msra.mxu0 %v2279
    %2296 = vmatprep.subr.bf16.mxu0 0
    %2297 = vmatpush1.bf16.msra.mxu0 %v2278
    %2298 = vmatprep.subr.bf16.mxu0 0
    %2299 = vmatpush1.bf16.msra.mxu0 %v2277
    %2300 = vmatprep.subr.bf16.mxu0 0
    %2301 = vmatpush1.bf16.msra.mxu0 %v2276
    %2302 = vmatprep.subr.bf16.mxu0 0
    %2303 = vmatpush1.bf16.msra.mxu0 %v2275
    %2304 = vmatprep.subr.bf16.mxu0 0
    %2305 = vmatpush1.bf16.msra.mxu0 %v2274
    %2306 = vmatprep.subr.bf16.mxu0 0
    %2307 = vmatpush2.bf16.msra.mxu0 0
    %2308 = vmatprep.subr.bf16.mxu0 0
    %2309 = vmatpush2.bf16.msra.mxu0 0
    %2310 = vmatprep.subr.bf16.mxu0 0
    %2311 = vmatpush2.bf16.msra.mxu0 0
    %2312 = vmatprep.subr.bf16.mxu0 0
    %2313 = vmatpush2.bf16.msra.mxu0 0
    %2314 = vmatprep.subr.bf16.mxu0 0
    %2315 = vmatpush2.bf16.msra.mxu0 0
    %2316 = vmatprep.subr.bf16.mxu0 0
    %2317 = vmatpush2.bf16.msra.mxu0 0
    %2318 = vmatprep.subr.bf16.mxu0 0
    %2319 = vmatpush2.bf16.msra.mxu0 0
    %2320 = vmatprep.subr.bf16.mxu0 0
    %2321 = vmatpush2.bf16.msra.mxu0 0
    %2322 = vmatprep.mubr.bf16.mxu0 0
    %2323 = vmatmul.mubr.bf16.gmra.mxu0 %v2210
    %v2324 = vpop.f32.mrf.mxu0
    %v2325 = vadd.f32 %v145, %v2324
    %v2326 = vpop.f32.mrf.mxu0
    %v2327 = vpop.f32.mrf.mxu0
    %v2328 = vadd.f32 %v145, %v2327
    %v2329 = vpop.f32.mrf.mxu0
    %2330 = vmatprep.mubr.bf16.mxu0 0
    %2331 = vmatmul.mubr.bf16.gmra.mxu0 %v2211
    %v2332 = vpop.f32.mrf.mxu0
    %v2333 = vadd.f32 %v145, %v2332
    %v2334 = vpop.f32.mrf.mxu0
    %v2335 = vpop.f32.mrf.mxu0
    %v2336 = vadd.f32 %v145, %v2335
    %v2337 = vpop.f32.mrf.mxu0
    %2338 = vmatprep.mubr.bf16.mxu0 0
    %2339 = vmatmul.mubr.bf16.gmra.mxu0 %v2212
    %v2340 = vpop.f32.mrf.mxu0
    %v2341 = vadd.f32 %v145, %v2340
    %v2342 = vpop.f32.mrf.mxu0
    %v2343 = vpop.f32.mrf.mxu0
    %v2344 = vadd.f32 %v145, %v2343
    %v2345 = vpop.f32.mrf.mxu0
    %2346 = vmatprep.mubr.bf16.mxu0 0
    %2347 = vmatmul.mubr.bf16.gmra.mxu0 %v2213
    %v2348 = vpop.f32.mrf.mxu0
    %v2349 = vadd.f32 %v145, %v2348
    %v2350 = vpop.f32.mrf.mxu0
    %v2351 = vpop.f32.mrf.mxu0
    %v2352 = vadd.f32 %v145, %v2351
    %v2353 = vpop.f32.mrf.mxu0
    %2354 = vmatprep.mubr.bf16.mxu0 0
    %2355 = vmatmul.mubr.bf16.gmra.mxu0 %v2214
    %v2356 = vpop.f32.mrf.mxu0
    %v2357 = vadd.f32 %v145, %v2356
    %v2358 = vpop.f32.mrf.mxu0
    %v2359 = vpop.f32.mrf.mxu0
    %v2360 = vadd.f32 %v145, %v2359
    %v2361 = vpop.f32.mrf.mxu0
    %2362 = vmatprep.mubr.bf16.mxu0 0
    %2363 = vmatmul.mubr.bf16.gmra.mxu0 %v2215
    %v2364 = vpop.f32.mrf.mxu0
    %v2365 = vadd.f32 %v145, %v2364
    %v2366 = vpop.f32.mrf.mxu0
    %v2367 = vpop.f32.mrf.mxu0
    %v2368 = vadd.f32 %v145, %v2367
    %v2369 = vpop.f32.mrf.mxu0
    %2370 = vmatprep.mubr.bf16.mxu0 0
    %2371 = vmatmul.mubr.bf16.gmra.mxu0 %v2216
    %v2372 = vpop.f32.mrf.mxu0
    %v2373 = vadd.f32 %v145, %v2372
    %v2374 = vpop.f32.mrf.mxu0
    %v2375 = vpop.f32.mrf.mxu0
    %v2376 = vadd.f32 %v145, %v2375
    %v2377 = vpop.f32.mrf.mxu0
    %2378 = vmatprep.mubr.bf16.mxu0 0
    %2379 = vmatmul.mubr.bf16.gmra.mxu0 %v2217
    %v2380 = vpop.f32.mrf.mxu0
    %v2381 = vadd.f32 %v145, %v2380
    %v2382 = vpop.f32.mrf.mxu0
    %v2383 = vpop.f32.mrf.mxu0
    %v2384 = vadd.f32 %v145, %v2383
    %v2385 = vpop.f32.mrf.mxu0
    %2386 = vmatprep.mubr.bf16.mxu0 0
    %2387 = vmatmul.mubr.bf16.gmra.mxu0 %v2218
    %v2388 = vpop.f32.mrf.mxu0
    %v2389 = vadd.f32 %v145, %v2388
    %v2390 = vpop.f32.mrf.mxu0
    %v2391 = vpop.f32.mrf.mxu0
    %v2392 = vadd.f32 %v145, %v2391
    %v2393 = vpop.f32.mrf.mxu0
    %2394 = vmatprep.mubr.bf16.mxu0 0
    %2395 = vmatmul.mubr.bf16.gmra.mxu0 %v2219
    %v2396 = vpop.f32.mrf.mxu0
    %v2397 = vadd.f32 %v145, %v2396
    %v2398 = vpop.f32.mrf.mxu0
    %v2399 = vpop.f32.mrf.mxu0
    %v2400 = vadd.f32 %v145, %v2399
    %v2401 = vpop.f32.mrf.mxu0
    %2402 = vmatprep.mubr.bf16.mxu0 0
    %2403 = vmatmul.mubr.bf16.gmra.mxu0 %v2220
    %v2404 = vpop.f32.mrf.mxu0
    %v2405 = vadd.f32 %v145, %v2404
    %v2406 = vpop.f32.mrf.mxu0
    %v2407 = vpop.f32.mrf.mxu0
    %v2408 = vadd.f32 %v145, %v2407
    %v2409 = vpop.f32.mrf.mxu0
    %2410 = vmatprep.mubr.bf16.mxu0 0
    %2411 = vmatmul.mubr.bf16.gmra.mxu0 %v2221
    %v2412 = vpop.f32.mrf.mxu0
    %v2413 = vadd.f32 %v145, %v2412
    %v2414 = vpop.f32.mrf.mxu0
    %v2415 = vpop.f32.mrf.mxu0
    %v2416 = vadd.f32 %v145, %v2415
    %v2417 = vpop.f32.mrf.mxu0
    %2418 = vmatprep.mubr.bf16.mxu0 0
    %2419 = vmatmul.mubr.bf16.gmra.mxu0 %v2222
    %v2420 = vpop.f32.mrf.mxu0
    %v2421 = vadd.f32 %v145, %v2420
    %v2422 = vpop.f32.mrf.mxu0
    %v2423 = vpop.f32.mrf.mxu0
    %v2424 = vadd.f32 %v145, %v2423
    %v2425 = vpop.f32.mrf.mxu0
    %2426 = vmatprep.mubr.bf16.mxu0 0
    %2427 = vmatmul.mubr.bf16.gmra.mxu0 %v2223
    %v2428 = vpop.f32.mrf.mxu0
    %v2429 = vadd.f32 %v145, %v2428
    %v2430 = vpop.f32.mrf.mxu0
    %v2431 = vpop.f32.mrf.mxu0
    %v2432 = vadd.f32 %v145, %v2431
    %v2433 = vpop.f32.mrf.mxu0
    %2434 = vmatprep.mubr.bf16.mxu0 0
    %2435 = vmatmul.mubr.bf16.gmra.mxu0 %v2224
    %v2436 = vpop.f32.mrf.mxu0
    %v2437 = vadd.f32 %v145, %v2436
    %v2438 = vpop.f32.mrf.mxu0
    %v2439 = vpop.f32.mrf.mxu0
    %v2440 = vadd.f32 %v145, %v2439
    %v2441 = vpop.f32.mrf.mxu0
    %2442 = vmatprep.mubr.bf16.mxu0 0
    %2443 = vmatmul.mubr.bf16.gmra.mxu0 %v2225
    %v2444 = vpop.f32.mrf.mxu0
    %v2445 = vadd.f32 %v145, %v2444
    %v2446 = vpop.f32.mrf.mxu0
    %v2447 = vpop.f32.mrf.mxu0
    %v2448 = vadd.f32 %v145, %v2447
    %v2449 = vpop.f32.mrf.mxu0
    %2450 = vdwg.mxu0
    %v2451 = vmax.f32 %v2325, 0.0
    %v2452 = vmax.f32 %v2328, 0.0
    %v2453 = vmax.f32 %v2333, 0.0
    %v2454 = vmax.f32 %v2336, 0.0
    %v2455 = vmax.f32 %v2341, 0.0
    %v2456 = vmax.f32 %v2344, 0.0
    %v2457 = vmax.f32 %v2349, 0.0
    %v2458 = vmax.f32 %v2352, 0.0
    %v2459 = vmax.f32 %v2357, 0.0
    %v2460 = vmax.f32 %v2360, 0.0
    %v2461 = vmax.f32 %v2365, 0.0
    %v2462 = vmax.f32 %v2368, 0.0
    %v2463 = vmax.f32 %v2373, 0.0
    %v2464 = vmax.f32 %v2376, 0.0
    %v2465 = vmax.f32 %v2381, 0.0
    %v2466 = vmax.f32 %v2384, 0.0
    %v2467 = vmax.f32 %v2389, 0.0
    %v2468 = vmax.f32 %v2392, 0.0
    %v2469 = vmax.f32 %v2397, 0.0
    %v2470 = vmax.f32 %v2400, 0.0
    %v2471 = vmax.f32 %v2405, 0.0
    %v2472 = vmax.f32 %v2408, 0.0
    %v2473 = vmax.f32 %v2413, 0.0
    %v2474 = vmax.f32 %v2416, 0.0
    %v2475 = vmax.f32 %v2421, 0.0
    %v2476 = vmax.f32 %v2424, 0.0
    %v2477 = vmax.f32 %v2429, 0.0
    %v2478 = vmax.f32 %v2432, 0.0
    %v2479 = vmax.f32 %v2437, 0.0
    %v2480 = vmax.f32 %v2440, 0.0
    %v2481 = vmax.f32 %v2445, 0.0
    %v2482 = vmax.f32 %v2448, 0.0
    %2483 = vst [vmem:[#allocation16] sm:$0xff] %v2451
    %2484 = vst [vmem:[#allocation16 + $0x8] sm:$0xff] %v2452
    %2485 = vst [vmem:[#allocation16 + $0x10] sm:$0xff] %v2453
    %2486 = vst [vmem:[#allocation16 + $0x18] sm:$0xff] %v2454
    %2487 = vst [vmem:[#allocation16 + $0x20] sm:$0xff] %v2455
    %2488 = vst [vmem:[#allocation16 + $0x28] sm:$0xff] %v2456
    %2489 = vst [vmem:[#allocation16 + $0x30] sm:$0xff] %v2457
    %2490 = vst [vmem:[#allocation16 + $0x38] sm:$0xff] %v2458
    %2491 = vst [vmem:[#allocation16 + $0x40] sm:$0xff] %v2459
    %2492 = vst [vmem:[#allocation16 + $0x48] sm:$0xff] %v2460
    %2493 = vst [vmem:[#allocation16 + $0x50] sm:$0xff] %v2461
    %2494 = vst [vmem:[#allocation16 + $0x58] sm:$0xff] %v2462
    %2495 = vst [vmem:[#allocation16 + $0x60] sm:$0xff] %v2463
    %2496 = vst [vmem:[#allocation16 + $0x68] sm:$0xff] %v2464
    %2497 = vst [vmem:[#allocation16 + $0x70] sm:$0xff] %v2465
    %2498 = vst [vmem:[#allocation16 + $0x78] sm:$0xff] %v2466
    %2499 = vst [vmem:[#allocation16 + $0x80] sm:$0xff] %v2467
    %2500 = vst [vmem:[#allocation16 + $0x88] sm:$0xff] %v2468
    %2501 = vst [vmem:[#allocation16 + $0x90] sm:$0xff] %v2469
    %2502 = vst [vmem:[#allocation16 + $0x98] sm:$0xff] %v2470
    %2503 = vst [vmem:[#allocation16 + $0xa0] sm:$0xff] %v2471
    %2504 = vst [vmem:[#allocation16 + $0xa8] sm:$0xff] %v2472
    %2505 = vst [vmem:[#allocation16 + $0xb0] sm:$0xff] %v2473
    %2506 = vst [vmem:[#allocation16 + $0xb8] sm:$0xff] %v2474
    %2507 = vst [vmem:[#allocation16 + $0xc0] sm:$0xff] %v2475
    %2508 = vst [vmem:[#allocation16 + $0xc8] sm:$0xff] %v2476
    %2509 = vst [vmem:[#allocation16 + $0xd0] sm:$0xff] %v2477
    %2510 = vst [vmem:[#allocation16 + $0xd8] sm:$0xff] %v2478
    %2511 = vst [vmem:[#allocation16 + $0xe0] sm:$0xff] %v2479
    %2512 = vst [vmem:[#allocation16 + $0xe8] sm:$0xff] %v2480
    %2513 = vst [vmem:[#allocation16 + $0xf0] sm:$0xff] %v2481
    %2514 = vst [vmem:[#allocation16 + $0xf8] sm:$0xff] %v2482
    // Predicated region
    $region66: #{tpu_custom_call.1} parent=1 // pred_check
      _
    $region67: #{tpu_custom_call.1} parent=1 // pred_check_branch
      %2516 = sbr.rel (0) target = $region69
    $region68: #{tpu_custom_call.1} parent=1 // pred_region
      %s2518 = ssub.s32 4096, 4096
      %2519 = vsyncadd [#allocation4], %s2518
      %s2520 = sshll.u32 [#allocation16], 4
      %s2521 = int_to_ptr.vmem [resolvable:$true] %s2520
      %2526 = dma.vmem_to_hbm [thread:$0]  %s2521, 4096, %s8, [#allocation4], 128, 128, 8
    $region69: #{tpu_custom_call.1} parent=1 // pred_fallthru
      _
    // Predicated region
    $region70: #{tpu_custom_call.1} parent=1 // pred_check
      _
    $region71: #{tpu_custom_call.1} parent=1 // pred_check_branch
      %2528 = sbr.rel (0) target = $region73
    $region72: #{tpu_custom_call.1} parent=1 // pred_region
      %2529 = dma.done [#allocation4], 4096
    $region73: #{tpu_custom_call.1} parent=1 // pred_fallthru
      _
    %2530 = vsyncpa [#allocation3], 1
    %2531 = vsyncpa [#allocation6], 1
    %2532 = vsyncpa [#allocation9], 1
    %2533 = vsyncpa [#allocation12], 1
    %2534 = vsyncpa [#allocation15], 1
    %2535 = vsyncpa [#allocation4], 1

// kernel: tpu_custom_call.1
$region0: #{tpu_custom_call.1}
  #allocation0 [shape = 'u32[]', space=smem, size = 0x4, offset = 0x4, fixed_abs, tag = 'smem constant byte address 0x4 - core index']
  #allocation1 [shape = 'u32[144,128]{1,0:T(1,128)}', space=vmem, size = 0x12000, scoped, tag = 'internal scratch']
  %s0 = inlined_call_operand.hbm [shape: f32[256,128], index: 0, kind: input, shape index: {}]
  %s1 = inlined_call_operand.hbm [shape: f32[256,128], index: 1, kind: input, shape index: {}]
  %s2 = inlined_call_operand.hbm [shape: f32[8,256], index: 2, kind: input, shape index: {}]
  %s3 = inlined_call_operand.hbm [shape: bf16[128,256], index: 3, kind: input, shape index: {}]
  %s4 = inlined_call_operand.hbm [shape: bf16[128,128], index: 4, kind: input, shape index: {}]
  %s5 = inlined_call_operand.hbm [shape: bf16[128,128], index: 5, kind: input, shape index: {}]
  %s6 = inlined_call_operand.hbm [shape: bf16[128,128], index: 6, kind: input, shape index: {}]
  %s7 = inlined_call_operand.hbm [shape: bf16[128,128], index: 7, kind: input, shape index: {}]
  %s8 = inlined_call_operand.hbm [shape: f32[256,128], index: 8, kind: output, shape index: {}]
  %s9 = sld [smem:[#allocation0]]
  $region74: #{tpu_custom_call.1} parent=0
    _
  %s11 = ssub.s32 1, %s9
  %s12 = scalar_select 0, %s11, %s9
  $region1: #{tpu_custom_call.1} parent=0
    #allocation2 [shape = 'u8[131072]{0}', space=vmem, size = 0x20000, scoped, tag = 'input window, operand 0, single buffered']
    #allocation3 [shape = 's32[1]{0}', space=sflag, size = 0x4, scoped, tag = 'scoped memory for tpu_custom_call.1']
    #allocation4 [shape = 's32[1]{0}', space=sflag, size = 0x4, scoped, tag = 'scoped memory for tpu_custom_call.1']
    #allocation5 [shape = 'u8[131072]{0}', space=vmem, size = 0x20000, scoped, tag = 'input window, operand 1, single buffered']
    #allocation6 [shape = 's32[1]{0}', space=sflag, size = 0x4, scoped, tag = 'scoped memory for tpu_custom_call.1']
    #allocation7 [shape = 'u8[8192]{0}', space=vmem, size = 0x2000, scoped, tag = 'input window, operand 2, single buffered']
    #allocation8 [shape = 'u8[65536]{0}', space=vmem, size = 0x10000, scoped, tag = 'input window, operand 3, single buffered']
    #allocation9 [shape = 's32[1]{0}', space=sflag, size = 0x4, scoped, tag = 'scoped memory for tpu_custom_call.1']
    #allocation10 [shape = 'u8[32768]{0}', space=vmem, size = 0x8000, scoped, tag = 'input window, operand 4, single buffered']
    #allocation11 [shape = 'u8[32768]{0}', space=vmem, size = 0x8000, scoped, tag = 'input window, operand 5, single buffered']
    #allocation12 [shape = 's32[1]{0}', space=sflag, size = 0x4, scoped, tag = 'scoped memory for tpu_custom_call.1']
    #allocation13 [shape = 'u8[32768]{0}', space=vmem, size = 0x8000, scoped, tag = 'input window, operand 6, single buffered']
    #allocation14 [shape = 'u8[32768]{0}', space=vmem, size = 0x8000, scoped, tag = 'input window, operand 7, single buffered']
    #allocation15 [shape = 's32[1]{0}', space=sflag, size = 0x4, scoped, tag = 'scoped memory for tpu_custom_call.1']
    #allocation16 [shape = 'u8[131072]{0}', space=vmem, size = 0x20000, scoped, tag = 'output window, operand 0, single buffered']
    %13 = vsyncpa [#allocation3], 0
    %14 = vsyncpa [#allocation6], 0
    %15 = vsyncpa [#allocation9], 0
    %16 = vsyncpa [#allocation12], 0
    %17 = vsyncpa [#allocation15], 0
    %18 = vsyncpa [#allocation4], 0
    // Predicated region
    $region2: #{tpu_custom_call.1} parent=1 // pred_check
      _
    $region3: #{tpu_custom_call.1} parent=1 // pred_check_branch
      %20 = sbr.rel (0) target = $region5
    $region4: #{tpu_custom_call.1} parent=1 // pred_region
      %s22 = ssub.s32 4096, 4096
      %23 = vsyncadd [#allocation3], %s22
      %s24 = sshll.u32 [#allocation2], 4
      %s25 = int_to_ptr.vmem [resolvable:$true] %s24
      %30 = dma.hbm_to_vmem [thread:$0]  %s0, 4096, %s25, [#allocation3], 128, 128, 8
    $region5: #{tpu_custom_call.1} parent=1 // pred_fallthru
      _
    // Predicated region
    $region6: #{tpu_custom_call.1} parent=1 // pred_check
      _
    $region7: #{tpu_custom_call.1} parent=1 // pred_check_branch
      %32 = sbr.rel (0) target = $region9
    $region8: #{tpu_custom_call.1} parent=1 // pred_region
      %s34 = ssub.s32 4096, 4096
      %35 = vsyncadd [#allocation6], %s34
      %s36 = sshll.u32 [#allocation5], 4
      %s37 = int_to_ptr.vmem [resolvable:$true] %s36
      %42 = dma.hbm_to_vmem [thread:$0]  %s1, 4096, %s37, [#allocation6], 128, 128, 8
    $region9: #{tpu_custom_call.1} parent=1 // pred_fallthru
      _
    // Predicated region
    $region10: #{tpu_custom_call.1} parent=1 // pred_check
      _
    $region11: #{tpu_custom_call.1} parent=1 // pred_check_branch
      %44 = sbr.rel (0) target = $region13
    $region12: #{tpu_custom_call.1} parent=1 // pred_region
      %s46 = ssub.s32 256, 256
      %47 = vsyncadd [#allocation6], %s46
      %s49 = sshll.u32 [#allocation7], 4
      %s50 = int_to_ptr.vmem [resolvable:$true] %s49
      %52 = dma.hbm_to_vmem [thread:$0]  %s2, 256, %s50, [#allocation6]
    $region13: #{tpu_custom_call.1} parent=1 // pred_fallthru
      _
    // Predicated region
    $region14: #{tpu_custom_call.1} parent=1 // pred_check
      _
    $region15: #{tpu_custom_call.1} parent=1 // pred_check_branch
      %54 = sbr.rel (0) target = $region17
    $region16: #{tpu_custom_call.1} parent=1 // pred_region
      %s56 = ssub.s32 2048, 2048
      %57 = vsyncadd [#allocation9], %s56
      %s58 = sshll.u32 [#allocation8], 4
      %s59 = int_to_ptr.vmem [resolvable:$true] %s58
      %64 = dma.hbm_to_vmem [thread:$0]  %s3, 2048, %s59, [#allocation9], 128, 128, 8
    $region17: #{tpu_custom_call.1} parent=1 // pred_fallthru
      _
    // Predicated region
    $region18: #{tpu_custom_call.1} parent=1 // pred_check
      _
    $region19: #{tpu_custom_call.1} parent=1 // pred_check_branch
      %66 = sbr.rel (0) target = $region21
    $region20: #{tpu_custom_call.1} parent=1 // pred_region
      %s68 = ssub.s32 1024, 1024
      %69 = vsyncadd [#allocation9], %s68
      %s70 = sshll.u32 [#allocation10], 4
      %s71 = int_to_ptr.vmem [resolvable:$true] %s70
      %76 = dma.hbm_to_vmem [thread:$0]  %s4, 1024, %s71, [#allocation9], 64, 64, 4
    $region21: #{tpu_custom_call.1} parent=1 // pred_fallthru
      _
    // Predicated region
    $region22: #{tpu_custom_call.1} parent=1 // pred_check
      _
    $region23: #{tpu_custom_call.1} parent=1 // pred_check_branch
      %78 = sbr.rel (0) target = $region25
    $region24: #{tpu_custom_call.1} parent=1 // pred_region
      %s80 = ssub.s32 1024, 1024
      %81 = vsyncadd [#allocation12], %s80
      %s82 = sshll.u32 [#allocation11], 4
      %s83 = int_to_ptr.vmem [resolvable:$true] %s82
      %88 = dma.hbm_to_vmem [thread:$0]  %s5, 1024, %s83, [#allocation12], 64, 64, 4
    $region25: #{tpu_custom_call.1} parent=1 // pred_fallthru
      _
    // Predicated region
    $region26: #{tpu_custom_call.1} parent=1 // pred_check
      _
    $region27: #{tpu_custom_call.1} parent=1 // pred_check_branch
      %90 = sbr.rel (0) target = $region29
    $region28: #{tpu_custom_call.1} parent=1 // pred_region
      %s92 = ssub.s32 1024, 1024
      %93 = vsyncadd [#allocation12], %s92
      %s94 = sshll.u32 [#allocation13], 4
      %s95 = int_to_ptr.vmem [resolvable:$true] %s94
      %100 = dma.hbm_to_vmem [thread:$0]  %s6, 1024, %s95, [#allocation12], 64, 64, 4
    $region29: #{tpu_custom_call.1} parent=1 // pred_fallthru
      _
    // Predicated region
    $region30: #{tpu_custom_call.1} parent=1 // pred_check
      _
    $region31: #{tpu_custom_call.1} parent=1 // pred_check_branch
      %102 = sbr.rel (0) target = $region33
    $region32: #{tpu_custom_call.1} parent=1 // pred_region
      %s104 = ssub.s32 1024, 1024
      %105 = vsyncadd [#allocation15], %s104
      %s106 = sshll.u32 [#allocation14], 4
      %s107 = int_to_ptr.vmem [resolvable:$true] %s106
      %112 = dma.hbm_to_vmem [thread:$0]  %s7, 1024, %s107, [#allocation15], 64, 64, 4
    $region33: #{tpu_custom_call.1} parent=1 // pred_fallthru
      _
    // Predicated region
    $region34: #{tpu_custom_call.1} parent=1 // pred_check
      _
    $region35: #{tpu_custom_call.1} parent=1 // pred_check_branch
      %114 = sbr.rel (0) target = $region37
    $region36: #{tpu_custom_call.1} parent=1 // pred_region
      %115 = dma.done [#allocation3], 4096
    $region37: #{tpu_custom_call.1} parent=1 // pred_fallthru
      _
    // Predicated region
    $region38: #{tpu_custom_call.1} parent=1 // pred_check
      _
    $region39: #{tpu_custom_call.1} parent=1 // pred_check_branch
      %117 = sbr.rel (0) target = $region41
    $region40: #{tpu_custom_call.1} parent=1 // pred_region
      %118 = dma.done [#allocation6], 4096
    $region41: #{tpu_custom_call.1} parent=1 // pred_fallthru
      _
    // Predicated region
    $region42: #{tpu_custom_call.1} parent=1 // pred_check
      _
    $region43: #{tpu_custom_call.1} parent=1 // pred_check_branch
      %120 = sbr.rel (0) target = $region45
    $region44: #{tpu_custom_call.1} parent=1 // pred_region
      %121 = dma.done [#allocation6], 256
    $region45: #{tpu_custom_call.1} parent=1 // pred_fallthru
      _
    // Predicated region
    $region46: #{tpu_custom_call.1} parent=1 // pred_check
      _
    $region47: #{tpu_custom_call.1} parent=1 // pred_check_branch
      %123 = sbr.rel (0) target = $region49
    $region48: #{tpu_custom_call.1} parent=1 // pred_region
      %124 = dma.done [#allocation9], 2048
    $region49: #{tpu_custom_call.1} parent=1 // pred_fallthru
      _
    // Predicated region
    $region50: #{tpu_custom_call.1} parent=1 // pred_check
      _
    $region51: #{tpu_custom_call.1} parent=1 // pred_check_branch
      %126 = sbr.rel (0) target = $region53
    $region52: #{tpu_custom_call.1} parent=1 // pred_region
      %127 = dma.done [#allocation9], 1024
    $region53: #{tpu_custom_call.1} parent=1 // pred_fallthru
      _
    // Predicated region
    $region54: #{tpu_custom_call.1} parent=1 // pred_check
      _
    $region55: #{tpu_custom_call.1} parent=1 // pred_check_branch
      %129 = sbr.rel (0) target = $region57
    $region56: #{tpu_custom_call.1} parent=1 // pred_region
      %130 = dma.done [#allocation12], 1024
    $region57: #{tpu_custom_call.1} parent=1 // pred_fallthru
      _
    // Predicated region
    $region58: #{tpu_custom_call.1} parent=1 // pred_check
      _
    $region59: #{tpu_custom_call.1} parent=1 // pred_check_branch
      %132 = sbr.rel (0) target = $region61
    $region60: #{tpu_custom_call.1} parent=1 // pred_region
      %133 = dma.done [#allocation12], 1024
    $region61: #{tpu_custom_call.1} parent=1 // pred_fallthru
      _
    // Predicated region
    $region62: #{tpu_custom_call.1} parent=1 // pred_check
      _
    $region63: #{tpu_custom_call.1} parent=1 // pred_check_branch
      %135 = sbr.rel (0) target = $region65
    $region64: #{tpu_custom_call.1} parent=1 // pred_region
      %136 = dma.done [#allocation15], 1024
    $region65: #{tpu_custom_call.1} parent=1 // pred_fallthru
      _
    %v138 = vld [vmem:[#allocation7] ss:$0 sm:$0xff]
    %v139 = vld [vmem:[#allocation7 + $0x1] ss:$0 sm:$0xff]
    %s140 = scalar_lea.vmem [#allocation7], 2
    %v141 = vld [vmem:[%s140] ss:$8 sm:$0x3]
    %v142 = vld [vmem:[#allocation7 + $0x3] ss:$0 sm:$0xff]
    %v143 = vld [vmem:[#allocation7 + $0x4] ss:$0 sm:$0xff]
    %v144 = vld [vmem:[#allocation7 + $0x5] ss:$0 sm:$0xff]
    %v145 = vld [vmem:[#allocation7 + $0x6] ss:$0 sm:$0xff]
    %v146 = vld [vmem:[#allocation2] sm:$0xff]
    %v147 = vld [vmem:[#allocation2 + $0x8] sm:$0xff]
    %v148 = vld [vmem:[#allocation2 + $0x10] sm:$0xff]
    %v149 = vld [vmem:[#allocation2 + $0x18] sm:$0xff]
    %v150 = vld [vmem:[#allocation2 + $0x20] sm:$0xff]
    %v151 = vld [vmem:[#allocation2 + $0x28] sm:$0xff]
    %v152 = vld [vmem:[#allocation2 + $0x30] sm:$0xff]
    %v153 = vld [vmem:[#allocation2 + $0x38] sm:$0xff]
    %v154 = vld [vmem:[#allocation2 + $0x40] sm:$0xff]
    %v155 = vld [vmem:[#allocation2 + $0x48] sm:$0xff]
    %v156 = vld [vmem:[#allocation2 + $0x50] sm:$0xff]
    %v157 = vld [vmem:[#allocation2 + $0x58] sm:$0xff]
    %v158 = vld [vmem:[#allocation2 + $0x60] sm:$0xff]
    %v159 = vld [vmem:[#allocation2 + $0x68] sm:$0xff]
    %v160 = vld [vmem:[#allocation2 + $0x70] sm:$0xff]
    %v161 = vld [vmem:[#allocation2 + $0x78] sm:$0xff]
    %v162 = vld [vmem:[#allocation2 + $0x80] sm:$0xff]
    %v163 = vld [vmem:[#allocation2 + $0x88] sm:$0xff]
    %v164 = vld [vmem:[#allocation2 + $0x90] sm:$0xff]
    %v165 = vld [vmem:[#allocation2 + $0x98] sm:$0xff]
    %v166 = vld [vmem:[#allocation2 + $0xa0] sm:$0xff]
    %v167 = vld [vmem:[#allocation2 + $0xa8] sm:$0xff]
    %v168 = vld [vmem:[#allocation2 + $0xb0] sm:$0xff]
    %v169 = vld [vmem:[#allocation2 + $0xb8] sm:$0xff]
    %v170 = vld [vmem:[#allocation2 + $0xc0] sm:$0xff]
    %v171 = vld [vmem:[#allocation2 + $0xc8] sm:$0xff]
    %v172 = vld [vmem:[#allocation2 + $0xd0] sm:$0xff]
    %v173 = vld [vmem:[#allocation2 + $0xd8] sm:$0xff]
    %v174 = vld [vmem:[#allocation2 + $0xe0] sm:$0xff]
    %v175 = vld [vmem:[#allocation2 + $0xe8] sm:$0xff]
    %v176 = vld [vmem:[#allocation2 + $0xf0] sm:$0xff]
    %v177 = vld [vmem:[#allocation2 + $0xf8] sm:$0xff]
    %178 = vadd.xlane.f32.xlu0 %v146
    %v179 = vpop.xlane.xlu0 %178
    %180 = vadd.xlane.f32.xlu0 %v147
    %v181 = vpop.xlane.xlu0 %180
    %182 = vadd.xlane.f32.xlu0 %v148
    %v183 = vpop.xlane.xlu0 %182
    %184 = vadd.xlane.f32.xlu0 %v149
    %v185 = vpop.xlane.xlu0 %184
    %186 = vadd.xlane.f32.xlu0 %v150
    %v187 = vpop.xlane.xlu0 %186
    %188 = vadd.xlane.f32.xlu0 %v151
    %v189 = vpop.xlane.xlu0 %188
    %190 = vadd.xlane.f32.xlu0 %v152
    %v191 = vpop.xlane.xlu0 %190
    %192 = vadd.xlane.f32.xlu0 %v153
    %v193 = vpop.xlane.xlu0 %192
    %194 = vadd.xlane.f32.xlu0 %v154
    %v195 = vpop.xlane.xlu0 %194
    %196 = vadd.xlane.f32.xlu0 %v155
    %v197 = vpop.xlane.xlu0 %196
    %198 = vadd.xlane.f32.xlu0 %v156
    %v199 = vpop.xlane.xlu0 %198
    %200 = vadd.xlane.f32.xlu0 %v157
    %v201 = vpop.xlane.xlu0 %200
    %202 = vadd.xlane.f32.xlu0 %v158
    %v203 = vpop.xlane.xlu0 %202
    %204 = vadd.xlane.f32.xlu0 %v159
    %v205 = vpop.xlane.xlu0 %204
    %206 = vadd.xlane.f32.xlu0 %v160
    %v207 = vpop.xlane.xlu0 %206
    %208 = vadd.xlane.f32.xlu0 %v161
    %v209 = vpop.xlane.xlu0 %208
    %210 = vadd.xlane.f32.xlu0 %v162
    %v211 = vpop.xlane.xlu0 %210
    %212 = vadd.xlane.f32.xlu0 %v163
    %v213 = vpop.xlane.xlu0 %212
    %214 = vadd.xlane.f32.xlu0 %v164
    %v215 = vpop.xlane.xlu0 %214
    %216 = vadd.xlane.f32.xlu0 %v165
    %v217 = vpop.xlane.xlu0 %216
    %218 = vadd.xlane.f32.xlu0 %v166
    %v219 = vpop.xlane.xlu0 %218
    %220 = vadd.xlane.f32.xlu0 %v167
    %v221 = vpop.xlane.xlu0 %220
    %222 = vadd.xlane.f32.xlu0 %v168
    %v223 = vpop.xlane.xlu0 %222
    %224 = vadd.xlane.f32.xlu0 %v169
    %v225 = vpop.xlane.xlu0 %224
    %226 = vadd.xlane.f32.xlu0 %v170
    %v227 = vpop.xlane.xlu0 %226
    %228 = vadd.xlane.f32.xlu0 %v171
    %v229 = vpop.xlane.xlu0 %228
    %230 = vadd.xlane.f32.xlu0 %v172
    %v231 = vpop.xlane.xlu0 %230
    %232 = vadd.xlane.f32.xlu0 %v173
    %v233 = vpop.xlane.xlu0 %232
    %234 = vadd.xlane.f32.xlu0 %v174
    %v235 = vpop.xlane.xlu0 %234
    %236 = vadd.xlane.f32.xlu0 %v175
    %v237 = vpop.xlane.xlu0 %236
    %238 = vadd.xlane.f32.xlu0 %v176
    %v239 = vpop.xlane.xlu0 %238
    %240 = vadd.xlane.f32.xlu0 %v177
    %v241 = vpop.xlane.xlu0 %240
    %v242 = vrcp.pop 128.0
    %v243 = vmul.f32 %v179, %v242
    %v244 = vmul.f32 %v181, %v242
    %v245 = vmul.f32 %v183, %v242
    %v246 = vmul.f32 %v185, %v242
    %v247 = vmul.f32 %v187, %v242
    %v248 = vmul.f32 %v189, %v242
    %v249 = vmul.f32 %v191, %v242
    %v250 = vmul.f32 %v193, %v242
    %v251 = vmul.f32 %v195, %v242
    %v252 = vmul.f32 %v197, %v242
    %v253 = vmul.f32 %v199, %v242
    %v254 = vmul.f32 %v201, %v242
    %v255 = vmul.f32 %v203, %v242
    %v256 = vmul.f32 %v205, %v242
    %v257 = vmul.f32 %v207, %v242
    %v258 = vmul.f32 %v209, %v242
    %v259 = vmul.f32 %v211, %v242
    %v260 = vmul.f32 %v213, %v242
    %v261 = vmul.f32 %v215, %v242
    %v262 = vmul.f32 %v217, %v242
    %v263 = vmul.f32 %v219, %v242
    %v264 = vmul.f32 %v221, %v242
    %v265 = vmul.f32 %v223, %v242
    %v266 = vmul.f32 %v225, %v242
    %v267 = vmul.f32 %v227, %v242
    %v268 = vmul.f32 %v229, %v242
    %v269 = vmul.f32 %v231, %v242
    %v270 = vmul.f32 %v233, %v242
    %v271 = vmul.f32 %v235, %v242
    %v272 = vmul.f32 %v237, %v242
    %v273 = vmul.f32 %v239, %v242
    %v274 = vmul.f32 %v241, %v242
    %v275 = vsub.f32 %v146, %v243
    %v276 = vsub.f32 %v147, %v244
    %v277 = vsub.f32 %v148, %v245
    %v278 = vsub.f32 %v149, %v246
    %v279 = vsub.f32 %v150, %v247
    %v280 = vsub.f32 %v151, %v248
    %v281 = vsub.f32 %v152, %v249
    %v282 = vsub.f32 %v153, %v250
    %v283 = vsub.f32 %v154, %v251
    %v284 = vsub.f32 %v155, %v252
    %v285 = vsub.f32 %v156, %v253
    %v286 = vsub.f32 %v157, %v254
    %v287 = vsub.f32 %v158, %v255
    %v288 = vsub.f32 %v159, %v256
    %v289 = vsub.f32 %v160, %v257
    %v290 = vsub.f32 %v161, %v258
    %v291 = vsub.f32 %v162, %v259
    %v292 = vsub.f32 %v163, %v260
    %v293 = vsub.f32 %v164, %v261
    %v294 = vsub.f32 %v165, %v262
    %v295 = vsub.f32 %v166, %v263
    %v296 = vsub.f32 %v167, %v264
    %v297 = vsub.f32 %v168, %v265
    %v298 = vsub.f32 %v169, %v266
    %v299 = vsub.f32 %v170, %v267
    %v300 = vsub.f32 %v171, %v268
    %v301 = vsub.f32 %v172, %v269
    %v302 = vsub.f32 %v173, %v270
    %v303 = vsub.f32 %v174, %v271
    %v304 = vsub.f32 %v175, %v272
    %v305 = vsub.f32 %v176, %v273
    %v306 = vsub.f32 %v177, %v274
    %v307 = vmul.f32 %v275, %v275
    %v308 = vmul.f32 %v276, %v276
    %v309 = vmul.f32 %v277, %v277
    %v310 = vmul.f32 %v278, %v278
    %v311 = vmul.f32 %v279, %v279
    %v312 = vmul.f32 %v280, %v280
    %v313 = vmul.f32 %v281, %v281
    %v314 = vmul.f32 %v282, %v282
    %v315 = vmul.f32 %v283, %v283
    %v316 = vmul.f32 %v284, %v284
    %v317 = vmul.f32 %v285, %v285
    %v318 = vmul.f32 %v286, %v286
    %v319 = vmul.f32 %v287, %v287
    %v320 = vmul.f32 %v288, %v288
    %v321 = vmul.f32 %v289, %v289
    %v322 = vmul.f32 %v290, %v290
    %v323 = vmul.f32 %v291, %v291
    %v324 = vmul.f32 %v292, %v292
    %v325 = vmul.f32 %v293, %v293
    %v326 = vmul.f32 %v294, %v294
    %v327 = vmul.f32 %v295, %v295
    %v328 = vmul.f32 %v296, %v296
    %v329 = vmul.f32 %v297, %v297
    %v330 = vmul.f32 %v298, %v298
    %v331 = vmul.f32 %v299, %v299
    %v332 = vmul.f32 %v300, %v300
    %v333 = vmul.f32 %v301, %v301
    %v334 = vmul.f32 %v302, %v302
    %v335 = vmul.f32 %v303, %v303
    %v336 = vmul.f32 %v304, %v304
    %v337 = vmul.f32 %v305, %v305
    %v338 = vmul.f32 %v306, %v306
    %339 = vadd.xlane.f32.xlu0 %v307
    %v340 = vpop.xlane.xlu0 %339
    %341 = vadd.xlane.f32.xlu0 %v308
    %v342 = vpop.xlane.xlu0 %341
    %343 = vadd.xlane.f32.xlu0 %v309
    %v344 = vpop.xlane.xlu0 %343
    %345 = vadd.xlane.f32.xlu0 %v310
    %v346 = vpop.xlane.xlu0 %345
    %347 = vadd.xlane.f32.xlu0 %v311
    %v348 = vpop.xlane.xlu0 %347
    %349 = vadd.xlane.f32.xlu0 %v312
    %v350 = vpop.xlane.xlu0 %349
    %351 = vadd.xlane.f32.xlu0 %v313
    %v352 = vpop.xlane.xlu0 %351
    %353 = vadd.xlane.f32.xlu0 %v314
    %v354 = vpop.xlane.xlu0 %353
    %355 = vadd.xlane.f32.xlu0 %v315
    %v356 = vpop.xlane.xlu0 %355
    %357 = vadd.xlane.f32.xlu0 %v316
    %v358 = vpop.xlane.xlu0 %357
    %359 = vadd.xlane.f32.xlu0 %v317
    %v360 = vpop.xlane.xlu0 %359
    %361 = vadd.xlane.f32.xlu0 %v318
    %v362 = vpop.xlane.xlu0 %361
    %363 = vadd.xlane.f32.xlu0 %v319
    %v364 = vpop.xlane.xlu0 %363
    %365 = vadd.xlane.f32.xlu0 %v320
    %v366 = vpop.xlane.xlu0 %365
    %367 = vadd.xlane.f32.xlu0 %v321
    %v368 = vpop.xlane.xlu0 %367
    %369 = vadd.xlane.f32.xlu0 %v322
    %v370 = vpop.xlane.xlu0 %369
    %371 = vadd.xlane.f32.xlu0 %v323
    %v372 = vpop.xlane.xlu0 %371
    %373 = vadd.xlane.f32.xlu0 %v324
    %v374 = vpop.xlane.xlu0 %373
    %375 = vadd.xlane.f32.xlu0 %v325
    %v376 = vpop.xlane.xlu0 %375
    %377 = vadd.xlane.f32.xlu0 %v326
    %v378 = vpop.xlane.xlu0 %377
    %379 = vadd.xlane.f32.xlu0 %v327
    %v380 = vpop.xlane.xlu0 %379
    %381 = vadd.xlane.f32.xlu0 %v328
    %v382 = vpop.xlane.xlu0 %381
    %383 = vadd.xlane.f32.xlu0 %v329
    %v384 = vpop.xlane.xlu0 %383
    %385 = vadd.xlane.f32.xlu0 %v330
    %v386 = vpop.xlane.xlu0 %385
    %387 = vadd.xlane.f32.xlu0 %v331
    %v388 = vpop.xlane.xlu0 %387
    %389 = vadd.xlane.f32.xlu0 %v332
    %v390 = vpop.xlane.xlu0 %389
    %391 = vadd.xlane.f32.xlu0 %v333
    %v392 = vpop.xlane.xlu0 %391
    %393 = vadd.xlane.f32.xlu0 %v334
    %v394 = vpop.xlane.xlu0 %393
    %395 = vadd.xlane.f32.xlu0 %v335
    %v396 = vpop.xlane.xlu0 %395
    %397 = vadd.xlane.f32.xlu0 %v336
    %v398 = vpop.xlane.xlu0 %397
    %399 = vadd.xlane.f32.xlu0 %v337
    %v400 = vpop.xlane.xlu0 %399
    %401 = vadd.xlane.f32.xlu0 %v338
    %v402 = vpop.xlane.xlu0 %401
    %v403 = vmul.f32 %v340, %v242
    %v404 = vmul.f32 %v342, %v242
    %v405 = vmul.f32 %v344, %v242
    %v406 = vmul.f32 %v346, %v242
    %v407 = vmul.f32 %v348, %v242
    %v408 = vmul.f32 %v350, %v242
    %v409 = vmul.f32 %v352, %v242
    %v410 = vmul.f32 %v354, %v242
    %v411 = vmul.f32 %v356, %v242
    %v412 = vmul.f32 %v358, %v242
    %v413 = vmul.f32 %v360, %v242
    %v414 = vmul.f32 %v362, %v242
    %v415 = vmul.f32 %v364, %v242
    %v416 = vmul.f32 %v366, %v242
    %v417 = vmul.f32 %v368, %v242
    %v418 = vmul.f32 %v370, %v242
    %v419 = vmul.f32 %v372, %v242
    %v420 = vmul.f32 %v374, %v242
    %v421 = vmul.f32 %v376, %v242
    %v422 = vmul.f32 %v378, %v242
    %v423 = vmul.f32 %v380, %v242
    %v424 = vmul.f32 %v382, %v242
    %v425 = vmul.f32 %v384, %v242
    %v426 = vmul.f32 %v386, %v242
    %v427 = vmul.f32 %v388, %v242
    %v428 = vmul.f32 %v390, %v242
    %v429 = vmul.f32 %v392, %v242
    %v430 = vmul.f32 %v394, %v242
    %v431 = vmul.f32 %v396, %v242
    %v432 = vmul.f32 %v398, %v242
    %v433 = vmul.f32 %v400, %v242
    %v434 = vmul.f32 %v402, %v242
    %v435 = vadd.f32 %v403, 1e-06
    %v436 = vadd.f32 %v404, 1e-06
    %v437 = vadd.f32 %v405, 1e-06
    %v438 = vadd.f32 %v406, 1e-06
    %v439 = vadd.f32 %v407, 1e-06
    %v440 = vadd.f32 %v408, 1e-06
    %v441 = vadd.f32 %v409, 1e-06
    %v442 = vadd.f32 %v410, 1e-06
    %v443 = vadd.f32 %v411, 1e-06
    %v444 = vadd.f32 %v412, 1e-06
    %v445 = vadd.f32 %v413, 1e-06
    %v446 = vadd.f32 %v414, 1e-06
    %v447 = vadd.f32 %v415, 1e-06
    %v448 = vadd.f32 %v416, 1e-06
    %v449 = vadd.f32 %v417, 1e-06
    %v450 = vadd.f32 %v418, 1e-06
    %v451 = vadd.f32 %v419, 1e-06
    %v452 = vadd.f32 %v420, 1e-06
    %v453 = vadd.f32 %v421, 1e-06
    %v454 = vadd.f32 %v422, 1e-06
    %v455 = vadd.f32 %v423, 1e-06
    %v456 = vadd.f32 %v424, 1e-06
    %v457 = vadd.f32 %v425, 1e-06
    %v458 = vadd.f32 %v426, 1e-06
    %v459 = vadd.f32 %v427, 1e-06
    %v460 = vadd.f32 %v428, 1e-06
    %v461 = vadd.f32 %v429, 1e-06
    %v462 = vadd.f32 %v430, 1e-06
    %v463 = vadd.f32 %v431, 1e-06
    %v464 = vadd.f32 %v432, 1e-06
    %v465 = vadd.f32 %v433, 1e-06
    %v466 = vadd.f32 %v434, 1e-06
    %v467 = vrsqrt.pop %v435
    %v468 = vrsqrt.pop %v436
    %v469 = vrsqrt.pop %v437
    %v470 = vrsqrt.pop %v438
    %v471 = vrsqrt.pop %v439
    %v472 = vrsqrt.pop %v440
    %v473 = vrsqrt.pop %v441
    %v474 = vrsqrt.pop %v442
    %v475 = vrsqrt.pop %v443
    %v476 = vrsqrt.pop %v444
    %v477 = vrsqrt.pop %v445
    %v478 = vrsqrt.pop %v446
    %v479 = vrsqrt.pop %v447
    %v480 = vrsqrt.pop %v448
    %v481 = vrsqrt.pop %v449
    %v482 = vrsqrt.pop %v450
    %v483 = vrsqrt.pop %v451
    %v484 = vrsqrt.pop %v452
    %v485 = vrsqrt.pop %v453
    %v486 = vrsqrt.pop %v454
    %v487 = vrsqrt.pop %v455
    %v488 = vrsqrt.pop %v456
    %v489 = vrsqrt.pop %v457
    %v490 = vrsqrt.pop %v458
    %v491 = vrsqrt.pop %v459
    %v492 = vrsqrt.pop %v460
    %v493 = vrsqrt.pop %v461
    %v494 = vrsqrt.pop %v462
    %v495 = vrsqrt.pop %v463
    %v496 = vrsqrt.pop %v464
    %v497 = vrsqrt.pop %v465
    %v498 = vrsqrt.pop %v466
    %v499 = vmul.f32 %v275, %v467
    %v500 = vmul.f32 %v276, %v468
    %v501 = vmul.f32 %v277, %v469
    %v502 = vmul.f32 %v278, %v470
    %v503 = vmul.f32 %v279, %v471
    %v504 = vmul.f32 %v280, %v472
    %v505 = vmul.f32 %v281, %v473
    %v506 = vmul.f32 %v282, %v474
    %v507 = vmul.f32 %v283, %v475
    %v508 = vmul.f32 %v284, %v476
    %v509 = vmul.f32 %v285, %v477
    %v510 = vmul.f32 %v286, %v478
    %v511 = vmul.f32 %v287, %v479
    %v512 = vmul.f32 %v288, %v480
    %v513 = vmul.f32 %v289, %v481
    %v514 = vmul.f32 %v290, %v482
    %v515 = vmul.f32 %v291, %v483
    %v516 = vmul.f32 %v292, %v484
    %v517 = vmul.f32 %v293, %v485
    %v518 = vmul.f32 %v294, %v486
    %v519 = vmul.f32 %v295, %v487
    %v520 = vmul.f32 %v296, %v488
    %v521 = vmul.f32 %v297, %v489
    %v522 = vmul.f32 %v298, %v490
    %v523 = vmul.f32 %v299, %v491
    %v524 = vmul.f32 %v300, %v492
    %v525 = vmul.f32 %v301, %v493
    %v526 = vmul.f32 %v302, %v494
    %v527 = vmul.f32 %v303, %v495
    %v528 = vmul.f32 %v304, %v496
    %v529 = vmul.f32 %v305, %v497
    %v530 = vmul.f32 %v306, %v498
    %v531 = vmul.f32 %v499, %v138
    %v532 = vmul.f32 %v500, %v138
    %v533 = vmul.f32 %v501, %v138
    %v534 = vmul.f32 %v502, %v138
    %v535 = vmul.f32 %v503, %v138
    %v536 = vmul.f32 %v504, %v138
    %v537 = vmul.f32 %v505, %v138
    %v538 = vmul.f32 %v506, %v138
    %v539 = vmul.f32 %v507, %v138
    %v540 = vmul.f32 %v508, %v138
    %v541 = vmul.f32 %v509, %v138
    %v542 = vmul.f32 %v510, %v138
    %v543 = vmul.f32 %v511, %v138
    %v544 = vmul.f32 %v512, %v138
    %v545 = vmul.f32 %v513, %v138
    %v546 = vmul.f32 %v514, %v138
    %v547 = vmul.f32 %v515, %v138
    %v548 = vmul.f32 %v516, %v138
    %v549 = vmul.f32 %v517, %v138
    %v550 = vmul.f32 %v518, %v138
    %v551 = vmul.f32 %v519, %v138
    %v552 = vmul.f32 %v520, %v138
    %v553 = vmul.f32 %v521, %v138
    %v554 = vmul.f32 %v522, %v138
    %v555 = vmul.f32 %v523, %v138
    %v556 = vmul.f32 %v524, %v138
    %v557 = vmul.f32 %v525, %v138
    %v558 = vmul.f32 %v526, %v138
    %v559 = vmul.f32 %v527, %v138
    %v560 = vmul.f32 %v528, %v138
    %v561 = vmul.f32 %v529, %v138
    %v562 = vmul.f32 %v530, %v138
    %v563 = vadd.f32 %v531, %v139
    %v564 = vadd.f32 %v532, %v139
    %v565 = vadd.f32 %v533, %v139
    %v566 = vadd.f32 %v534, %v139
    %v567 = vadd.f32 %v535, %v139
    %v568 = vadd.f32 %v536, %v139
    %v569 = vadd.f32 %v537, %v139
    %v570 = vadd.f32 %v538, %v139
    %v571 = vadd.f32 %v539, %v139
    %v572 = vadd.f32 %v540, %v139
    %v573 = vadd.f32 %v541, %v139
    %v574 = vadd.f32 %v542, %v139
    %v575 = vadd.f32 %v543, %v139
    %v576 = vadd.f32 %v544, %v139
    %v577 = vadd.f32 %v545, %v139
    %v578 = vadd.f32 %v546, %v139
    %v579 = vadd.f32 %v547, %v139
    %v580 = vadd.f32 %v548, %v139
    %v581 = vadd.f32 %v549, %v139
    %v582 = vadd.f32 %v550, %v139
    %v583 = vadd.f32 %v551, %v139
    %v584 = vadd.f32 %v552, %v139
    %v585 = vadd.f32 %v553, %v139
    %v586 = vadd.f32 %v554, %v139
    %v587 = vadd.f32 %v555, %v139
    %v588 = vadd.f32 %v556, %v139
    %v589 = vadd.f32 %v557, %v139
    %v590 = vadd.f32 %v558, %v139
    %v591 = vadd.f32 %v559, %v139
    %v592 = vadd.f32 %v560, %v139
    %v593 = vadd.f32 %v561, %v139
    %v594 = vadd.f32 %v562, %v139
    %v595 = vld [vmem:[#allocation5] sm:$0xff]
    %v596 = vld [vmem:[#allocation5 + $0x8] sm:$0xff]
    %v597 = vld [vmem:[#allocation5 + $0x10] sm:$0xff]
    %v598 = vld [vmem:[#allocation5 + $0x18] sm:$0xff]
    %v599 = vld [vmem:[#allocation5 + $0x20] sm:$0xff]
    %v600 = vld [vmem:[#allocation5 + $0x28] sm:$0xff]
    %v601 = vld [vmem:[#allocation5 + $0x30] sm:$0xff]
    %v602 = vld [vmem:[#allocation5 + $0x38] sm:$0xff]
    %v603 = vld [vmem:[#allocation5 + $0x40] sm:$0xff]
    %v604 = vld [vmem:[#allocation5 + $0x48] sm:$0xff]
    %v605 = vld [vmem:[#allocation5 + $0x50] sm:$0xff]
    %v606 = vld [vmem:[#allocation5 + $0x58] sm:$0xff]
    %v607 = vld [vmem:[#allocation5 + $0x60] sm:$0xff]
    %v608 = vld [vmem:[#allocation5 + $0x68] sm:$0xff]
    %v609 = vld [vmem:[#allocation5 + $0x70] sm:$0xff]
    %v610 = vld [vmem:[#allocation5 + $0x78] sm:$0xff]
    %v611 = vld [vmem:[#allocation5 + $0x80] sm:$0xff]
    %v612 = vld [vmem:[#allocation5 + $0x88] sm:$0xff]
    %v613 = vld [vmem:[#allocation5 + $0x90] sm:$0xff]
    %v614 = vld [vmem:[#allocation5 + $0x98] sm:$0xff]
    %v615 = vld [vmem:[#allocation5 + $0xa0] sm:$0xff]
    %v616 = vld [vmem:[#allocation5 + $0xa8] sm:$0xff]
    %v617 = vld [vmem:[#allocation5 + $0xb0] sm:$0xff]
    %v618 = vld [vmem:[#allocation5 + $0xb8] sm:$0xff]
    %v619 = vld [vmem:[#allocation5 + $0xc0] sm:$0xff]
    %v620 = vld [vmem:[#allocation5 + $0xc8] sm:$0xff]
    %v621 = vld [vmem:[#allocation5 + $0xd0] sm:$0xff]
    %v622 = vld [vmem:[#allocation5 + $0xd8] sm:$0xff]
    %v623 = vld [vmem:[#allocation5 + $0xe0] sm:$0xff]
    %v624 = vld [vmem:[#allocation5 + $0xe8] sm:$0xff]
    %v625 = vld [vmem:[#allocation5 + $0xf0] sm:$0xff]
    %v626 = vld [vmem:[#allocation5 + $0xf8] sm:$0xff]
    %627 = vadd.xlane.f32.xlu0 %v595
    %v628 = vpop.xlane.xlu0 %627
    %629 = vadd.xlane.f32.xlu0 %v596
    %v630 = vpop.xlane.xlu0 %629
    %631 = vadd.xlane.f32.xlu0 %v597
    %v632 = vpop.xlane.xlu0 %631
    %633 = vadd.xlane.f32.xlu0 %v598
    %v634 = vpop.xlane.xlu0 %633
    %635 = vadd.xlane.f32.xlu0 %v599
    %v636 = vpop.xlane.xlu0 %635
    %637 = vadd.xlane.f32.xlu0 %v600
    %v638 = vpop.xlane.xlu0 %637
    %639 = vadd.xlane.f32.xlu0 %v601
    %v640 = vpop.xlane.xlu0 %639
    %641 = vadd.xlane.f32.xlu0 %v602
    %v642 = vpop.xlane.xlu0 %641
    %643 = vadd.xlane.f32.xlu0 %v603
    %v644 = vpop.xlane.xlu0 %643
    %645 = vadd.xlane.f32.xlu0 %v604
    %v646 = vpop.xlane.xlu0 %645
    %647 = vadd.xlane.f32.xlu0 %v605
    %v648 = vpop.xlane.xlu0 %647
    %649 = vadd.xlane.f32.xlu0 %v606
    %v650 = vpop.xlane.xlu0 %649
    %651 = vadd.xlane.f32.xlu0 %v607
    %v652 = vpop.xlane.xlu0 %651
    %653 = vadd.xlane.f32.xlu0 %v608
    %v654 = vpop.xlane.xlu0 %653
    %655 = vadd.xlane.f32.xlu0 %v609
    %v656 = vpop.xlane.xlu0 %655
    %657 = vadd.xlane.f32.xlu0 %v610
    %v658 = vpop.xlane.xlu0 %657
    %659 = vadd.xlane.f32.xlu0 %v611
    %v660 = vpop.xlane.xlu0 %659
    %661 = vadd.xlane.f32.xlu0 %v612
    %v662 = vpop.xlane.xlu0 %661
    %663 = vadd.xlane.f32.xlu0 %v613
    %v664 = vpop.xlane.xlu0 %663
    %665 = vadd.xlane.f32.xlu0 %v614
    %v666 = vpop.xlane.xlu0 %665
    %667 = vadd.xlane.f32.xlu0 %v615
    %v668 = vpop.xlane.xlu0 %667
    %669 = vadd.xlane.f32.xlu0 %v616
    %v670 = vpop.xlane.xlu0 %669
    %671 = vadd.xlane.f32.xlu0 %v617
    %v672 = vpop.xlane.xlu0 %671
    %673 = vadd.xlane.f32.xlu0 %v618
    %v674 = vpop.xlane.xlu0 %673
    %675 = vadd.xlane.f32.xlu0 %v619
    %v676 = vpop.xlane.xlu0 %675
    %677 = vadd.xlane.f32.xlu0 %v620
    %v678 = vpop.xlane.xlu0 %677
    %679 = vadd.xlane.f32.xlu0 %v621
    %v680 = vpop.xlane.xlu0 %679
    %681 = vadd.xlane.f32.xlu0 %v622
    %v682 = vpop.xlane.xlu0 %681
    %683 = vadd.xlane.f32.xlu0 %v623
    %v684 = vpop.xlane.xlu0 %683
    %685 = vadd.xlane.f32.xlu0 %v624
    %v686 = vpop.xlane.xlu0 %685
    %687 = vadd.xlane.f32.xlu0 %v625
    %v688 = vpop.xlane.xlu0 %687
    %689 = vadd.xlane.f32.xlu0 %v626
    %v690 = vpop.xlane.xlu0 %689
    %v691 = vmul.f32 %v628, %v242
    %v692 = vmul.f32 %v630, %v242
    %v693 = vmul.f32 %v632, %v242
    %v694 = vmul.f32 %v634, %v242
    %v695 = vmul.f32 %v636, %v242
    %v696 = vmul.f32 %v638, %v242
    %v697 = vmul.f32 %v640, %v242
    %v698 = vmul.f32 %v642, %v242
    %v699 = vmul.f32 %v644, %v242
    %v700 = vmul.f32 %v646, %v242
    %v701 = vmul.f32 %v648, %v242
    %v702 = vmul.f32 %v650, %v242
    %v703 = vmul.f32 %v652, %v242
    %v704 = vmul.f32 %v654, %v242
    %v705 = vmul.f32 %v656, %v242
    %v706 = vmul.f32 %v658, %v242
    %v707 = vmul.f32 %v660, %v242
    %v708 = vmul.f32 %v662, %v242
    %v709 = vmul.f32 %v664, %v242
    %v710 = vmul.f32 %v666, %v242
    %v711 = vmul.f32 %v668, %v242
    %v712 = vmul.f32 %v670, %v242
    %v713 = vmul.f32 %v672, %v242
    %v714 = vmul.f32 %v674, %v242
    %v715 = vmul.f32 %v676, %v242
    %v716 = vmul.f32 %v678, %v242
    %v717 = vmul.f32 %v680, %v242
    %v718 = vmul.f32 %v682, %v242
    %v719 = vmul.f32 %v684, %v242
    %v720 = vmul.f32 %v686, %v242
    %v721 = vmul.f32 %v688, %v242
    %v722 = vmul.f32 %v690, %v242
    %v723 = vsub.f32 %v595, %v691
    %v724 = vsub.f32 %v596, %v692
    %v725 = vsub.f32 %v597, %v693
    %v726 = vsub.f32 %v598, %v694
    %v727 = vsub.f32 %v599, %v695
    %v728 = vsub.f32 %v600, %v696
    %v729 = vsub.f32 %v601, %v697
    %v730 = vsub.f32 %v602, %v698
    %v731 = vsub.f32 %v603, %v699
    %v732 = vsub.f32 %v604, %v700
    %v733 = vsub.f32 %v605, %v701
    %v734 = vsub.f32 %v606, %v702
    %v735 = vsub.f32 %v607, %v703
    %v736 = vsub.f32 %v608, %v704
    %v737 = vsub.f32 %v609, %v705
    %v738 = vsub.f32 %v610, %v706
    %v739 = vsub.f32 %v611, %v707
    %v740 = vsub.f32 %v612, %v708
    %v741 = vsub.f32 %v613, %v709
    %v742 = vsub.f32 %v614, %v710
    %v743 = vsub.f32 %v615, %v711
    %v744 = vsub.f32 %v616, %v712
    %v745 = vsub.f32 %v617, %v713
    %v746 = vsub.f32 %v618, %v714
    %v747 = vsub.f32 %v619, %v715
    %v748 = vsub.f32 %v620, %v716
    %v749 = vsub.f32 %v621, %v717
    %v750 = vsub.f32 %v622, %v718
    %v751 = vsub.f32 %v623, %v719
    %v752 = vsub.f32 %v624, %v720
    %v753 = vsub.f32 %v625, %v721
    %v754 = vsub.f32 %v626, %v722
    %v755 = vmul.f32 %v723, %v723
    %v756 = vmul.f32 %v724, %v724
    %v757 = vmul.f32 %v725, %v725
    %v758 = vmul.f32 %v726, %v726
    %v759 = vmul.f32 %v727, %v727
    %v760 = vmul.f32 %v728, %v728
    %v761 = vmul.f32 %v729, %v729
    %v762 = vmul.f32 %v730, %v730
    %v763 = vmul.f32 %v731, %v731
    %v764 = vmul.f32 %v732, %v732
    %v765 = vmul.f32 %v733, %v733
    %v766 = vmul.f32 %v734, %v734
    %v767 = vmul.f32 %v735, %v735
    %v768 = vmul.f32 %v736, %v736
    %v769 = vmul.f32 %v737, %v737
    %v770 = vmul.f32 %v738, %v738
    %v771 = vmul.f32 %v739, %v739
    %v772 = vmul.f32 %v740, %v740
    %v773 = vmul.f32 %v741, %v741
    %v774 = vmul.f32 %v742, %v742
    %v775 = vmul.f32 %v743, %v743
    %v776 = vmul.f32 %v744, %v744
    %v777 = vmul.f32 %v745, %v745
    %v778 = vmul.f32 %v746, %v746
    %v779 = vmul.f32 %v747, %v747
    %v780 = vmul.f32 %v748, %v748
    %v781 = vmul.f32 %v749, %v749
    %v782 = vmul.f32 %v750, %v750
    %v783 = vmul.f32 %v751, %v751
    %v784 = vmul.f32 %v752, %v752
    %v785 = vmul.f32 %v753, %v753
    %v786 = vmul.f32 %v754, %v754
    %787 = vadd.xlane.f32.xlu0 %v755
    %v788 = vpop.xlane.xlu0 %787
    %789 = vadd.xlane.f32.xlu0 %v756
    %v790 = vpop.xlane.xlu0 %789
    %791 = vadd.xlane.f32.xlu0 %v757
    %v792 = vpop.xlane.xlu0 %791
    %793 = vadd.xlane.f32.xlu0 %v758
    %v794 = vpop.xlane.xlu0 %793
    %795 = vadd.xlane.f32.xlu0 %v759
    %v796 = vpop.xlane.xlu0 %795
    %797 = vadd.xlane.f32.xlu0 %v760
    %v798 = vpop.xlane.xlu0 %797
    %799 = vadd.xlane.f32.xlu0 %v761
    %v800 = vpop.xlane.xlu0 %799
    %801 = vadd.xlane.f32.xlu0 %v762
    %v802 = vpop.xlane.xlu0 %801
    %803 = vadd.xlane.f32.xlu0 %v763
    %v804 = vpop.xlane.xlu0 %803
    %805 = vadd.xlane.f32.xlu0 %v764
    %v806 = vpop.xlane.xlu0 %805
    %807 = vadd.xlane.f32.xlu0 %v765
    %v808 = vpop.xlane.xlu0 %807
    %809 = vadd.xlane.f32.xlu0 %v766
    %v810 = vpop.xlane.xlu0 %809
    %811 = vadd.xlane.f32.xlu0 %v767
    %v812 = vpop.xlane.xlu0 %811
    %813 = vadd.xlane.f32.xlu0 %v768
    %v814 = vpop.xlane.xlu0 %813
    %815 = vadd.xlane.f32.xlu0 %v769
    %v816 = vpop.xlane.xlu0 %815
    %817 = vadd.xlane.f32.xlu0 %v770
    %v818 = vpop.xlane.xlu0 %817
    %819 = vadd.xlane.f32.xlu0 %v771
    %v820 = vpop.xlane.xlu0 %819
    %821 = vadd.xlane.f32.xlu0 %v772
    %v822 = vpop.xlane.xlu0 %821
    %823 = vadd.xlane.f32.xlu0 %v773
    %v824 = vpop.xlane.xlu0 %823
    %825 = vadd.xlane.f32.xlu0 %v774
    %v826 = vpop.xlane.xlu0 %825
    %827 = vadd.xlane.f32.xlu0 %v775
    %v828 = vpop.xlane.xlu0 %827
    %829 = vadd.xlane.f32.xlu0 %v776
    %v830 = vpop.xlane.xlu0 %829
    %831 = vadd.xlane.f32.xlu0 %v777
    %v832 = vpop.xlane.xlu0 %831
    %833 = vadd.xlane.f32.xlu0 %v778
    %v834 = vpop.xlane.xlu0 %833
    %835 = vadd.xlane.f32.xlu0 %v779
    %v836 = vpop.xlane.xlu0 %835
    %837 = vadd.xlane.f32.xlu0 %v780
    %v838 = vpop.xlane.xlu0 %837
    %839 = vadd.xlane.f32.xlu0 %v781
    %v840 = vpop.xlane.xlu0 %839
    %841 = vadd.xlane.f32.xlu0 %v782
    %v842 = vpop.xlane.xlu0 %841
    %843 = vadd.xlane.f32.xlu0 %v783
    %v844 = vpop.xlane.xlu0 %843
    %845 = vadd.xlane.f32.xlu0 %v784
    %v846 = vpop.xlane.xlu0 %845
    %847 = vadd.xlane.f32.xlu0 %v785
    %v848 = vpop.xlane.xlu0 %847
    %849 = vadd.xlane.f32.xlu0 %v786
    %v850 = vpop.xlane.xlu0 %849
    %v851 = vmul.f32 %v788, %v242
    %v852 = vmul.f32 %v790, %v242
    %v853 = vmul.f32 %v792, %v242
    %v854 = vmul.f32 %v794, %v242
    %v855 = vmul.f32 %v796, %v242
    %v856 = vmul.f32 %v798, %v242
    %v857 = vmul.f32 %v800, %v242
    %v858 = vmul.f32 %v802, %v242
    %v859 = vmul.f32 %v804, %v242
    %v860 = vmul.f32 %v806, %v242
    %v861 = vmul.f32 %v808, %v242
    %v862 = vmul.f32 %v810, %v242
    %v863 = vmul.f32 %v812, %v242
    %v864 = vmul.f32 %v814, %v242
    %v865 = vmul.f32 %v816, %v242
    %v866 = vmul.f32 %v818, %v242
    %v867 = vmul.f32 %v820, %v242
    %v868 = vmul.f32 %v822, %v242
    %v869 = vmul.f32 %v824, %v242
    %v870 = vmul.f32 %v826, %v242
    %v871 = vmul.f32 %v828, %v242
    %v872 = vmul.f32 %v830, %v242
    %v873 = vmul.f32 %v832, %v242
    %v874 = vmul.f32 %v834, %v242
    %v875 = vmul.f32 %v836, %v242
    %v876 = vmul.f32 %v838, %v242
    %v877 = vmul.f32 %v840, %v242
    %v878 = vmul.f32 %v842, %v242
    %v879 = vmul.f32 %v844, %v242
    %v880 = vmul.f32 %v846, %v242
    %v881 = vmul.f32 %v848, %v242
    %v882 = vmul.f32 %v850, %v242
    %v883 = vadd.f32 %v851, 1e-06
    %v884 = vadd.f32 %v852, 1e-06
    %v885 = vadd.f32 %v853, 1e-06
    %v886 = vadd.f32 %v854, 1e-06
    %v887 = vadd.f32 %v855, 1e-06
    %v888 = vadd.f32 %v856, 1e-06
    %v889 = vadd.f32 %v857, 1e-06
    %v890 = vadd.f32 %v858, 1e-06
    %v891 = vadd.f32 %v859, 1e-06
    %v892 = vadd.f32 %v860, 1e-06
    %v893 = vadd.f32 %v861, 1e-06
    %v894 = vadd.f32 %v862, 1e-06
    %v895 = vadd.f32 %v863, 1e-06
    %v896 = vadd.f32 %v864, 1e-06
    %v897 = vadd.f32 %v865, 1e-06
    %v898 = vadd.f32 %v866, 1e-06
    %v899 = vadd.f32 %v867, 1e-06
    %v900 = vadd.f32 %v868, 1e-06
    %v901 = vadd.f32 %v869, 1e-06
    %v902 = vadd.f32 %v870, 1e-06
    %v903 = vadd.f32 %v871, 1e-06
    %v904 = vadd.f32 %v872, 1e-06
    %v905 = vadd.f32 %v873, 1e-06
    %v906 = vadd.f32 %v874, 1e-06
    %v907 = vadd.f32 %v875, 1e-06
    %v908 = vadd.f32 %v876, 1e-06
    %v909 = vadd.f32 %v877, 1e-06
    %v910 = vadd.f32 %v878, 1e-06
    %v911 = vadd.f32 %v879, 1e-06
    %v912 = vadd.f32 %v880, 1e-06
    %v913 = vadd.f32 %v881, 1e-06
    %v914 = vadd.f32 %v882, 1e-06
    %v915 = vrsqrt.pop %v883
    %v916 = vrsqrt.pop %v884
    %v917 = vrsqrt.pop %v885
    %v918 = vrsqrt.pop %v886
    %v919 = vrsqrt.pop %v887
    %v920 = vrsqrt.pop %v888
    %v921 = vrsqrt.pop %v889
    %v922 = vrsqrt.pop %v890
    %v923 = vrsqrt.pop %v891
    %v924 = vrsqrt.pop %v892
    %v925 = vrsqrt.pop %v893
    %v926 = vrsqrt.pop %v894
    %v927 = vrsqrt.pop %v895
    %v928 = vrsqrt.pop %v896
    %v929 = vrsqrt.pop %v897
    %v930 = vrsqrt.pop %v898
    %v931 = vrsqrt.pop %v899
    %v932 = vrsqrt.pop %v900
    %v933 = vrsqrt.pop %v901
    %v934 = vrsqrt.pop %v902
    %v935 = vrsqrt.pop %v903
    %v936 = vrsqrt.pop %v904
    %v937 = vrsqrt.pop %v905
    %v938 = vrsqrt.pop %v906
    %v939 = vrsqrt.pop %v907
    %v940 = vrsqrt.pop %v908
    %v941 = vrsqrt.pop %v909
    %v942 = vrsqrt.pop %v910
    %v943 = vrsqrt.pop %v911
    %v944 = vrsqrt.pop %v912
    %v945 = vrsqrt.pop %v913
    %v946 = vrsqrt.pop %v914
    %v947 = vmul.f32 %v723, %v915
    %v948 = vmul.f32 %v724, %v916
    %v949 = vmul.f32 %v725, %v917
    %v950 = vmul.f32 %v726, %v918
    %v951 = vmul.f32 %v727, %v919
    %v952 = vmul.f32 %v728, %v920
    %v953 = vmul.f32 %v729, %v921
    %v954 = vmul.f32 %v730, %v922
    %v955 = vmul.f32 %v731, %v923
    %v956 = vmul.f32 %v732, %v924
    %v957 = vmul.f32 %v733, %v925
    %v958 = vmul.f32 %v734, %v926
    %v959 = vmul.f32 %v735, %v927
    %v960 = vmul.f32 %v736, %v928
    %v961 = vmul.f32 %v737, %v929
    %v962 = vmul.f32 %v738, %v930
    %v963 = vmul.f32 %v739, %v931
    %v964 = vmul.f32 %v740, %v932
    %v965 = vmul.f32 %v741, %v933
    %v966 = vmul.f32 %v742, %v934
    %v967 = vmul.f32 %v743, %v935
    %v968 = vmul.f32 %v744, %v936
    %v969 = vmul.f32 %v745, %v937
    %v970 = vmul.f32 %v746, %v938
    %v971 = vmul.f32 %v747, %v939
    %v972 = vmul.f32 %v748, %v940
    %v973 = vmul.f32 %v749, %v941
    %v974 = vmul.f32 %v750, %v942
    %v975 = vmul.f32 %v751, %v943
    %v976 = vmul.f32 %v752, %v944
    %v977 = vmul.f32 %v753, %v945
    %v978 = vmul.f32 %v754, %v946
    %v979 = vmul.f32 %v947, %v138
    %v980 = vmul.f32 %v948, %v138
    %v981 = vmul.f32 %v949, %v138
    %v982 = vmul.f32 %v950, %v138
    %v983 = vmul.f32 %v951, %v138
    %v984 = vmul.f32 %v952, %v138
    %v985 = vmul.f32 %v953, %v138
    %v986 = vmul.f32 %v954, %v138
    %v987 = vmul.f32 %v955, %v138
    %v988 = vmul.f32 %v956, %v138
    %v989 = vmul.f32 %v957, %v138
    %v990 = vmul.f32 %v958, %v138
    %v991 = vmul.f32 %v959, %v138
    %v992 = vmul.f32 %v960, %v138
    %v993 = vmul.f32 %v961, %v138
    %v994 = vmul.f32 %v962, %v138
    %v995 = vmul.f32 %v963, %v138
    %v996 = vmul.f32 %v964, %v138
    %v997 = vmul.f32 %v965, %v138
    %v998 = vmul.f32 %v966, %v138
    %v999 = vmul.f32 %v967, %v138
    %v1000 = vmul.f32 %v968, %v138
    %v1001 = vmul.f32 %v969, %v138
    %v1002 = vmul.f32 %v970, %v138
    %v1003 = vmul.f32 %v971, %v138
    %v1004 = vmul.f32 %v972, %v138
    %v1005 = vmul.f32 %v973, %v138
    %v1006 = vmul.f32 %v974, %v138
    %v1007 = vmul.f32 %v975, %v138
    %v1008 = vmul.f32 %v976, %v138
    %v1009 = vmul.f32 %v977, %v138
    %v1010 = vmul.f32 %v978, %v138
    %v1011 = vadd.f32 %v979, %v139
    %v1012 = vadd.f32 %v980, %v139
    %v1013 = vadd.f32 %v981, %v139
    %v1014 = vadd.f32 %v982, %v139
    %v1015 = vadd.f32 %v983, %v139
    %v1016 = vadd.f32 %v984, %v139
    %v1017 = vadd.f32 %v985, %v139
    %v1018 = vadd.f32 %v986, %v139
    %v1019 = vadd.f32 %v987, %v139
    %v1020 = vadd.f32 %v988, %v139
    %v1021 = vadd.f32 %v989, %v139
    %v1022 = vadd.f32 %v990, %v139
    %v1023 = vadd.f32 %v991, %v139
    %v1024 = vadd.f32 %v992, %v139
    %v1025 = vadd.f32 %v993, %v139
    %v1026 = vadd.f32 %v994, %v139
    %v1027 = vadd.f32 %v995, %v139
    %v1028 = vadd.f32 %v996, %v139
    %v1029 = vadd.f32 %v997, %v139
    %v1030 = vadd.f32 %v998, %v139
    %v1031 = vadd.f32 %v999, %v139
    %v1032 = vadd.f32 %v1000, %v139
    %v1033 = vadd.f32 %v1001, %v139
    %v1034 = vadd.f32 %v1002, %v139
    %v1035 = vadd.f32 %v1003, %v139
    %v1036 = vadd.f32 %v1004, %v139
    %v1037 = vadd.f32 %v1005, %v139
    %v1038 = vadd.f32 %v1006, %v139
    %v1039 = vadd.f32 %v1007, %v139
    %v1040 = vadd.f32 %v1008, %v139
    %v1041 = vadd.f32 %v1009, %v139
    %v1042 = vadd.f32 %v1010, %v139
    %v1043 = vpack.c.bf16 %v564, %v563
    %v1044 = vpack.c.bf16 %v566, %v565
    %v1045 = vpack.c.bf16 %v568, %v567
    %v1046 = vpack.c.bf16 %v570, %v569
    %v1047 = vpack.c.bf16 %v572, %v571
    %v1048 = vpack.c.bf16 %v574, %v573
    %v1049 = vpack.c.bf16 %v576, %v575
    %v1050 = vpack.c.bf16 %v578, %v577
    %v1051 = vpack.c.bf16 %v580, %v579
    %v1052 = vpack.c.bf16 %v582, %v581
    %v1053 = vpack.c.bf16 %v584, %v583
    %v1054 = vpack.c.bf16 %v586, %v585
    %v1055 = vpack.c.bf16 %v588, %v587
    %v1056 = vpack.c.bf16 %v590, %v589
    %v1057 = vpack.c.bf16 %v592, %v591
    %v1058 = vpack.c.bf16 %v594, %v593
    %v1059 = vld [vmem:[#allocation8] sm:$0xff]
    %v1060 = vld [vmem:[#allocation8 + $0x8] sm:$0xff]
    %v1061 = vld [vmem:[#allocation8 + $0x10] sm:$0xff]
    %v1062 = vld [vmem:[#allocation8 + $0x18] sm:$0xff]
    %v1063 = vld [vmem:[#allocation8 + $0x20] sm:$0xff]
    %v1064 = vld [vmem:[#allocation8 + $0x28] sm:$0xff]
    %v1065 = vld [vmem:[#allocation8 + $0x30] sm:$0xff]
    %v1066 = vld [vmem:[#allocation8 + $0x38] sm:$0xff]
    %v1067 = vld [vmem:[#allocation8 + $0x40] sm:$0xff]
    %v1068 = vld [vmem:[#allocation8 + $0x48] sm:$0xff]
    %v1069 = vld [vmem:[#allocation8 + $0x50] sm:$0xff]
    %v1070 = vld [vmem:[#allocation8 + $0x58] sm:$0xff]
    %v1071 = vld [vmem:[#allocation8 + $0x60] sm:$0xff]
    %v1072 = vld [vmem:[#allocation8 + $0x68] sm:$0xff]
    %v1073 = vld [vmem:[#allocation8 + $0x70] sm:$0xff]
    %v1074 = vld [vmem:[#allocation8 + $0x78] sm:$0xff]
    %v1076 = vlaneseq
    %v1077 = vshrl.u32 %v1076, 7
    %v1078 = vsub.s32 0, %v1077
    %v1079 = vrot.slane %v141, %v1078
    %v1080 = vlaneseq
    %v1081 = vshrl.u32 %v1080, 7
    %v1082 = vsub.s32 1, %v1081
    %v1083 = vrot.slane %v141, %v1082
    %v1102 = vunpack.c.l.b16 %v1059
    %v1103 = vunpack.c.h.b16 %v1059
    %v1104 = vunpack.c.l.b16 %v1060
    %v1105 = vunpack.c.h.b16 %v1060
    %v1106 = vunpack.c.l.b16 %v1061
    %v1107 = vunpack.c.h.b16 %v1061
    %v1108 = vunpack.c.l.b16 %v1062
    %v1109 = vunpack.c.h.b16 %v1062
    %v1110 = vunpack.c.l.b16 %v1063
    %v1111 = vunpack.c.h.b16 %v1063
    %v1112 = vunpack.c.l.b16 %v1064
    %v1113 = vunpack.c.h.b16 %v1064
    %v1114 = vunpack.c.l.b16 %v1065
    %v1115 = vunpack.c.h.b16 %v1065
    %v1116 = vunpack.c.l.b16 %v1066
    %v1117 = vunpack.c.h.b16 %v1066
    %v1118 = vunpack.c.l.b16 %v1067
    %v1119 = vunpack.c.h.b16 %v1067
    %v1120 = vunpack.c.l.b16 %v1068
    %v1121 = vunpack.c.h.b16 %v1068
    %v1122 = vunpack.c.l.b16 %v1069
    %v1123 = vunpack.c.h.b16 %v1069
    %v1124 = vunpack.c.l.b16 %v1070
    %v1125 = vunpack.c.h.b16 %v1070
    %v1126 = vunpack.c.l.b16 %v1071
    %v1127 = vunpack.c.h.b16 %v1071
    %v1128 = vunpack.c.l.b16 %v1072
    %v1129 = vunpack.c.h.b16 %v1072
    %v1130 = vunpack.c.l.b16 %v1073
    %v1131 = vunpack.c.h.b16 %v1073
    %v1132 = vunpack.c.l.b16 %v1074
    %v1133 = vunpack.c.h.b16 %v1074
    %v1134 = vpack.c.b16 %v1104, %v1102
    %v1135 = vpack.c.b16 %v1105, %v1103
    %v1136 = vpack.c.b16 %v1108, %v1106
    %v1137 = vpack.c.b16 %v1109, %v1107
    %v1138 = vpack.c.b16 %v1112, %v1110
    %v1139 = vpack.c.b16 %v1113, %v1111
    %v1140 = vpack.c.b16 %v1116, %v1114
    %v1141 = vpack.c.b16 %v1117, %v1115
    %v1142 = vpack.c.b16 %v1120, %v1118
    %v1143 = vpack.c.b16 %v1121, %v1119
    %v1144 = vpack.c.b16 %v1124, %v1122
    %v1145 = vpack.c.b16 %v1125, %v1123
    %v1146 = vpack.c.b16 %v1128, %v1126
    %v1147 = vpack.c.b16 %v1129, %v1127
    %v1148 = vpack.c.b16 %v1132, %v1130
    %v1149 = vpack.c.b16 %v1133, %v1131
    %1166 = vmatprep.subr.bf16.mxu0 %v1149
    %1167 = vmatpush1.bf16.msra.mxu0 %v1148
    %1168 = vmatprep.subr.bf16.mxu0 %v1147
    %1169 = vmatpush1.bf16.msra.mxu0 %v1146
    %1170 = vmatprep.subr.bf16.mxu0 %v1145
    %1171 = vmatpush1.bf16.msra.mxu0 %v1144
    %1172 = vmatprep.subr.bf16.mxu0 %v1143
    %1173 = vmatpush1.bf16.msra.mxu0 %v1142
    %1174 = vmatprep.subr.bf16.mxu0 %v1141
    %1175 = vmatpush1.bf16.msra.mxu0 %v1140
    %1176 = vmatprep.subr.bf16.mxu0 %v1139
    %1177 = vmatpush1.bf16.msra.mxu0 %v1138
    %1178 = vmatprep.subr.bf16.mxu0 %v1137
    %1179 = vmatpush1.bf16.msra.mxu0 %v1136
    %1180 = vmatprep.subr.bf16.mxu0 %v1135
    %1181 = vmatpush1.bf16.msra.mxu0 %v1134
    %1182 = vmatprep.subr.bf16.mxu0 0
    %1183 = vmatpush2.bf16.msra.mxu0 0
    %1184 = vmatprep.subr.bf16.mxu0 0
    %1185 = vmatpush2.bf16.msra.mxu0 0
    %1186 = vmatprep.subr.bf16.mxu0 0
    %1187 = vmatpush2.bf16.msra.mxu0 0
    %1188 = vmatprep.subr.bf16.mxu0 0
    %1189 = vmatpush2.bf16.msra.mxu0 0
    %1190 = vmatprep.subr.bf16.mxu0 0
    %1191 = vmatpush2.bf16.msra.mxu0 0
    %1192 = vmatprep.subr.bf16.mxu0 0
    %1193 = vmatpush2.bf16.msra.mxu0 0
    %1194 = vmatprep.subr.bf16.mxu0 0
    %1195 = vmatpush2.bf16.msra.mxu0 0
    %1196 = vmatprep.subr.bf16.mxu0 0
    %1197 = vmatpush2.bf16.msra.mxu0 0
    %1198 = vmatprep.mubr.bf16.mxu0 0
    %1199 = vmatmul.mubr.bf16.gmra.mxu0 %v1043
    %v1200 = vpop.f32.mrf.mxu0
    %v1201 = vadd.f32 %v1079, %v1200
    %v1202 = vpop.f32.mrf.mxu0
    %v1203 = vadd.f32 %v1083, %v1202
    %v1204 = vpop.f32.mrf.mxu0
    %v1205 = vadd.f32 %v1079, %v1204
    %v1206 = vpop.f32.mrf.mxu0
    %v1207 = vadd.f32 %v1083, %v1206
    %1208 = vmatprep.mubr.bf16.mxu0 0
    %1209 = vmatmul.mubr.bf16.gmra.mxu0 %v1044
    %v1210 = vpop.f32.mrf.mxu0
    %v1211 = vadd.f32 %v1079, %v1210
    %v1212 = vpop.f32.mrf.mxu0
    %v1213 = vadd.f32 %v1083, %v1212
    %v1214 = vpop.f32.mrf.mxu0
    %v1215 = vadd.f32 %v1079, %v1214
    %v1216 = vpop.f32.mrf.mxu0
    %v1217 = vadd.f32 %v1083, %v1216
    %1218 = vmatprep.mubr.bf16.mxu0 0
    %1219 = vmatmul.mubr.bf16.gmra.mxu0 %v1045
    %v1220 = vpop.f32.mrf.mxu0
    %v1221 = vadd.f32 %v1079, %v1220
    %v1222 = vpop.f32.mrf.mxu0
    %v1223 = vadd.f32 %v1083, %v1222
    %v1224 = vpop.f32.mrf.mxu0
    %v1225 = vadd.f32 %v1079, %v1224
    %v1226 = vpop.f32.mrf.mxu0
    %v1227 = vadd.f32 %v1083, %v1226
    %1228 = vmatprep.mubr.bf16.mxu0 0
    %1229 = vmatmul.mubr.bf16.gmra.mxu0 %v1046
    %v1230 = vpop.f32.mrf.mxu0
    %v1231 = vadd.f32 %v1079, %v1230
    %v1232 = vpop.f32.mrf.mxu0
    %v1233 = vadd.f32 %v1083, %v1232
    %v1234 = vpop.f32.mrf.mxu0
    %v1235 = vadd.f32 %v1079, %v1234
    %v1236 = vpop.f32.mrf.mxu0
    %v1237 = vadd.f32 %v1083, %v1236
    %1238 = vmatprep.mubr.bf16.mxu0 0
    %1239 = vmatmul.mubr.bf16.gmra.mxu0 %v1047
    %v1240 = vpop.f32.mrf.mxu0
    %v1241 = vadd.f32 %v1079, %v1240
    %v1242 = vpop.f32.mrf.mxu0
    %v1243 = vadd.f32 %v1083, %v1242
    %v1244 = vpop.f32.mrf.mxu0
    %v1245 = vadd.f32 %v1079, %v1244
    %v1246 = vpop.f32.mrf.mxu0
    %v1247 = vadd.f32 %v1083, %v1246
    %1248 = vmatprep.mubr.bf16.mxu0 0
    %1249 = vmatmul.mubr.bf16.gmra.mxu0 %v1048
    %v1250 = vpop.f32.mrf.mxu0
    %v1251 = vadd.f32 %v1079, %v1250
    %v1252 = vpop.f32.mrf.mxu0
    %v1253 = vadd.f32 %v1083, %v1252
    %v1254 = vpop.f32.mrf.mxu0
    %v1255 = vadd.f32 %v1079, %v1254
    %v1256 = vpop.f32.mrf.mxu0
    %v1257 = vadd.f32 %v1083, %v1256
    %1258 = vmatprep.mubr.bf16.mxu0 0
    %1259 = vmatmul.mubr.bf16.gmra.mxu0 %v1049
    %v1260 = vpop.f32.mrf.mxu0
    %v1261 = vadd.f32 %v1079, %v1260
    %v1262 = vpop.f32.mrf.mxu0
    %v1263 = vadd.f32 %v1083, %v1262
    %v1264 = vpop.f32.mrf.mxu0
    %v1265 = vadd.f32 %v1079, %v1264
    %v1266 = vpop.f32.mrf.mxu0
    %v1267 = vadd.f32 %v1083, %v1266
    %1268 = vmatprep.mubr.bf16.mxu0 0
    %1269 = vmatmul.mubr.bf16.gmra.mxu0 %v1050
    %v1270 = vpop.f32.mrf.mxu0
    %v1271 = vadd.f32 %v1079, %v1270
    %v1272 = vpop.f32.mrf.mxu0
    %v1273 = vadd.f32 %v1083, %v1272
    %v1274 = vpop.f32.mrf.mxu0
    %v1275 = vadd.f32 %v1079, %v1274
    %v1276 = vpop.f32.mrf.mxu0
    %v1277 = vadd.f32 %v1083, %v1276
    %1278 = vmatprep.mubr.bf16.mxu0 0
    %1279 = vmatmul.mubr.bf16.gmra.mxu0 %v1051
    %v1280 = vpop.f32.mrf.mxu0
    %v1281 = vadd.f32 %v1079, %v1280
    %v1282 = vpop.f32.mrf.mxu0
    %v1283 = vadd.f32 %v1083, %v1282
    %v1284 = vpop.f32.mrf.mxu0
    %v1285 = vadd.f32 %v1079, %v1284
    %v1286 = vpop.f32.mrf.mxu0
    %v1287 = vadd.f32 %v1083, %v1286
    %1288 = vmatprep.mubr.bf16.mxu0 0
    %1289 = vmatmul.mubr.bf16.gmra.mxu0 %v1052
    %v1290 = vpop.f32.mrf.mxu0
    %v1291 = vadd.f32 %v1079, %v1290
    %v1292 = vpop.f32.mrf.mxu0
    %v1293 = vadd.f32 %v1083, %v1292
    %v1294 = vpop.f32.mrf.mxu0
    %v1295 = vadd.f32 %v1079, %v1294
    %v1296 = vpop.f32.mrf.mxu0
    %v1297 = vadd.f32 %v1083, %v1296
    %1298 = vmatprep.mubr.bf16.mxu0 0
    %1299 = vmatmul.mubr.bf16.gmra.mxu0 %v1053
    %v1300 = vpop.f32.mrf.mxu0
    %v1301 = vadd.f32 %v1079, %v1300
    %v1302 = vpop.f32.mrf.mxu0
    %v1303 = vadd.f32 %v1083, %v1302
    %v1304 = vpop.f32.mrf.mxu0
    %v1305 = vadd.f32 %v1079, %v1304
    %v1306 = vpop.f32.mrf.mxu0
    %v1307 = vadd.f32 %v1083, %v1306
    %1308 = vmatprep.mubr.bf16.mxu0 0
    %1309 = vmatmul.mubr.bf16.gmra.mxu0 %v1054
    %v1310 = vpop.f32.mrf.mxu0
    %v1311 = vadd.f32 %v1079, %v1310
    %v1312 = vpop.f32.mrf.mxu0
    %v1313 = vadd.f32 %v1083, %v1312
    %v1314 = vpop.f32.mrf.mxu0
    %v1315 = vadd.f32 %v1079, %v1314
    %v1316 = vpop.f32.mrf.mxu0
    %v1317 = vadd.f32 %v1083, %v1316
    %1318 = vmatprep.mubr.bf16.mxu0 0
    %1319 = vmatmul.mubr.bf16.gmra.mxu0 %v1055
    %v1320 = vpop.f32.mrf.mxu0
    %v1321 = vadd.f32 %v1079, %v1320
    %v1322 = vpop.f32.mrf.mxu0
    %v1323 = vadd.f32 %v1083, %v1322
    %v1324 = vpop.f32.mrf.mxu0
    %v1325 = vadd.f32 %v1079, %v1324
    %v1326 = vpop.f32.mrf.mxu0
    %v1327 = vadd.f32 %v1083, %v1326
    %1328 = vmatprep.mubr.bf16.mxu0 0
    %1329 = vmatmul.mubr.bf16.gmra.mxu0 %v1056
    %v1330 = vpop.f32.mrf.mxu0
    %v1331 = vadd.f32 %v1079, %v1330
    %v1332 = vpop.f32.mrf.mxu0
    %v1333 = vadd.f32 %v1083, %v1332
    %v1334 = vpop.f32.mrf.mxu0
    %v1335 = vadd.f32 %v1079, %v1334
    %v1336 = vpop.f32.mrf.mxu0
    %v1337 = vadd.f32 %v1083, %v1336
    %1338 = vmatprep.mubr.bf16.mxu0 0
    %1339 = vmatmul.mubr.bf16.gmra.mxu0 %v1057
    %v1340 = vpop.f32.mrf.mxu0
    %v1341 = vadd.f32 %v1079, %v1340
    %v1342 = vpop.f32.mrf.mxu0
    %v1343 = vadd.f32 %v1083, %v1342
    %v1344 = vpop.f32.mrf.mxu0
    %v1345 = vadd.f32 %v1079, %v1344
    %v1346 = vpop.f32.mrf.mxu0
    %v1347 = vadd.f32 %v1083, %v1346
    %1348 = vmatprep.mubr.bf16.mxu0 0
    %1349 = vmatmul.mubr.bf16.gmra.mxu0 %v1058
    %v1350 = vpop.f32.mrf.mxu0
    %v1351 = vadd.f32 %v1079, %v1350
    %v1352 = vpop.f32.mrf.mxu0
    %v1353 = vadd.f32 %v1083, %v1352
    %v1354 = vpop.f32.mrf.mxu0
    %v1355 = vadd.f32 %v1079, %v1354
    %v1356 = vpop.f32.mrf.mxu0
    %v1357 = vadd.f32 %v1083, %v1356
    %1358 = vdwg.mxu0
    %v1359 = vmul.f32 %v1201, %v1011
    %v1360 = vmul.f32 %v1205, %v1012
    %v1361 = vmul.f32 %v1211, %v1013
    %v1362 = vmul.f32 %v1215, %v1014
    %v1363 = vmul.f32 %v1221, %v1015
    %v1364 = vmul.f32 %v1225, %v1016
    %v1365 = vmul.f32 %v1231, %v1017
    %v1366 = vmul.f32 %v1235, %v1018
    %v1367 = vmul.f32 %v1241, %v1019
    %v1368 = vmul.f32 %v1245, %v1020
    %v1369 = vmul.f32 %v1251, %v1021
    %v1370 = vmul.f32 %v1255, %v1022
    %v1371 = vmul.f32 %v1261, %v1023
    %v1372 = vmul.f32 %v1265, %v1024
    %v1373 = vmul.f32 %v1271, %v1025
    %v1374 = vmul.f32 %v1275, %v1026
    %v1375 = vmul.f32 %v1281, %v1027
    %v1376 = vmul.f32 %v1285, %v1028
    %v1377 = vmul.f32 %v1291, %v1029
    %v1378 = vmul.f32 %v1295, %v1030
    %v1379 = vmul.f32 %v1301, %v1031
    %v1380 = vmul.f32 %v1305, %v1032
    %v1381 = vmul.f32 %v1311, %v1033
    %v1382 = vmul.f32 %v1315, %v1034
    %v1383 = vmul.f32 %v1321, %v1035
    %v1384 = vmul.f32 %v1325, %v1036
    %v1385 = vmul.f32 %v1331, %v1037
    %v1386 = vmul.f32 %v1335, %v1038
    %v1387 = vmul.f32 %v1341, %v1039
    %v1388 = vmul.f32 %v1345, %v1040
    %v1389 = vmul.f32 %v1351, %v1041
    %v1390 = vmul.f32 %v1355, %v1042
    %v1391 = vadd.f32 %v1359, %v1203
    %v1392 = vadd.f32 %v1360, %v1207
    %v1393 = vadd.f32 %v1361, %v1213
    %v1394 = vadd.f32 %v1362, %v1217
    %v1395 = vadd.f32 %v1363, %v1223
    %v1396 = vadd.f32 %v1364, %v1227
    %v1397 = vadd.f32 %v1365, %v1233
    %v1398 = vadd.f32 %v1366, %v1237
    %v1399 = vadd.f32 %v1367, %v1243
    %v1400 = vadd.f32 %v1368, %v1247
    %v1401 = vadd.f32 %v1369, %v1253
    %v1402 = vadd.f32 %v1370, %v1257
    %v1403 = vadd.f32 %v1371, %v1263
    %v1404 = vadd.f32 %v1372, %v1267
    %v1405 = vadd.f32 %v1373, %v1273
    %v1406 = vadd.f32 %v1374, %v1277
    %v1407 = vadd.f32 %v1375, %v1283
    %v1408 = vadd.f32 %v1376, %v1287
    %v1409 = vadd.f32 %v1377, %v1293
    %v1410 = vadd.f32 %v1378, %v1297
    %v1411 = vadd.f32 %v1379, %v1303
    %v1412 = vadd.f32 %v1380, %v1307
    %v1413 = vadd.f32 %v1381, %v1313
    %v1414 = vadd.f32 %v1382, %v1317
    %v1415 = vadd.f32 %v1383, %v1323
    %v1416 = vadd.f32 %v1384, %v1327
    %v1417 = vadd.f32 %v1385, %v1333
    %v1418 = vadd.f32 %v1386, %v1337
    %v1419 = vadd.f32 %v1387, %v1343
    %v1420 = vadd.f32 %v1388, %v1347
    %v1421 = vadd.f32 %v1389, %v1353
    %v1422 = vadd.f32 %v1390, %v1357
    %v1423 = vpack.c.bf16 %v1392, %v1391
    %v1424 = vpack.c.bf16 %v1394, %v1393
    %v1425 = vpack.c.bf16 %v1396, %v1395
    %v1426 = vpack.c.bf16 %v1398, %v1397
    %v1427 = vpack.c.bf16 %v1400, %v1399
    %v1428 = vpack.c.bf16 %v1402, %v1401
    %v1429 = vpack.c.bf16 %v1404, %v1403
    %v1430 = vpack.c.bf16 %v1406, %v1405
    %v1431 = vpack.c.bf16 %v1408, %v1407
    %v1432 = vpack.c.bf16 %v1410, %v1409
    %v1433 = vpack.c.bf16 %v1412, %v1411
    %v1434 = vpack.c.bf16 %v1414, %v1413
    %v1435 = vpack.c.bf16 %v1416, %v1415
    %v1436 = vpack.c.bf16 %v1418, %v1417
    %v1437 = vpack.c.bf16 %v1420, %v1419
    %v1438 = vpack.c.bf16 %v1422, %v1421
    %v1439 = vld [vmem:[#allocation10] sm:$0xf]
    %v1440 = vld [vmem:[#allocation10 + $0x4] sm:$0xf]
    %v1441 = vld [vmem:[#allocation10 + $0x8] sm:$0xf]
    %v1442 = vld [vmem:[#allocation10 + $0xc] sm:$0xf]
    %v1443 = vld [vmem:[#allocation10 + $0x10] sm:$0xf]
    %v1444 = vld [vmem:[#allocation10 + $0x14] sm:$0xf]
    %v1445 = vld [vmem:[#allocation10 + $0x18] sm:$0xf]
    %v1446 = vld [vmem:[#allocation10 + $0x1c] sm:$0xf]
    %v1447 = vld [vmem:[#allocation10 + $0x20] sm:$0xf]
    %v1448 = vld [vmem:[#allocation10 + $0x24] sm:$0xf]
    %v1449 = vld [vmem:[#allocation10 + $0x28] sm:$0xf]
    %v1450 = vld [vmem:[#allocation10 + $0x2c] sm:$0xf]
    %v1451 = vld [vmem:[#allocation10 + $0x30] sm:$0xf]
    %v1452 = vld [vmem:[#allocation10 + $0x34] sm:$0xf]
    %v1453 = vld [vmem:[#allocation10 + $0x38] sm:$0xf]
    %v1454 = vld [vmem:[#allocation10 + $0x3c] sm:$0xf]
    %v1471 = vunpack.c.l.b16 %v1439
    %v1472 = vunpack.c.l.b16 %v1440
    %v1473 = vunpack.c.l.b16 %v1441
    %v1474 = vunpack.c.l.b16 %v1442
    %v1475 = vunpack.c.l.b16 %v1443
    %v1476 = vunpack.c.l.b16 %v1444
    %v1477 = vunpack.c.l.b16 %v1445
    %v1478 = vunpack.c.l.b16 %v1446
    %v1479 = vunpack.c.l.b16 %v1447
    %v1480 = vunpack.c.l.b16 %v1448
    %v1481 = vunpack.c.l.b16 %v1449
    %v1482 = vunpack.c.l.b16 %v1450
    %v1483 = vunpack.c.l.b16 %v1451
    %v1484 = vunpack.c.l.b16 %v1452
    %v1485 = vunpack.c.l.b16 %v1453
    %v1486 = vunpack.c.l.b16 %v1454
    %v1487 = vpack.c.b16 %v1472, %v1471
    %v1488 = vpack.c.b16 %v1474, %v1473
    %v1489 = vpack.c.b16 %v1476, %v1475
    %v1490 = vpack.c.b16 %v1478, %v1477
    %v1491 = vpack.c.b16 %v1480, %v1479
    %v1492 = vpack.c.b16 %v1482, %v1481
    %v1493 = vpack.c.b16 %v1484, %v1483
    %v1494 = vpack.c.b16 %v1486, %v1485
    %1503 = vmatprep.subr.bf16.mxu0 0
    %1504 = vmatpush1.bf16.msra.mxu0 %v1494
    %1505 = vmatprep.subr.bf16.mxu0 0
    %1506 = vmatpush1.bf16.msra.mxu0 %v1493
    %1507 = vmatprep.subr.bf16.mxu0 0
    %1508 = vmatpush1.bf16.msra.mxu0 %v1492
    %1509 = vmatprep.subr.bf16.mxu0 0
    %1510 = vmatpush1.bf16.msra.mxu0 %v1491
    %1511 = vmatprep.subr.bf16.mxu0 0
    %1512 = vmatpush1.bf16.msra.mxu0 %v1490
    %1513 = vmatprep.subr.bf16.mxu0 0
    %1514 = vmatpush1.bf16.msra.mxu0 %v1489
    %1515 = vmatprep.subr.bf16.mxu0 0
    %1516 = vmatpush1.bf16.msra.mxu0 %v1488
    %1517 = vmatprep.subr.bf16.mxu0 0
    %1518 = vmatpush1.bf16.msra.mxu0 %v1487
    %1519 = vmatprep.subr.bf16.mxu0 0
    %1520 = vmatpush2.bf16.msra.mxu0 0
    %1521 = vmatprep.subr.bf16.mxu0 0
    %1522 = vmatpush2.bf16.msra.mxu0 0
    %1523 = vmatprep.subr.bf16.mxu0 0
    %1524 = vmatpush2.bf16.msra.mxu0 0
    %1525 = vmatprep.subr.bf16.mxu0 0
    %1526 = vmatpush2.bf16.msra.mxu0 0
    %1527 = vmatprep.subr.bf16.mxu0 0
    %1528 = vmatpush2.bf16.msra.mxu0 0
    %1529 = vmatprep.subr.bf16.mxu0 0
    %1530 = vmatpush2.bf16.msra.mxu0 0
    %1531 = vmatprep.subr.bf16.mxu0 0
    %1532 = vmatpush2.bf16.msra.mxu0 0
    %1533 = vmatprep.subr.bf16.mxu0 0
    %1534 = vmatpush2.bf16.msra.mxu0 0
    %1535 = vmatprep.mubr.bf16.mxu0 0
    %1536 = vmatmul.mubr.bf16.gmra.mxu0 %v1423
    %v1537 = vpop.f32.mrf.mxu0
    %v1538 = vadd.f32 %v142, %v1537
    %v1539 = vpop.f32.mrf.mxu0
    %v1540 = vpop.f32.mrf.mxu0
    %v1541 = vadd.f32 %v142, %v1540
    %v1542 = vpop.f32.mrf.mxu0
    %1543 = vmatprep.mubr.bf16.mxu0 0
    %1544 = vmatmul.mubr.bf16.gmra.mxu0 %v1424
    %v1545 = vpop.f32.mrf.mxu0
    %v1546 = vadd.f32 %v142, %v1545
    %v1547 = vpop.f32.mrf.mxu0
    %v1548 = vpop.f32.mrf.mxu0
    %v1549 = vadd.f32 %v142, %v1548
    %v1550 = vpop.f32.mrf.mxu0
    %1551 = vmatprep.mubr.bf16.mxu0 0
    %1552 = vmatmul.mubr.bf16.gmra.mxu0 %v1425
    %v1553 = vpop.f32.mrf.mxu0
    %v1554 = vadd.f32 %v142, %v1553
    %v1555 = vpop.f32.mrf.mxu0
    %v1556 = vpop.f32.mrf.mxu0
    %v1557 = vadd.f32 %v142, %v1556
    %v1558 = vpop.f32.mrf.mxu0
    %1559 = vmatprep.mubr.bf16.mxu0 0
    %1560 = vmatmul.mubr.bf16.gmra.mxu0 %v1426
    %v1561 = vpop.f32.mrf.mxu0
    %v1562 = vadd.f32 %v142, %v1561
    %v1563 = vpop.f32.mrf.mxu0
    %v1564 = vpop.f32.mrf.mxu0
    %v1565 = vadd.f32 %v142, %v1564
    %v1566 = vpop.f32.mrf.mxu0
    %1567 = vmatprep.mubr.bf16.mxu0 0
    %1568 = vmatmul.mubr.bf16.gmra.mxu0 %v1427
    %v1569 = vpop.f32.mrf.mxu0
    %v1570 = vadd.f32 %v142, %v1569
    %v1571 = vpop.f32.mrf.mxu0
    %v1572 = vpop.f32.mrf.mxu0
    %v1573 = vadd.f32 %v142, %v1572
    %v1574 = vpop.f32.mrf.mxu0
    %1575 = vmatprep.mubr.bf16.mxu0 0
    %1576 = vmatmul.mubr.bf16.gmra.mxu0 %v1428
    %v1577 = vpop.f32.mrf.mxu0
    %v1578 = vadd.f32 %v142, %v1577
    %v1579 = vpop.f32.mrf.mxu0
    %v1580 = vpop.f32.mrf.mxu0
    %v1581 = vadd.f32 %v142, %v1580
    %v1582 = vpop.f32.mrf.mxu0
    %1583 = vmatprep.mubr.bf16.mxu0 0
    %1584 = vmatmul.mubr.bf16.gmra.mxu0 %v1429
    %v1585 = vpop.f32.mrf.mxu0
    %v1586 = vadd.f32 %v142, %v1585
    %v1587 = vpop.f32.mrf.mxu0
    %v1588 = vpop.f32.mrf.mxu0
    %v1589 = vadd.f32 %v142, %v1588
    %v1590 = vpop.f32.mrf.mxu0
    %1591 = vmatprep.mubr.bf16.mxu0 0
    %1592 = vmatmul.mubr.bf16.gmra.mxu0 %v1430
    %v1593 = vpop.f32.mrf.mxu0
    %v1594 = vadd.f32 %v142, %v1593
    %v1595 = vpop.f32.mrf.mxu0
    %v1596 = vpop.f32.mrf.mxu0
    %v1597 = vadd.f32 %v142, %v1596
    %v1598 = vpop.f32.mrf.mxu0
    %1599 = vmatprep.mubr.bf16.mxu0 0
    %1600 = vmatmul.mubr.bf16.gmra.mxu0 %v1431
    %v1601 = vpop.f32.mrf.mxu0
    %v1602 = vadd.f32 %v142, %v1601
    %v1603 = vpop.f32.mrf.mxu0
    %v1604 = vpop.f32.mrf.mxu0
    %v1605 = vadd.f32 %v142, %v1604
    %v1606 = vpop.f32.mrf.mxu0
    %1607 = vmatprep.mubr.bf16.mxu0 0
    %1608 = vmatmul.mubr.bf16.gmra.mxu0 %v1432
    %v1609 = vpop.f32.mrf.mxu0
    %v1610 = vadd.f32 %v142, %v1609
    %v1611 = vpop.f32.mrf.mxu0
    %v1612 = vpop.f32.mrf.mxu0
    %v1613 = vadd.f32 %v142, %v1612
    %v1614 = vpop.f32.mrf.mxu0
    %1615 = vmatprep.mubr.bf16.mxu0 0
    %1616 = vmatmul.mubr.bf16.gmra.mxu0 %v1433
    %v1617 = vpop.f32.mrf.mxu0
    %v1618 = vadd.f32 %v142, %v1617
    %v1619 = vpop.f32.mrf.mxu0
    %v1620 = vpop.f32.mrf.mxu0
    %v1621 = vadd.f32 %v142, %v1620
    %v1622 = vpop.f32.mrf.mxu0
    %1623 = vmatprep.mubr.bf16.mxu0 0
    %1624 = vmatmul.mubr.bf16.gmra.mxu0 %v1434
    %v1625 = vpop.f32.mrf.mxu0
    %v1626 = vadd.f32 %v142, %v1625
    %v1627 = vpop.f32.mrf.mxu0
    %v1628 = vpop.f32.mrf.mxu0
    %v1629 = vadd.f32 %v142, %v1628
    %v1630 = vpop.f32.mrf.mxu0
    %1631 = vmatprep.mubr.bf16.mxu0 0
    %1632 = vmatmul.mubr.bf16.gmra.mxu0 %v1435
    %v1633 = vpop.f32.mrf.mxu0
    %v1634 = vadd.f32 %v142, %v1633
    %v1635 = vpop.f32.mrf.mxu0
    %v1636 = vpop.f32.mrf.mxu0
    %v1637 = vadd.f32 %v142, %v1636
    %v1638 = vpop.f32.mrf.mxu0
    %1639 = vmatprep.mubr.bf16.mxu0 0
    %1640 = vmatmul.mubr.bf16.gmra.mxu0 %v1436
    %v1641 = vpop.f32.mrf.mxu0
    %v1642 = vadd.f32 %v142, %v1641
    %v1643 = vpop.f32.mrf.mxu0
    %v1644 = vpop.f32.mrf.mxu0
    %v1645 = vadd.f32 %v142, %v1644
    %v1646 = vpop.f32.mrf.mxu0
    %1647 = vmatprep.mubr.bf16.mxu0 0
    %1648 = vmatmul.mubr.bf16.gmra.mxu0 %v1437
    %v1649 = vpop.f32.mrf.mxu0
    %v1650 = vadd.f32 %v142, %v1649
    %v1651 = vpop.f32.mrf.mxu0
    %v1652 = vpop.f32.mrf.mxu0
    %v1653 = vadd.f32 %v142, %v1652
    %v1654 = vpop.f32.mrf.mxu0
    %1655 = vmatprep.mubr.bf16.mxu0 0
    %1656 = vmatmul.mubr.bf16.gmra.mxu0 %v1438
    %v1657 = vpop.f32.mrf.mxu0
    %v1658 = vadd.f32 %v142, %v1657
    %v1659 = vpop.f32.mrf.mxu0
    %v1660 = vpop.f32.mrf.mxu0
    %v1661 = vadd.f32 %v142, %v1660
    %v1662 = vpop.f32.mrf.mxu0
    %1663 = vdwg.mxu0
    %v1664 = vpack.c.bf16 %v1541, %v1538
    %v1665 = vpack.c.bf16 %v1549, %v1546
    %v1666 = vpack.c.bf16 %v1557, %v1554
    %v1667 = vpack.c.bf16 %v1565, %v1562
    %v1668 = vpack.c.bf16 %v1573, %v1570
    %v1669 = vpack.c.bf16 %v1581, %v1578
    %v1670 = vpack.c.bf16 %v1589, %v1586
    %v1671 = vpack.c.bf16 %v1597, %v1594
    %v1672 = vpack.c.bf16 %v1605, %v1602
    %v1673 = vpack.c.bf16 %v1613, %v1610
    %v1674 = vpack.c.bf16 %v1621, %v1618
    %v1675 = vpack.c.bf16 %v1629, %v1626
    %v1676 = vpack.c.bf16 %v1637, %v1634
    %v1677 = vpack.c.bf16 %v1645, %v1642
    %v1678 = vpack.c.bf16 %v1653, %v1650
    %v1679 = vpack.c.bf16 %v1661, %v1658
    %v1680 = vld [vmem:[#allocation11] sm:$0xf]
    %v1681 = vld [vmem:[#allocation11 + $0x4] sm:$0xf]
    %v1682 = vld [vmem:[#allocation11 + $0x8] sm:$0xf]
    %v1683 = vld [vmem:[#allocation11 + $0xc] sm:$0xf]
    %v1684 = vld [vmem:[#allocation11 + $0x10] sm:$0xf]
    %v1685 = vld [vmem:[#allocation11 + $0x14] sm:$0xf]
    %v1686 = vld [vmem:[#allocation11 + $0x18] sm:$0xf]
    %v1687 = vld [vmem:[#allocation11 + $0x1c] sm:$0xf]
    %v1688 = vld [vmem:[#allocation11 + $0x20] sm:$0xf]
    %v1689 = vld [vmem:[#allocation11 + $0x24] sm:$0xf]
    %v1690 = vld [vmem:[#allocation11 + $0x28] sm:$0xf]
    %v1691 = vld [vmem:[#allocation11 + $0x2c] sm:$0xf]
    %v1692 = vld [vmem:[#allocation11 + $0x30] sm:$0xf]
    %v1693 = vld [vmem:[#allocation11 + $0x34] sm:$0xf]
    %v1694 = vld [vmem:[#allocation11 + $0x38] sm:$0xf]
    %v1695 = vld [vmem:[#allocation11 + $0x3c] sm:$0xf]
    %v1712 = vunpack.c.l.b16 %v1680
    %v1713 = vunpack.c.l.b16 %v1681
    %v1714 = vunpack.c.l.b16 %v1682
    %v1715 = vunpack.c.l.b16 %v1683
    %v1716 = vunpack.c.l.b16 %v1684
    %v1717 = vunpack.c.l.b16 %v1685
    %v1718 = vunpack.c.l.b16 %v1686
    %v1719 = vunpack.c.l.b16 %v1687
    %v1720 = vunpack.c.l.b16 %v1688
    %v1721 = vunpack.c.l.b16 %v1689
    %v1722 = vunpack.c.l.b16 %v1690
    %v1723 = vunpack.c.l.b16 %v1691
    %v1724 = vunpack.c.l.b16 %v1692
    %v1725 = vunpack.c.l.b16 %v1693
    %v1726 = vunpack.c.l.b16 %v1694
    %v1727 = vunpack.c.l.b16 %v1695
    %v1728 = vpack.c.b16 %v1713, %v1712
    %v1729 = vpack.c.b16 %v1715, %v1714
    %v1730 = vpack.c.b16 %v1717, %v1716
    %v1731 = vpack.c.b16 %v1719, %v1718
    %v1732 = vpack.c.b16 %v1721, %v1720
    %v1733 = vpack.c.b16 %v1723, %v1722
    %v1734 = vpack.c.b16 %v1725, %v1724
    %v1735 = vpack.c.b16 %v1727, %v1726
    %1744 = vmatprep.subr.bf16.mxu0 0
    %1745 = vmatpush1.bf16.msra.mxu0 %v1735
    %1746 = vmatprep.subr.bf16.mxu0 0
    %1747 = vmatpush1.bf16.msra.mxu0 %v1734
    %1748 = vmatprep.subr.bf16.mxu0 0
    %1749 = vmatpush1.bf16.msra.mxu0 %v1733
    %1750 = vmatprep.subr.bf16.mxu0 0
    %1751 = vmatpush1.bf16.msra.mxu0 %v1732
    %1752 = vmatprep.subr.bf16.mxu0 0
    %1753 = vmatpush1.bf16.msra.mxu0 %v1731
    %1754 = vmatprep.subr.bf16.mxu0 0
    %1755 = vmatpush1.bf16.msra.mxu0 %v1730
    %1756 = vmatprep.subr.bf16.mxu0 0
    %1757 = vmatpush1.bf16.msra.mxu0 %v1729
    %1758 = vmatprep.subr.bf16.mxu0 0
    %1759 = vmatpush1.bf16.msra.mxu0 %v1728
    %1760 = vmatprep.subr.bf16.mxu0 0
    %1761 = vmatpush2.bf16.msra.mxu0 0
    %1762 = vmatprep.subr.bf16.mxu0 0
    %1763 = vmatpush2.bf16.msra.mxu0 0
    %1764 = vmatprep.subr.bf16.mxu0 0
    %1765 = vmatpush2.bf16.msra.mxu0 0
    %1766 = vmatprep.subr.bf16.mxu0 0
    %1767 = vmatpush2.bf16.msra.mxu0 0
    %1768 = vmatprep.subr.bf16.mxu0 0
    %1769 = vmatpush2.bf16.msra.mxu0 0
    %1770 = vmatprep.subr.bf16.mxu0 0
    %1771 = vmatpush2.bf16.msra.mxu0 0
    %1772 = vmatprep.subr.bf16.mxu0 0
    %1773 = vmatpush2.bf16.msra.mxu0 0
    %1774 = vmatprep.subr.bf16.mxu0 0
    %1775 = vmatpush2.bf16.msra.mxu0 0
    %1776 = vmatprep.mubr.bf16.mxu0 0
    %1777 = vmatmul.mubr.bf16.gmra.mxu0 %v1664
    %v1778 = vpop.f32.mrf.mxu0
    %v1779 = vadd.f32 %v143, %v1778
    %v1780 = vpop.f32.mrf.mxu0
    %v1781 = vpop.f32.mrf.mxu0
    %v1782 = vadd.f32 %v143, %v1781
    %v1783 = vpop.f32.mrf.mxu0
    %1784 = vmatprep.mubr.bf16.mxu0 0
    %1785 = vmatmul.mubr.bf16.gmra.mxu0 %v1665
    %v1786 = vpop.f32.mrf.mxu0
    %v1787 = vadd.f32 %v143, %v1786
    %v1788 = vpop.f32.mrf.mxu0
    %v1789 = vpop.f32.mrf.mxu0
    %v1790 = vadd.f32 %v143, %v1789
    %v1791 = vpop.f32.mrf.mxu0
    %1792 = vmatprep.mubr.bf16.mxu0 0
    %1793 = vmatmul.mubr.bf16.gmra.mxu0 %v1666
    %v1794 = vpop.f32.mrf.mxu0
    %v1795 = vadd.f32 %v143, %v1794
    %v1796 = vpop.f32.mrf.mxu0
    %v1797 = vpop.f32.mrf.mxu0
    %v1798 = vadd.f32 %v143, %v1797
    %v1799 = vpop.f32.mrf.mxu0
    %1800 = vmatprep.mubr.bf16.mxu0 0
    %1801 = vmatmul.mubr.bf16.gmra.mxu0 %v1667
    %v1802 = vpop.f32.mrf.mxu0
    %v1803 = vadd.f32 %v143, %v1802
    %v1804 = vpop.f32.mrf.mxu0
    %v1805 = vpop.f32.mrf.mxu0
    %v1806 = vadd.f32 %v143, %v1805
    %v1807 = vpop.f32.mrf.mxu0
    %1808 = vmatprep.mubr.bf16.mxu0 0
    %1809 = vmatmul.mubr.bf16.gmra.mxu0 %v1668
    %v1810 = vpop.f32.mrf.mxu0
    %v1811 = vadd.f32 %v143, %v1810
    %v1812 = vpop.f32.mrf.mxu0
    %v1813 = vpop.f32.mrf.mxu0
    %v1814 = vadd.f32 %v143, %v1813
    %v1815 = vpop.f32.mrf.mxu0
    %1816 = vmatprep.mubr.bf16.mxu0 0
    %1817 = vmatmul.mubr.bf16.gmra.mxu0 %v1669
    %v1818 = vpop.f32.mrf.mxu0
    %v1819 = vadd.f32 %v143, %v1818
    %v1820 = vpop.f32.mrf.mxu0
    %v1821 = vpop.f32.mrf.mxu0
    %v1822 = vadd.f32 %v143, %v1821
    %v1823 = vpop.f32.mrf.mxu0
    %1824 = vmatprep.mubr.bf16.mxu0 0
    %1825 = vmatmul.mubr.bf16.gmra.mxu0 %v1670
    %v1826 = vpop.f32.mrf.mxu0
    %v1827 = vadd.f32 %v143, %v1826
    %v1828 = vpop.f32.mrf.mxu0
    %v1829 = vpop.f32.mrf.mxu0
    %v1830 = vadd.f32 %v143, %v1829
    %v1831 = vpop.f32.mrf.mxu0
    %1832 = vmatprep.mubr.bf16.mxu0 0
    %1833 = vmatmul.mubr.bf16.gmra.mxu0 %v1671
    %v1834 = vpop.f32.mrf.mxu0
    %v1835 = vadd.f32 %v143, %v1834
    %v1836 = vpop.f32.mrf.mxu0
    %v1837 = vpop.f32.mrf.mxu0
    %v1838 = vadd.f32 %v143, %v1837
    %v1839 = vpop.f32.mrf.mxu0
    %1840 = vmatprep.mubr.bf16.mxu0 0
    %1841 = vmatmul.mubr.bf16.gmra.mxu0 %v1672
    %v1842 = vpop.f32.mrf.mxu0
    %v1843 = vadd.f32 %v143, %v1842
    %v1844 = vpop.f32.mrf.mxu0
    %v1845 = vpop.f32.mrf.mxu0
    %v1846 = vadd.f32 %v143, %v1845
    %v1847 = vpop.f32.mrf.mxu0
    %1848 = vmatprep.mubr.bf16.mxu0 0
    %1849 = vmatmul.mubr.bf16.gmra.mxu0 %v1673
    %v1850 = vpop.f32.mrf.mxu0
    %v1851 = vadd.f32 %v143, %v1850
    %v1852 = vpop.f32.mrf.mxu0
    %v1853 = vpop.f32.mrf.mxu0
    %v1854 = vadd.f32 %v143, %v1853
    %v1855 = vpop.f32.mrf.mxu0
    %1856 = vmatprep.mubr.bf16.mxu0 0
    %1857 = vmatmul.mubr.bf16.gmra.mxu0 %v1674
    %v1858 = vpop.f32.mrf.mxu0
    %v1859 = vadd.f32 %v143, %v1858
    %v1860 = vpop.f32.mrf.mxu0
    %v1861 = vpop.f32.mrf.mxu0
    %v1862 = vadd.f32 %v143, %v1861
    %v1863 = vpop.f32.mrf.mxu0
    %1864 = vmatprep.mubr.bf16.mxu0 0
    %1865 = vmatmul.mubr.bf16.gmra.mxu0 %v1675
    %v1866 = vpop.f32.mrf.mxu0
    %v1867 = vadd.f32 %v143, %v1866
    %v1868 = vpop.f32.mrf.mxu0
    %v1869 = vpop.f32.mrf.mxu0
    %v1870 = vadd.f32 %v143, %v1869
    %v1871 = vpop.f32.mrf.mxu0
    %1872 = vmatprep.mubr.bf16.mxu0 0
    %1873 = vmatmul.mubr.bf16.gmra.mxu0 %v1676
    %v1874 = vpop.f32.mrf.mxu0
    %v1875 = vadd.f32 %v143, %v1874
    %v1876 = vpop.f32.mrf.mxu0
    %v1877 = vpop.f32.mrf.mxu0
    %v1878 = vadd.f32 %v143, %v1877
    %v1879 = vpop.f32.mrf.mxu0
    %1880 = vmatprep.mubr.bf16.mxu0 0
    %1881 = vmatmul.mubr.bf16.gmra.mxu0 %v1677
    %v1882 = vpop.f32.mrf.mxu0
    %v1883 = vadd.f32 %v143, %v1882
    %v1884 = vpop.f32.mrf.mxu0
    %v1885 = vpop.f32.mrf.mxu0
    %v1886 = vadd.f32 %v143, %v1885
    %v1887 = vpop.f32.mrf.mxu0
    %1888 = vmatprep.mubr.bf16.mxu0 0
    %1889 = vmatmul.mubr.bf16.gmra.mxu0 %v1678
    %v1890 = vpop.f32.mrf.mxu0
    %v1891 = vadd.f32 %v143, %v1890
    %v1892 = vpop.f32.mrf.mxu0
    %v1893 = vpop.f32.mrf.mxu0
    %v1894 = vadd.f32 %v143, %v1893
    %v1895 = vpop.f32.mrf.mxu0
    %1896 = vmatprep.mubr.bf16.mxu0 0
    %1897 = vmatmul.mubr.bf16.gmra.mxu0 %v1679
    %v1898 = vpop.f32.mrf.mxu0
    %v1899 = vadd.f32 %v143, %v1898
    %v1900 = vpop.f32.mrf.mxu0
    %v1901 = vpop.f32.mrf.mxu0
    %v1902 = vadd.f32 %v143, %v1901
    %v1903 = vpop.f32.mrf.mxu0
    %1904 = vdwg.mxu0
    %v1905 = vmax.f32 %v1779, 0.0
    %v1906 = vmax.f32 %v1782, 0.0
    %v1907 = vmax.f32 %v1787, 0.0
    %v1908 = vmax.f32 %v1790, 0.0
    %v1909 = vmax.f32 %v1795, 0.0
    %v1910 = vmax.f32 %v1798, 0.0
    %v1911 = vmax.f32 %v1803, 0.0
    %v1912 = vmax.f32 %v1806, 0.0
    %v1913 = vmax.f32 %v1811, 0.0
    %v1914 = vmax.f32 %v1814, 0.0
    %v1915 = vmax.f32 %v1819, 0.0
    %v1916 = vmax.f32 %v1822, 0.0
    %v1917 = vmax.f32 %v1827, 0.0
    %v1918 = vmax.f32 %v1830, 0.0
    %v1919 = vmax.f32 %v1835, 0.0
    %v1920 = vmax.f32 %v1838, 0.0
    %v1921 = vmax.f32 %v1843, 0.0
    %v1922 = vmax.f32 %v1846, 0.0
    %v1923 = vmax.f32 %v1851, 0.0
    %v1924 = vmax.f32 %v1854, 0.0
    %v1925 = vmax.f32 %v1859, 0.0
    %v1926 = vmax.f32 %v1862, 0.0
    %v1927 = vmax.f32 %v1867, 0.0
    %v1928 = vmax.f32 %v1870, 0.0
    %v1929 = vmax.f32 %v1875, 0.0
    %v1930 = vmax.f32 %v1878, 0.0
    %v1931 = vmax.f32 %v1883, 0.0
    %v1932 = vmax.f32 %v1886, 0.0
    %v1933 = vmax.f32 %v1891, 0.0
    %v1934 = vmax.f32 %v1894, 0.0
    %v1935 = vmax.f32 %v1899, 0.0
    %v1936 = vmax.f32 %v1902, 0.0
    %v1937 = vpack.c.bf16 %v1906, %v1905
    %v1938 = vpack.c.bf16 %v1908, %v1907
    %v1939 = vpack.c.bf16 %v1910, %v1909
    %v1940 = vpack.c.bf16 %v1912, %v1911
    %v1941 = vpack.c.bf16 %v1914, %v1913
    %v1942 = vpack.c.bf16 %v1916, %v1915
    %v1943 = vpack.c.bf16 %v1918, %v1917
    %v1944 = vpack.c.bf16 %v1920, %v1919
    %v1945 = vpack.c.bf16 %v1922, %v1921
    %v1946 = vpack.c.bf16 %v1924, %v1923
    %v1947 = vpack.c.bf16 %v1926, %v1925
    %v1948 = vpack.c.bf16 %v1928, %v1927
    %v1949 = vpack.c.bf16 %v1930, %v1929
    %v1950 = vpack.c.bf16 %v1932, %v1931
    %v1951 = vpack.c.bf16 %v1934, %v1933
    %v1952 = vpack.c.bf16 %v1936, %v1935
    %v1953 = vld [vmem:[#allocation13] sm:$0xf]
    %v1954 = vld [vmem:[#allocation13 + $0x4] sm:$0xf]
    %v1955 = vld [vmem:[#allocation13 + $0x8] sm:$0xf]
    %v1956 = vld [vmem:[#allocation13 + $0xc] sm:$0xf]
    %v1957 = vld [vmem:[#allocation13 + $0x10] sm:$0xf]
    %v1958 = vld [vmem:[#allocation13 + $0x14] sm:$0xf]
    %v1959 = vld [vmem:[#allocation13 + $0x18] sm:$0xf]
    %v1960 = vld [vmem:[#allocation13 + $0x1c] sm:$0xf]
    %v1961 = vld [vmem:[#allocation13 + $0x20] sm:$0xf]
    %v1962 = vld [vmem:[#allocation13 + $0x24] sm:$0xf]
    %v1963 = vld [vmem:[#allocation13 + $0x28] sm:$0xf]
    %v1964 = vld [vmem:[#allocation13 + $0x2c] sm:$0xf]
    %v1965 = vld [vmem:[#allocation13 + $0x30] sm:$0xf]
    %v1966 = vld [vmem:[#allocation13 + $0x34] sm:$0xf]
    %v1967 = vld [vmem:[#allocation13 + $0x38] sm:$0xf]
    %v1968 = vld [vmem:[#allocation13 + $0x3c] sm:$0xf]
    %v1985 = vunpack.c.l.b16 %v1953
    %v1986 = vunpack.c.l.b16 %v1954
    %v1987 = vunpack.c.l.b16 %v1955
    %v1988 = vunpack.c.l.b16 %v1956
    %v1989 = vunpack.c.l.b16 %v1957
    %v1990 = vunpack.c.l.b16 %v1958
    %v1991 = vunpack.c.l.b16 %v1959
    %v1992 = vunpack.c.l.b16 %v1960
    %v1993 = vunpack.c.l.b16 %v1961
    %v1994 = vunpack.c.l.b16 %v1962
    %v1995 = vunpack.c.l.b16 %v1963
    %v1996 = vunpack.c.l.b16 %v1964
    %v1997 = vunpack.c.l.b16 %v1965
    %v1998 = vunpack.c.l.b16 %v1966
    %v1999 = vunpack.c.l.b16 %v1967
    %v2000 = vunpack.c.l.b16 %v1968
    %v2001 = vpack.c.b16 %v1986, %v1985
    %v2002 = vpack.c.b16 %v1988, %v1987
    %v2003 = vpack.c.b16 %v1990, %v1989
    %v2004 = vpack.c.b16 %v1992, %v1991
    %v2005 = vpack.c.b16 %v1994, %v1993
    %v2006 = vpack.c.b16 %v1996, %v1995
    %v2007 = vpack.c.b16 %v1998, %v1997
    %v2008 = vpack.c.b16 %v2000, %v1999
    %2017 = vmatprep.subr.bf16.mxu0 0
    %2018 = vmatpush1.bf16.msra.mxu0 %v2008
    %2019 = vmatprep.subr.bf16.mxu0 0
    %2020 = vmatpush1.bf16.msra.mxu0 %v2007
    %2021 = vmatprep.subr.bf16.mxu0 0
    %2022 = vmatpush1.bf16.msra.mxu0 %v2006
    %2023 = vmatprep.subr.bf16.mxu0 0
    %2024 = vmatpush1.bf16.msra.mxu0 %v2005
    %2025 = vmatprep.subr.bf16.mxu0 0
    %2026 = vmatpush1.bf16.msra.mxu0 %v2004
    %2027 = vmatprep.subr.bf16.mxu0 0
    %2028 = vmatpush1.bf16.msra.mxu0 %v2003
    %2029 = vmatprep.subr.bf16.mxu0 0
    %2030 = vmatpush1.bf16.msra.mxu0 %v2002
    %2031 = vmatprep.subr.bf16.mxu0 0
    %2032 = vmatpush1.bf16.msra.mxu0 %v2001
    %2033 = vmatprep.subr.bf16.mxu0 0
    %2034 = vmatpush2.bf16.msra.mxu0 0
    %2035 = vmatprep.subr.bf16.mxu0 0
    %2036 = vmatpush2.bf16.msra.mxu0 0
    %2037 = vmatprep.subr.bf16.mxu0 0
    %2038 = vmatpush2.bf16.msra.mxu0 0
    %2039 = vmatprep.subr.bf16.mxu0 0
    %2040 = vmatpush2.bf16.msra.mxu0 0
    %2041 = vmatprep.subr.bf16.mxu0 0
    %2042 = vmatpush2.bf16.msra.mxu0 0
    %2043 = vmatprep.subr.bf16.mxu0 0
    %2044 = vmatpush2.bf16.msra.mxu0 0
    %2045 = vmatprep.subr.bf16.mxu0 0
    %2046 = vmatpush2.bf16.msra.mxu0 0
    %2047 = vmatprep.subr.bf16.mxu0 0
    %2048 = vmatpush2.bf16.msra.mxu0 0
    %2049 = vmatprep.mubr.bf16.mxu0 0
    %2050 = vmatmul.mubr.bf16.gmra.mxu0 %v1937
    %v2051 = vpop.f32.mrf.mxu0
    %v2052 = vadd.f32 %v144, %v2051
    %v2053 = vpop.f32.mrf.mxu0
    %v2054 = vpop.f32.mrf.mxu0
    %v2055 = vadd.f32 %v144, %v2054
    %v2056 = vpop.f32.mrf.mxu0
    %2057 = vmatprep.mubr.bf16.mxu0 0
    %2058 = vmatmul.mubr.bf16.gmra.mxu0 %v1938
    %v2059 = vpop.f32.mrf.mxu0
    %v2060 = vadd.f32 %v144, %v2059
    %v2061 = vpop.f32.mrf.mxu0
    %v2062 = vpop.f32.mrf.mxu0
    %v2063 = vadd.f32 %v144, %v2062
    %v2064 = vpop.f32.mrf.mxu0
    %2065 = vmatprep.mubr.bf16.mxu0 0
    %2066 = vmatmul.mubr.bf16.gmra.mxu0 %v1939
    %v2067 = vpop.f32.mrf.mxu0
    %v2068 = vadd.f32 %v144, %v2067
    %v2069 = vpop.f32.mrf.mxu0
    %v2070 = vpop.f32.mrf.mxu0
    %v2071 = vadd.f32 %v144, %v2070
    %v2072 = vpop.f32.mrf.mxu0
    %2073 = vmatprep.mubr.bf16.mxu0 0
    %2074 = vmatmul.mubr.bf16.gmra.mxu0 %v1940
    %v2075 = vpop.f32.mrf.mxu0
    %v2076 = vadd.f32 %v144, %v2075
    %v2077 = vpop.f32.mrf.mxu0
    %v2078 = vpop.f32.mrf.mxu0
    %v2079 = vadd.f32 %v144, %v2078
    %v2080 = vpop.f32.mrf.mxu0
    %2081 = vmatprep.mubr.bf16.mxu0 0
    %2082 = vmatmul.mubr.bf16.gmra.mxu0 %v1941
    %v2083 = vpop.f32.mrf.mxu0
    %v2084 = vadd.f32 %v144, %v2083
    %v2085 = vpop.f32.mrf.mxu0
    %v2086 = vpop.f32.mrf.mxu0
    %v2087 = vadd.f32 %v144, %v2086
    %v2088 = vpop.f32.mrf.mxu0
    %2089 = vmatprep.mubr.bf16.mxu0 0
    %2090 = vmatmul.mubr.bf16.gmra.mxu0 %v1942
    %v2091 = vpop.f32.mrf.mxu0
    %v2092 = vadd.f32 %v144, %v2091
    %v2093 = vpop.f32.mrf.mxu0
    %v2094 = vpop.f32.mrf.mxu0
    %v2095 = vadd.f32 %v144, %v2094
    %v2096 = vpop.f32.mrf.mxu0
    %2097 = vmatprep.mubr.bf16.mxu0 0
    %2098 = vmatmul.mubr.bf16.gmra.mxu0 %v1943
    %v2099 = vpop.f32.mrf.mxu0
    %v2100 = vadd.f32 %v144, %v2099
    %v2101 = vpop.f32.mrf.mxu0
    %v2102 = vpop.f32.mrf.mxu0
    %v2103 = vadd.f32 %v144, %v2102
    %v2104 = vpop.f32.mrf.mxu0
    %2105 = vmatprep.mubr.bf16.mxu0 0
    %2106 = vmatmul.mubr.bf16.gmra.mxu0 %v1944
    %v2107 = vpop.f32.mrf.mxu0
    %v2108 = vadd.f32 %v144, %v2107
    %v2109 = vpop.f32.mrf.mxu0
    %v2110 = vpop.f32.mrf.mxu0
    %v2111 = vadd.f32 %v144, %v2110
    %v2112 = vpop.f32.mrf.mxu0
    %2113 = vmatprep.mubr.bf16.mxu0 0
    %2114 = vmatmul.mubr.bf16.gmra.mxu0 %v1945
    %v2115 = vpop.f32.mrf.mxu0
    %v2116 = vadd.f32 %v144, %v2115
    %v2117 = vpop.f32.mrf.mxu0
    %v2118 = vpop.f32.mrf.mxu0
    %v2119 = vadd.f32 %v144, %v2118
    %v2120 = vpop.f32.mrf.mxu0
    %2121 = vmatprep.mubr.bf16.mxu0 0
    %2122 = vmatmul.mubr.bf16.gmra.mxu0 %v1946
    %v2123 = vpop.f32.mrf.mxu0
    %v2124 = vadd.f32 %v144, %v2123
    %v2125 = vpop.f32.mrf.mxu0
    %v2126 = vpop.f32.mrf.mxu0
    %v2127 = vadd.f32 %v144, %v2126
    %v2128 = vpop.f32.mrf.mxu0
    %2129 = vmatprep.mubr.bf16.mxu0 0
    %2130 = vmatmul.mubr.bf16.gmra.mxu0 %v1947
    %v2131 = vpop.f32.mrf.mxu0
    %v2132 = vadd.f32 %v144, %v2131
    %v2133 = vpop.f32.mrf.mxu0
    %v2134 = vpop.f32.mrf.mxu0
    %v2135 = vadd.f32 %v144, %v2134
    %v2136 = vpop.f32.mrf.mxu0
    %2137 = vmatprep.mubr.bf16.mxu0 0
    %2138 = vmatmul.mubr.bf16.gmra.mxu0 %v1948
    %v2139 = vpop.f32.mrf.mxu0
    %v2140 = vadd.f32 %v144, %v2139
    %v2141 = vpop.f32.mrf.mxu0
    %v2142 = vpop.f32.mrf.mxu0
    %v2143 = vadd.f32 %v144, %v2142
    %v2144 = vpop.f32.mrf.mxu0
    %2145 = vmatprep.mubr.bf16.mxu0 0
    %2146 = vmatmul.mubr.bf16.gmra.mxu0 %v1949
    %v2147 = vpop.f32.mrf.mxu0
    %v2148 = vadd.f32 %v144, %v2147
    %v2149 = vpop.f32.mrf.mxu0
    %v2150 = vpop.f32.mrf.mxu0
    %v2151 = vadd.f32 %v144, %v2150
    %v2152 = vpop.f32.mrf.mxu0
    %2153 = vmatprep.mubr.bf16.mxu0 0
    %2154 = vmatmul.mubr.bf16.gmra.mxu0 %v1950
    %v2155 = vpop.f32.mrf.mxu0
    %v2156 = vadd.f32 %v144, %v2155
    %v2157 = vpop.f32.mrf.mxu0
    %v2158 = vpop.f32.mrf.mxu0
    %v2159 = vadd.f32 %v144, %v2158
    %v2160 = vpop.f32.mrf.mxu0
    %2161 = vmatprep.mubr.bf16.mxu0 0
    %2162 = vmatmul.mubr.bf16.gmra.mxu0 %v1951
    %v2163 = vpop.f32.mrf.mxu0
    %v2164 = vadd.f32 %v144, %v2163
    %v2165 = vpop.f32.mrf.mxu0
    %v2166 = vpop.f32.mrf.mxu0
    %v2167 = vadd.f32 %v144, %v2166
    %v2168 = vpop.f32.mrf.mxu0
    %2169 = vmatprep.mubr.bf16.mxu0 0
    %2170 = vmatmul.mubr.bf16.gmra.mxu0 %v1952
    %v2171 = vpop.f32.mrf.mxu0
    %v2172 = vadd.f32 %v144, %v2171
    %v2173 = vpop.f32.mrf.mxu0
    %v2174 = vpop.f32.mrf.mxu0
    %v2175 = vadd.f32 %v144, %v2174
    %v2176 = vpop.f32.mrf.mxu0
    %2177 = vdwg.mxu0
    %v2178 = vmax.f32 %v2052, 0.0
    %v2179 = vmax.f32 %v2055, 0.0
    %v2180 = vmax.f32 %v2060, 0.0
    %v2181 = vmax.f32 %v2063, 0.0
    %v2182 = vmax.f32 %v2068, 0.0
    %v2183 = vmax.f32 %v2071, 0.0
    %v2184 = vmax.f32 %v2076, 0.0
    %v2185 = vmax.f32 %v2079, 0.0
    %v2186 = vmax.f32 %v2084, 0.0
    %v2187 = vmax.f32 %v2087, 0.0
    %v2188 = vmax.f32 %v2092, 0.0
    %v2189 = vmax.f32 %v2095, 0.0
    %v2190 = vmax.f32 %v2100, 0.0
    %v2191 = vmax.f32 %v2103, 0.0
    %v2192 = vmax.f32 %v2108, 0.0
    %v2193 = vmax.f32 %v2111, 0.0
    %v2194 = vmax.f32 %v2116, 0.0
    %v2195 = vmax.f32 %v2119, 0.0
    %v2196 = vmax.f32 %v2124, 0.0
    %v2197 = vmax.f32 %v2127, 0.0
    %v2198 = vmax.f32 %v2132, 0.0
    %v2199 = vmax.f32 %v2135, 0.0
    %v2200 = vmax.f32 %v2140, 0.0
    %v2201 = vmax.f32 %v2143, 0.0
    %v2202 = vmax.f32 %v2148, 0.0
    %v2203 = vmax.f32 %v2151, 0.0
    %v2204 = vmax.f32 %v2156, 0.0
    %v2205 = vmax.f32 %v2159, 0.0
    %v2206 = vmax.f32 %v2164, 0.0
    %v2207 = vmax.f32 %v2167, 0.0
    %v2208 = vmax.f32 %v2172, 0.0
    %v2209 = vmax.f32 %v2175, 0.0
    %v2210 = vpack.c.bf16 %v2179, %v2178
    %v2211 = vpack.c.bf16 %v2181, %v2180
    %v2212 = vpack.c.bf16 %v2183, %v2182
    %v2213 = vpack.c.bf16 %v2185, %v2184
    %v2214 = vpack.c.bf16 %v2187, %v2186
    %v2215 = vpack.c.bf16 %v2189, %v2188
    %v2216 = vpack.c.bf16 %v2191, %v2190
    %v2217 = vpack.c.bf16 %v2193, %v2192
    %v2218 = vpack.c.bf16 %v2195, %v2194
    %v2219 = vpack.c.bf16 %v2197, %v2196
    %v2220 = vpack.c.bf16 %v2199, %v2198
    %v2221 = vpack.c.bf16 %v2201, %v2200
    %v2222 = vpack.c.bf16 %v2203, %v2202
    %v2223 = vpack.c.bf16 %v2205, %v2204
    %v2224 = vpack.c.bf16 %v2207, %v2206
    %v2225 = vpack.c.bf16 %v2209, %v2208
    %v2226 = vld [vmem:[#allocation14] sm:$0xf]
    %v2227 = vld [vmem:[#allocation14 + $0x4] sm:$0xf]
    %v2228 = vld [vmem:[#allocation14 + $0x8] sm:$0xf]
    %v2229 = vld [vmem:[#allocation14 + $0xc] sm:$0xf]
    %v2230 = vld [vmem:[#allocation14 + $0x10] sm:$0xf]
    %v2231 = vld [vmem:[#allocation14 + $0x14] sm:$0xf]
    %v2232 = vld [vmem:[#allocation14 + $0x18] sm:$0xf]
    %v2233 = vld [vmem:[#allocation14 + $0x1c] sm:$0xf]
    %v2234 = vld [vmem:[#allocation14 + $0x20] sm:$0xf]
    %v2235 = vld [vmem:[#allocation14 + $0x24] sm:$0xf]
    %v2236 = vld [vmem:[#allocation14 + $0x28] sm:$0xf]
    %v2237 = vld [vmem:[#allocation14 + $0x2c] sm:$0xf]
    %v2238 = vld [vmem:[#allocation14 + $0x30] sm:$0xf]
    %v2239 = vld [vmem:[#allocation14 + $0x34] sm:$0xf]
    %v2240 = vld [vmem:[#allocation14 + $0x38] sm:$0xf]
    %v2241 = vld [vmem:[#allocation14 + $0x3c] sm:$0xf]
    %v2258 = vunpack.c.l.b16 %v2226
    %v2259 = vunpack.c.l.b16 %v2227
    %v2260 = vunpack.c.l.b16 %v2228
    %v2261 = vunpack.c.l.b16 %v2229
    %v2262 = vunpack.c.l.b16 %v2230
    %v2263 = vunpack.c.l.b16 %v2231
    %v2264 = vunpack.c.l.b16 %v2232
    %v2265 = vunpack.c.l.b16 %v2233
    %v2266 = vunpack.c.l.b16 %v2234
    %v2267 = vunpack.c.l.b16 %v2235
    %v2268 = vunpack.c.l.b16 %v2236
    %v2269 = vunpack.c.l.b16 %v2237
    %v2270 = vunpack.c.l.b16 %v2238
    %v2271 = vunpack.c.l.b16 %v2239
    %v2272 = vunpack.c.l.b16 %v2240
    %v2273 = vunpack.c.l.b16 %v2241
    %v2274 = vpack.c.b16 %v2259, %v2258
    %v2275 = vpack.c.b16 %v2261, %v2260
    %v2276 = vpack.c.b16 %v2263, %v2262
    %v2277 = vpack.c.b16 %v2265, %v2264
    %v2278 = vpack.c.b16 %v2267, %v2266
    %v2279 = vpack.c.b16 %v2269, %v2268
    %v2280 = vpack.c.b16 %v2271, %v2270
    %v2281 = vpack.c.b16 %v2273, %v2272
    %2290 = vmatprep.subr.bf16.mxu0 0
    %2291 = vmatpush1.bf16.msra.mxu0 %v2281
    %2292 = vmatprep.subr.bf16.mxu0 0
    %2293 = vmatpush1.bf16.msra.mxu0 %v2280
    %2294 = vmatprep.subr.bf16.mxu0 0
    %2295 = vmatpush1.bf16.msra.mxu0 %v2279
    %2296 = vmatprep.subr.bf16.mxu0 0
    %2297 = vmatpush1.bf16.msra.mxu0 %v2278
    %2298 = vmatprep.subr.bf16.mxu0 0
    %2299 = vmatpush1.bf16.msra.mxu0 %v2277
    %2300 = vmatprep.subr.bf16.mxu0 0
    %2301 = vmatpush1.bf16.msra.mxu0 %v2276
    %2302 = vmatprep.subr.bf16.mxu0 0
    %2303 = vmatpush1.bf16.msra.mxu0 %v2275
    %2304 = vmatprep.subr.bf16.mxu0 0
    %2305 = vmatpush1.bf16.msra.mxu0 %v2274
    %2306 = vmatprep.subr.bf16.mxu0 0
    %2307 = vmatpush2.bf16.msra.mxu0 0
    %2308 = vmatprep.subr.bf16.mxu0 0
    %2309 = vmatpush2.bf16.msra.mxu0 0
    %2310 = vmatprep.subr.bf16.mxu0 0
    %2311 = vmatpush2.bf16.msra.mxu0 0
    %2312 = vmatprep.subr.bf16.mxu0 0
    %2313 = vmatpush2.bf16.msra.mxu0 0
    %2314 = vmatprep.subr.bf16.mxu0 0
    %2315 = vmatpush2.bf16.msra.mxu0 0
    %2316 = vmatprep.subr.bf16.mxu0 0
    %2317 = vmatpush2.bf16.msra.mxu0 0
    %2318 = vmatprep.subr.bf16.mxu0 0
    %2319 = vmatpush2.bf16.msra.mxu0 0
    %2320 = vmatprep.subr.bf16.mxu0 0
    %2321 = vmatpush2.bf16.msra.mxu0 0
    %2322 = vmatprep.mubr.bf16.mxu0 0
    %2323 = vmatmul.mubr.bf16.gmra.mxu0 %v2210
    %v2324 = vpop.f32.mrf.mxu0
    %v2325 = vadd.f32 %v145, %v2324
    %v2326 = vpop.f32.mrf.mxu0
    %v2327 = vpop.f32.mrf.mxu0
    %v2328 = vadd.f32 %v145, %v2327
    %v2329 = vpop.f32.mrf.mxu0
    %2330 = vmatprep.mubr.bf16.mxu0 0
    %2331 = vmatmul.mubr.bf16.gmra.mxu0 %v2211
    %v2332 = vpop.f32.mrf.mxu0
    %v2333 = vadd.f32 %v145, %v2332
    %v2334 = vpop.f32.mrf.mxu0
    %v2335 = vpop.f32.mrf.mxu0
    %v2336 = vadd.f32 %v145, %v2335
    %v2337 = vpop.f32.mrf.mxu0
    %2338 = vmatprep.mubr.bf16.mxu0 0
    %2339 = vmatmul.mubr.bf16.gmra.mxu0 %v2212
    %v2340 = vpop.f32.mrf.mxu0
    %v2341 = vadd.f32 %v145, %v2340
    %v2342 = vpop.f32.mrf.mxu0
    %v2343 = vpop.f32.mrf.mxu0
    %v2344 = vadd.f32 %v145, %v2343
    %v2345 = vpop.f32.mrf.mxu0
    %2346 = vmatprep.mubr.bf16.mxu0 0
    %2347 = vmatmul.mubr.bf16.gmra.mxu0 %v2213
    %v2348 = vpop.f32.mrf.mxu0
    %v2349 = vadd.f32 %v145, %v2348
    %v2350 = vpop.f32.mrf.mxu0
    %v2351 = vpop.f32.mrf.mxu0
    %v2352 = vadd.f32 %v145, %v2351
    %v2353 = vpop.f32.mrf.mxu0
    %2354 = vmatprep.mubr.bf16.mxu0 0
    %2355 = vmatmul.mubr.bf16.gmra.mxu0 %v2214
    %v2356 = vpop.f32.mrf.mxu0
    %v2357 = vadd.f32 %v145, %v2356
    %v2358 = vpop.f32.mrf.mxu0
    %v2359 = vpop.f32.mrf.mxu0
    %v2360 = vadd.f32 %v145, %v2359
    %v2361 = vpop.f32.mrf.mxu0
    %2362 = vmatprep.mubr.bf16.mxu0 0
    %2363 = vmatmul.mubr.bf16.gmra.mxu0 %v2215
    %v2364 = vpop.f32.mrf.mxu0
    %v2365 = vadd.f32 %v145, %v2364
    %v2366 = vpop.f32.mrf.mxu0
    %v2367 = vpop.f32.mrf.mxu0
    %v2368 = vadd.f32 %v145, %v2367
    %v2369 = vpop.f32.mrf.mxu0
    %2370 = vmatprep.mubr.bf16.mxu0 0
    %2371 = vmatmul.mubr.bf16.gmra.mxu0 %v2216
    %v2372 = vpop.f32.mrf.mxu0
    %v2373 = vadd.f32 %v145, %v2372
    %v2374 = vpop.f32.mrf.mxu0
    %v2375 = vpop.f32.mrf.mxu0
    %v2376 = vadd.f32 %v145, %v2375
    %v2377 = vpop.f32.mrf.mxu0
    %2378 = vmatprep.mubr.bf16.mxu0 0
    %2379 = vmatmul.mubr.bf16.gmra.mxu0 %v2217
    %v2380 = vpop.f32.mrf.mxu0
    %v2381 = vadd.f32 %v145, %v2380
    %v2382 = vpop.f32.mrf.mxu0
    %v2383 = vpop.f32.mrf.mxu0
    %v2384 = vadd.f32 %v145, %v2383
    %v2385 = vpop.f32.mrf.mxu0
    %2386 = vmatprep.mubr.bf16.mxu0 0
    %2387 = vmatmul.mubr.bf16.gmra.mxu0 %v2218
    %v2388 = vpop.f32.mrf.mxu0
    %v2389 = vadd.f32 %v145, %v2388
    %v2390 = vpop.f32.mrf.mxu0
    %v2391 = vpop.f32.mrf.mxu0
    %v2392 = vadd.f32 %v145, %v2391
    %v2393 = vpop.f32.mrf.mxu0
    %2394 = vmatprep.mubr.bf16.mxu0 0
    %2395 = vmatmul.mubr.bf16.gmra.mxu0 %v2219
    %v2396 = vpop.f32.mrf.mxu0
    %v2397 = vadd.f32 %v145, %v2396
    %v2398 = vpop.f32.mrf.mxu0
    %v2399 = vpop.f32.mrf.mxu0
    %v2400 = vadd.f32 %v145, %v2399
    %v2401 = vpop.f32.mrf.mxu0
    %2402 = vmatprep.mubr.bf16.mxu0 0
    %2403 = vmatmul.mubr.bf16.gmra.mxu0 %v2220
    %v2404 = vpop.f32.mrf.mxu0
    %v2405 = vadd.f32 %v145, %v2404
    %v2406 = vpop.f32.mrf.mxu0
    %v2407 = vpop.f32.mrf.mxu0
    %v2408 = vadd.f32 %v145, %v2407
    %v2409 = vpop.f32.mrf.mxu0
    %2410 = vmatprep.mubr.bf16.mxu0 0
    %2411 = vmatmul.mubr.bf16.gmra.mxu0 %v2221
    %v2412 = vpop.f32.mrf.mxu0
    %v2413 = vadd.f32 %v145, %v2412
    %v2414 = vpop.f32.mrf.mxu0
    %v2415 = vpop.f32.mrf.mxu0
    %v2416 = vadd.f32 %v145, %v2415
    %v2417 = vpop.f32.mrf.mxu0
    %2418 = vmatprep.mubr.bf16.mxu0 0
    %2419 = vmatmul.mubr.bf16.gmra.mxu0 %v2222
    %v2420 = vpop.f32.mrf.mxu0
    %v2421 = vadd.f32 %v145, %v2420
    %v2422 = vpop.f32.mrf.mxu0
    %v2423 = vpop.f32.mrf.mxu0
    %v2424 = vadd.f32 %v145, %v2423
    %v2425 = vpop.f32.mrf.mxu0
    %2426 = vmatprep.mubr.bf16.mxu0 0
    %2427 = vmatmul.mubr.bf16.gmra.mxu0 %v2223
    %v2428 = vpop.f32.mrf.mxu0
    %v2429 = vadd.f32 %v145, %v2428
    %v2430 = vpop.f32.mrf.mxu0
    %v2431 = vpop.f32.mrf.mxu0
    %v2432 = vadd.f32 %v145, %v2431
    %v2433 = vpop.f32.mrf.mxu0
    %2434 = vmatprep.mubr.bf16.mxu0 0
    %2435 = vmatmul.mubr.bf16.gmra.mxu0 %v2224
    %v2436 = vpop.f32.mrf.mxu0
    %v2437 = vadd.f32 %v145, %v2436
    %v2438 = vpop.f32.mrf.mxu0
    %v2439 = vpop.f32.mrf.mxu0
    %v2440 = vadd.f32 %v145, %v2439
    %v2441 = vpop.f32.mrf.mxu0
    %2442 = vmatprep.mubr.bf16.mxu0 0
    %2443 = vmatmul.mubr.bf16.gmra.mxu0 %v2225
    %v2444 = vpop.f32.mrf.mxu0
    %v2445 = vadd.f32 %v145, %v2444
    %v2446 = vpop.f32.mrf.mxu0
    %v2447 = vpop.f32.mrf.mxu0
    %v2448 = vadd.f32 %v145, %v2447
    %v2449 = vpop.f32.mrf.mxu0
    %2450 = vdwg.mxu0
    %v2451 = vmax.f32 %v2325, 0.0
    %v2452 = vmax.f32 %v2328, 0.0
    %v2453 = vmax.f32 %v2333, 0.0
    %v2454 = vmax.f32 %v2336, 0.0
    %v2455 = vmax.f32 %v2341, 0.0
    %v2456 = vmax.f32 %v2344, 0.0
    %v2457 = vmax.f32 %v2349, 0.0
    %v2458 = vmax.f32 %v2352, 0.0
    %v2459 = vmax.f32 %v2357, 0.0
    %v2460 = vmax.f32 %v2360, 0.0
    %v2461 = vmax.f32 %v2365, 0.0
    %v2462 = vmax.f32 %v2368, 0.0
    %v2463 = vmax.f32 %v2373, 0.0
    %v2464 = vmax.f32 %v2376, 0.0
    %v2465 = vmax.f32 %v2381, 0.0
    %v2466 = vmax.f32 %v2384, 0.0
    %v2467 = vmax.f32 %v2389, 0.0
    %v2468 = vmax.f32 %v2392, 0.0
    %v2469 = vmax.f32 %v2397, 0.0
    %v2470 = vmax.f32 %v2400, 0.0
    %v2471 = vmax.f32 %v2405, 0.0
    %v2472 = vmax.f32 %v2408, 0.0
    %v2473 = vmax.f32 %v2413, 0.0
    %v2474 = vmax.f32 %v2416, 0.0
    %v2475 = vmax.f32 %v2421, 0.0
    %v2476 = vmax.f32 %v2424, 0.0
    %v2477 = vmax.f32 %v2429, 0.0
    %v2478 = vmax.f32 %v2432, 0.0
    %v2479 = vmax.f32 %v2437, 0.0
    %v2480 = vmax.f32 %v2440, 0.0
    %v2481 = vmax.f32 %v2445, 0.0
    %v2482 = vmax.f32 %v2448, 0.0
    %2483 = vst [vmem:[#allocation16] sm:$0xff] %v2451
    %2484 = vst [vmem:[#allocation16 + $0x8] sm:$0xff] %v2452
    %2485 = vst [vmem:[#allocation16 + $0x10] sm:$0xff] %v2453
    %2486 = vst [vmem:[#allocation16 + $0x18] sm:$0xff] %v2454
    %2487 = vst [vmem:[#allocation16 + $0x20] sm:$0xff] %v2455
    %2488 = vst [vmem:[#allocation16 + $0x28] sm:$0xff] %v2456
    %2489 = vst [vmem:[#allocation16 + $0x30] sm:$0xff] %v2457
    %2490 = vst [vmem:[#allocation16 + $0x38] sm:$0xff] %v2458
    %2491 = vst [vmem:[#allocation16 + $0x40] sm:$0xff] %v2459
    %2492 = vst [vmem:[#allocation16 + $0x48] sm:$0xff] %v2460
    %2493 = vst [vmem:[#allocation16 + $0x50] sm:$0xff] %v2461
    %2494 = vst [vmem:[#allocation16 + $0x58] sm:$0xff] %v2462
    %2495 = vst [vmem:[#allocation16 + $0x60] sm:$0xff] %v2463
    %2496 = vst [vmem:[#allocation16 + $0x68] sm:$0xff] %v2464
    %2497 = vst [vmem:[#allocation16 + $0x70] sm:$0xff] %v2465
    %2498 = vst [vmem:[#allocation16 + $0x78] sm:$0xff] %v2466
    %2499 = vst [vmem:[#allocation16 + $0x80] sm:$0xff] %v2467
    %2500 = vst [vmem:[#allocation16 + $0x88] sm:$0xff] %v2468
    %2501 = vst [vmem:[#allocation16 + $0x90] sm:$0xff] %v2469
    %2502 = vst [vmem:[#allocation16 + $0x98] sm:$0xff] %v2470
    %2503 = vst [vmem:[#allocation16 + $0xa0] sm:$0xff] %v2471
    %2504 = vst [vmem:[#allocation16 + $0xa8] sm:$0xff] %v2472
    %2505 = vst [vmem:[#allocation16 + $0xb0] sm:$0xff] %v2473
    %2506 = vst [vmem:[#allocation16 + $0xb8] sm:$0xff] %v2474
    %2507 = vst [vmem:[#allocation16 + $0xc0] sm:$0xff] %v2475
    %2508 = vst [vmem:[#allocation16 + $0xc8] sm:$0xff] %v2476
    %2509 = vst [vmem:[#allocation16 + $0xd0] sm:$0xff] %v2477
    %2510 = vst [vmem:[#allocation16 + $0xd8] sm:$0xff] %v2478
    %2511 = vst [vmem:[#allocation16 + $0xe0] sm:$0xff] %v2479
    %2512 = vst [vmem:[#allocation16 + $0xe8] sm:$0xff] %v2480
    %2513 = vst [vmem:[#allocation16 + $0xf0] sm:$0xff] %v2481
    %2514 = vst [vmem:[#allocation16 + $0xf8] sm:$0xff] %v2482
    // Predicated region
    $region66: #{tpu_custom_call.1} parent=1 // pred_check
      _
    $region67: #{tpu_custom_call.1} parent=1 // pred_check_branch
      %2516 = sbr.rel (0) target = $region69
    $region68: #{tpu_custom_call.1} parent=1 // pred_region
      %s2518 = ssub.s32 4096, 4096
      %2519 = vsyncadd [#allocation4], %s2518
      %s2520 = sshll.u32 [#allocation16], 4
      %s2521 = int_to_ptr.vmem [resolvable:$true] %s2520
      %2526 = dma.vmem_to_hbm [thread:$0]  %s2521, 4096, %s8, [#allocation4], 128, 128, 8
    $region69: #{tpu_custom_call.1} parent=1 // pred_fallthru
      _
    // Predicated region
    $region70: #{tpu_custom_call.1} parent=1 // pred_check
      _
    $region71: #{tpu_custom_call.1} parent=1 // pred_check_branch
      %2528 = sbr.rel (0) target = $region73
    $region72: #{tpu_custom_call.1} parent=1 // pred_region
      %2529 = dma.done [#allocation4], 4096
    $region73: #{tpu_custom_call.1} parent=1 // pred_fallthru
      _
    %2530 = vsyncpa [#allocation3], 1
    %2531 = vsyncpa [#allocation6], 1
    %2532 = vsyncpa [#allocation9], 1
    %2533 = vsyncpa [#allocation12], 1
    %2534 = vsyncpa [#allocation15], 1
    %2535 = vsyncpa [#allocation4], 1

</llo_original>
